<compile_context>
chip_gen: v6e
topology: v6e:2x2x1
jax: 0.10.0
libtpu: 0.0.40
codegen_flags: <defaults>
</compile_context>

<pallas_src>
import jax
import jax.numpy as jnp
from jax.experimental import pallas as pl
from jax.experimental.pallas import tpu as pltpu

# --- small synthetic config (stands in for the pretrained DeBERTa config) ---
B = 2            # batch
S = 8            # sequence length
H = 32           # hidden size
NH = 4           # attention heads
DH = H // NH     # head dim
FF = 64          # intermediate (FFN) size
VOCAB = 50       # vocab size
LAYERS = 2       # encoder layers
NUM_LABELS = 3   # classifier labels
EPS = 1e-7       # DeBERTa layer_norm_eps


def _layernorm(x, g, b, eps):
    mu = jnp.mean(x, axis=-1, keepdims=True)
    var = jnp.mean((x - mu) * (x - mu), axis=-1, keepdims=True)
    return (x - mu) * jax.lax.rsqrt(var + eps) * g + b


# ---------------------------------------------------------------------------
# Fused forward kernel: grid=(LAYERS,), activation resident in VMEM scratch.
# ---------------------------------------------------------------------------
def fused_forward_kernel(
        xemb_ref, mask_ref, embg_ref, embb_ref,
        wqh_ref, bqh_ref, wkh_ref, bkh_ref, wvh_ref, bvh_ref,
        woh_ref, bo_ref, ln1g_ref, ln1b_ref,
        w1_ref, b1_ref, w2_ref, b2_ref, ln2g_ref, ln2b_ref,
        wc_ref, bc_ref, onehot_ref,
        hid_ref, logits_ref, loss_ref,
        x_sc):
    l = pl.program_id(0)
    scale = 1.0 / (DH ** 0.5)

    # Layer 0: embedding LayerNorm into the resident activation scratch.
    @pl.when(l == 0)
    def _():
        x0 = xemb_ref[...].reshape(B * S, H)
        x_sc[...] = _layernorm(x0, embg_ref[...], embb_ref[...], EPS)

    x = x_sc[...]                        # (B*S, H) f32, persists across layers
    xb = x.astype(jnp.bfloat16)
    mask_add = mask_ref[...]             # (B, 1, S) additive attention mask

    # ---- multi-head self-attention ----------------------------------------
    # TODO(synk): disentangled relative-position bias (c2p/p2c) not implemented.
    attn = jnp.zeros((B * S, H), jnp.float32)
    for h in range(NH):                  # static unroll; only leading-dim indexing
        qh = jnp.dot(xb, wqh_ref[0, h], preferred_element_type=jnp.float32) + bqh_ref[0, h]
        kh = jnp.dot(xb, wkh_ref[0, h], preferred_element_type=jnp.float32) + bkh_ref[0, h]
        vh = jnp.dot(xb, wvh_ref[0, h], preferred_element_type=jnp.float32) + bvh_ref[0, h]
        qh3 = qh.reshape(B, S, DH).astype(jnp.bfloat16)
        kh3 = kh.reshape(B, S, DH).astype(jnp.bfloat16)
        vh3 = vh.reshape(B, S, DH).astype(jnp.bfloat16)

        s = jnp.einsum('bqd,bkd->bqk', qh3, kh3,
                       preferred_element_type=jnp.float32) * scale
        s = s + mask_add
        s = s - jnp.max(s, axis=-1, keepdims=True)
        p = jnp.exp(s)
        p = p * pl.reciprocal(jnp.sum(p, axis=-1, keepdims=True), approx=True)

        ctx = jnp.einsum('bqk,bkd->bqd', p.astype(jnp.bfloat16), vh3,
                         preferred_element_type=jnp.float32)      # (B, S, DH)
        # Accumulate this head's contribution through its slab of the output
        # projection (avoids a lane-axis concatenate of head outputs).
        attn = attn + jnp.dot(ctx.reshape(B * S, DH).astype(jnp.bfloat16),
                              woh_ref[0, h], preferred_element_type=jnp.float32)
    attn = attn + bo_ref[0]

    h1 = _layernorm(attn + x, ln1g_ref[0], ln1b_ref[0], EPS)

    # ---- feed-forward -------------------------------------------------------
    ff = jnp.dot(h1.astype(jnp.bfloat16), w1_ref[0],
                 preferred_element_type=jnp.float32) + b1_ref[0]
    # TODO(synk): HF DeBERTa uses exact (erf) GELU; tanh approximation used here.
    ff = jax.nn.gelu(ff, approximate=True)
    ff2 = jnp.dot(ff.astype(jnp.bfloat16), w2_ref[0],
                  preferred_element_type=jnp.float32) + b2_ref[0]
    x_new = _layernorm(ff2 + h1, ln2g_ref[0], ln2b_ref[0], EPS)
    x_sc[...] = x_new

    # ---- last layer: emit hidden states + fused classifier & CE loss -------
    @pl.when(l == LAYERS - 1)
    def _():
        x3 = x_new.reshape(B, S, H)
        hid_ref[...] = x3
        pooled = x3[:, 0, :]                                    # CLS pooling (B, H)
        logits = jnp.dot(pooled, wc_ref[...],
                         preferred_element_type=jnp.float32) + bc_ref[...]
        logits_ref[...] = logits
        m = jnp.max(logits, axis=-1, keepdims=True)
        z = logits - m
        lse = jnp.log(jnp.sum(jnp.exp(z), axis=-1, keepdims=True)) + m
        logp = logits - lse
        nll = -jnp.sum(onehot_ref[...] * logp, axis=-1, keepdims=True)   # (B, 1)
        loss_ref[...] = jnp.mean(nll, keepdims=True)                     # (1, 1)


# ---------------------------------------------------------------------------
# BlockSpec helpers
# ---------------------------------------------------------------------------
def _const_spec(a):
    nd = a.ndim
    return pl.BlockSpec(tuple(a.shape), lambda l, _nd=nd: (0,) * _nd)


def _layer_spec(a):
    nd = a.ndim
    return pl.BlockSpec((1,) + tuple(a.shape[1:]),
                        lambda l, _nd=nd: (l,) + (0,) * (_nd - 1))


# ---------------------------------------------------------------------------
# Parameters (deterministic synthetic init, matches module shapes; stacked
# along a leading LAYERS axis so a single kernel can index them by layer).
# ---------------------------------------------------------------------------
def make_params(key):
    def nrm(k, shape, scale=0.02):
        return scale * jax.random.normal(k, shape, dtype=jnp.float32)

    k_emb, k_q, k_k, k_v, k_o, k_1, k_2, k_c = jax.random.split(key, 8)
    ones_lh = jnp.ones((LAYERS, 1, H), jnp.float32)
    zeros_lh = jnp.zeros((LAYERS, 1, H), jnp.float32)
    return {
        "word_emb": nrm(k_emb, (VOCAB, H)),
        "emb_ln_g": jnp.ones((1, H), jnp.float32),
        "emb_ln_b": jnp.zeros((1, H), jnp.float32),
        "wq": nrm(k_q, (LAYERS, H, H)), "bq": zeros_lh,
        "wk": nrm(k_k, (LAYERS, H, H)), "bk": zeros_lh,
        "wv": nrm(k_v, (LAYERS, H, H)), "bv": zeros_lh,
        "wo": nrm(k_o, (LAYERS, H, H)), "bo": zeros_lh,
        "ln1_g": ones_lh, "ln1_b": zeros_lh,
        "w1": nrm(k_1, (LAYERS, H, FF)),
        "b1": jnp.zeros((LAYERS, 1, FF), jnp.float32),
        "w2": nrm(k_2, (LAYERS, FF, H)), "b2": zeros_lh,
        "ln2_g": ones_lh, "ln2_b": zeros_lh,
        "wc": nrm(k_c, (H, NUM_LABELS)),
        "bc": jnp.zeros((1, NUM_LABELS), jnp.float32),
    }


# ---------------------------------------------------------------------------
# Forward pass: returns (loss, logits, last_hidden_state) like the nn.Module
# ---------------------------------------------------------------------------
@jax.jit
def deberta_forward(params, input_ids, attention_mask, labels):
    bf = jnp.bfloat16
    xemb = params["word_emb"][input_ids]                          # (B,S,H) gather (glue)
    mask_add = (1.0 - attention_mask.astype(jnp.float32))[:, None, :] * (-1e9)
    onehot = jax.nn.one_hot(labels, NUM_LABELS, dtype=jnp.float32)

    # Head-major weight layout so the kernel only indexes leading dims.
    def heads_out(w):    # (L, H, H) -> (L, NH, H, DH)
        return w.reshape(LAYERS, H, NH, DH).transpose(0, 2, 1, 3).astype(bf)

    def heads_bias(b):   # (L, 1, H) -> (L, NH, 1, DH)
        return b.reshape(LAYERS, 1, NH, DH).transpose(0, 2, 1, 3)

    wqh, wkh, wvh = heads_out(params["wq"]), heads_out(params["wk"]), heads_out(params["wv"])
    bqh, bkh, bvh = heads_bias(params["bq"]), heads_bias(params["bk"]), heads_bias(params["bv"])
    woh = params["wo"].reshape(LAYERS, NH, DH, H).astype(bf)      # (L, NH, DH, H)
    w1, w2 = params["w1"].astype(bf), params["w2"].astype(bf)

    args = (xemb, mask_add, params["emb_ln_g"], params["emb_ln_b"],
            wqh, bqh, wkh, bkh, wvh, bvh,
            woh, params["bo"], params["ln1_g"], params["ln1_b"],
            w1, params["b1"], w2, params["b2"],
            params["ln2_g"], params["ln2_b"],
            params["wc"], params["bc"], onehot)

    const_ix = {0, 1, 2, 3, 20, 21, 22}     # layer-invariant inputs
    in_specs = [(_const_spec(a) if i in const_ix else _layer_spec(a))
                for i, a in enumerate(args)]

    out_shape = (jax.ShapeDtypeStruct((B, S, H), jnp.float32),
                 jax.ShapeDtypeStruct((B, NUM_LABELS), jnp.float32),
                 jax.ShapeDtypeStruct((1, 1), jnp.float32))
    out_specs = (pl.BlockSpec((B, S, H), lambda l: (0, 0, 0)),
                 pl.BlockSpec((B, NUM_LABELS), lambda l: (0, 0)),
                 pl.BlockSpec((1, 1), lambda l: (0, 0)))

    hid, logits, loss = pl.pallas_call(
        fused_forward_kernel,
        out_shape=out_shape,
        grid_spec=pltpu.PrefetchScalarGridSpec(
            num_scalar_prefetch=0,
            grid=(LAYERS,),
            in_specs=in_specs,
            out_specs=out_specs,
            scratch_shapes=[pltpu.VMEM((B * S, H), jnp.float32)],
        ),
        compiler_params=pltpu.CompilerParams(
            dimension_semantics=("arbitrary",)),
    )(*args)

    return loss[0, 0], logits, hid


if __name__ == "__main__":
    key = jax.random.PRNGKey(0)
    kp, kid, kl = jax.random.split(key, 3)
    params = make_params(kp)

    input_ids = jax.random.randint(kid, (B, S), 0, VOCAB, dtype=jnp.int32)
    attention_mask = jnp.ones((B, S), jnp.int32).at[1, 6:].set(0)   # pad 2 tokens
    labels = jax.random.randint(kl, (B,), 0, NUM_LABELS, dtype=jnp.int32)

    loss, logits, hidden = deberta_forward(params, input_ids, attention_mask, labels)
    jax.block_until_ready((loss, logits, hidden))

    assert logits.shape == (B, NUM_LABELS)
    assert hidden.shape == (B, S, H)
    assert bool(jnp.isfinite(loss))
    assert bool(jnp.all(jnp.isfinite(logits)))
    assert bool(jnp.all(jnp.isfinite(hidden)))
    print("KERNEL_OK")
</pallas_src>

<mosaic_0001>
module attributes {stable_mosaic.version = 11 : i64} {
  func.func @fused_forward_kernel(%arg0: i32, %arg1: memref<2x8x32xf32, #tpu.memory_space<vmem>>, %arg2: memref<2x1x8xf32, #tpu.memory_space<vmem>>, %arg3: memref<1x32xf32, #tpu.memory_space<vmem>>, %arg4: memref<1x32xf32, #tpu.memory_space<vmem>>, %arg5: memref<1x4x32x8xbf16, #tpu.memory_space<vmem>>, %arg6: memref<1x4x1x8xf32, #tpu.memory_space<vmem>>, %arg7: memref<1x4x32x8xbf16, #tpu.memory_space<vmem>>, %arg8: memref<1x4x1x8xf32, #tpu.memory_space<vmem>>, %arg9: memref<1x4x32x8xbf16, #tpu.memory_space<vmem>>, %arg10: memref<1x4x1x8xf32, #tpu.memory_space<vmem>>, %arg11: memref<1x4x8x32xbf16, #tpu.memory_space<vmem>>, %arg12: memref<1x1x32xf32, #tpu.memory_space<vmem>>, %arg13: memref<1x1x32xf32, #tpu.memory_space<vmem>>, %arg14: memref<1x1x32xf32, #tpu.memory_space<vmem>>, %arg15: memref<1x32x64xbf16, #tpu.memory_space<vmem>>, %arg16: memref<1x1x64xf32, #tpu.memory_space<vmem>>, %arg17: memref<1x64x32xbf16, #tpu.memory_space<vmem>>, %arg18: memref<1x1x32xf32, #tpu.memory_space<vmem>>, %arg19: memref<1x1x32xf32, #tpu.memory_space<vmem>>, %arg20: memref<1x1x32xf32, #tpu.memory_space<vmem>>, %arg21: memref<32x3xf32, #tpu.memory_space<vmem>>, %arg22: memref<1x3xf32, #tpu.memory_space<vmem>>, %arg23: memref<2x3xf32, #tpu.memory_space<vmem>>, %arg24: memref<2x8x32xf32, #tpu.memory_space<vmem>>, %arg25: memref<2x3xf32, #tpu.memory_space<vmem>>, %arg26: memref<1x1xf32, #tpu.memory_space<vmem>>, %arg27: memref<16x32xf32, #tpu.memory_space<vmem>>) attributes {dimension_semantics = [#tpu.dimension_semantics<arbitrary>], iteration_bounds = array<i64: 2>, scalar_prefetch = 0 : i64, scratch_operands = 1 : i64, tpu.core_type = #tpu.core_type<tc>, window_params = [{pipeline_mode = #tpu.pipeline_mode<synchronous>, transform_indices = @transform_0, window_bounds = array<i64: 2, 8, 32>}, {pipeline_mode = #tpu.pipeline_mode<synchronous>, transform_indices = @transform_1, window_bounds = array<i64: 2, 1, 8>}, {pipeline_mode = #tpu.pipeline_mode<synchronous>, transform_indices = @transform_2, window_bounds = array<i64: 1, 32>}, {pipeline_mode = #tpu.pipeline_mode<synchronous>, transform_indices = @transform_3, window_bounds = array<i64: 1, 32>}, {transform_indices = @transform_4, window_bounds = array<i64: 1, 4, 32, 8>}, {transform_indices = @transform_5, window_bounds = array<i64: 1, 4, 1, 8>}, {transform_indices = @transform_6, window_bounds = array<i64: 1, 4, 32, 8>}, {transform_indices = @transform_7, window_bounds = array<i64: 1, 4, 1, 8>}, {transform_indices = @transform_8, window_bounds = array<i64: 1, 4, 32, 8>}, {transform_indices = @transform_9, window_bounds = array<i64: 1, 4, 1, 8>}, {transform_indices = @transform_10, window_bounds = array<i64: 1, 4, 8, 32>}, {transform_indices = @transform_11, window_bounds = array<i64: 1, 1, 32>}, {transform_indices = @transform_12, window_bounds = array<i64: 1, 1, 32>}, {transform_indices = @transform_13, window_bounds = array<i64: 1, 1, 32>}, {transform_indices = @transform_14, window_bounds = array<i64: 1, 32, 64>}, {transform_indices = @transform_15, window_bounds = array<i64: 1, 1, 64>}, {transform_indices = @transform_16, window_bounds = array<i64: 1, 64, 32>}, {transform_indices = @transform_17, window_bounds = array<i64: 1, 1, 32>}, {transform_indices = @transform_18, window_bounds = array<i64: 1, 1, 32>}, {transform_indices = @transform_19, window_bounds = array<i64: 1, 1, 32>}, {pipeline_mode = #tpu.pipeline_mode<synchronous>, transform_indices = @transform_20, window_bounds = array<i64: 32, 3>}, {pipeline_mode = #tpu.pipeline_mode<synchronous>, transform_indices = @transform_21, window_bounds = array<i64: 1, 3>}, {pipeline_mode = #tpu.pipeline_mode<synchronous>, transform_indices = @transform_22, window_bounds = array<i64: 2, 3>}, {pipeline_mode = #tpu.pipeline_mode<synchronous>, transform_indices = @transform_23, window_bounds = array<i64: 2, 8, 32>}, {pipeline_mode = #tpu.pipeline_mode<synchronous>, transform_indices = @transform_24, window_bounds = array<i64: 2, 3>}, {pipeline_mode = #tpu.pipeline_mode<synchronous>, transform_indices = @transform_25, window_bounds = array<i64: 1, 1>}]} {
    %c0_i32 = arith.constant 0 : i32
    %0 = arith.cmpi eq, %arg0, %c0_i32 : i32
    %1 = arith.extui %0 : i1 to i32
    %c0_i32_0 = arith.constant 0 : i32
    %2 = arith.cmpi ne, %1, %c0_i32_0 : i32
    scf.if %2 {
      %c0_196 = arith.constant 0 : index
      %c0_197 = arith.constant 0 : index
      %c0_198 = arith.constant 0 : index
      %302 = vector.load %arg1[%c0_196, %c0_197, %c0_198] : memref<2x8x32xf32, #tpu.memory_space<vmem>>, vector<2x8x32xf32>
      %303 = vector.shape_cast %302 : vector<2x8x32xf32> to vector<16x32xf32>
      %c0_199 = arith.constant 0 : index
      %c0_200 = arith.constant 0 : index
      %304 = vector.load %arg3[%c0_199, %c0_200] : memref<1x32xf32, #tpu.memory_space<vmem>>, vector<1x32xf32>
      %c0_201 = arith.constant 0 : index
      %c0_202 = arith.constant 0 : index
      %305 = vector.load %arg4[%c0_201, %c0_202] : memref<1x32xf32, #tpu.memory_space<vmem>>, vector<1x32xf32>
      %cst_203 = arith.constant dense<0.000000e+00> : vector<16xf32>
      %306 = vector.multi_reduction <add>, %303, %cst_203 [1] : vector<16x32xf32> to vector<16xf32>
      %307 = vector.shape_cast %306 : vector<16xf32> to vector<16x1xf32>
      %cst_204 = arith.constant 3.200000e+01 : f32
      %308 = vector.broadcast %cst_204 : f32 to vector<16x1xf32>
      %309 = arith.divf %307, %308 : vector<16x1xf32>
      %310 = vector.broadcast %309 : vector<16x1xf32> to vector<16x32xf32>
      %311 = arith.subf %303, %310 : vector<16x32xf32>
      %312 = vector.broadcast %309 : vector<16x1xf32> to vector<16x32xf32>
      %313 = arith.subf %303, %312 : vector<16x32xf32>
      %314 = arith.mulf %311, %313 : vector<16x32xf32>
      %cst_205 = arith.constant dense<0.000000e+00> : vector<16xf32>
      %315 = vector.multi_reduction <add>, %314, %cst_205 [1] : vector<16x32xf32> to vector<16xf32>
      %316 = vector.shape_cast %315 : vector<16xf32> to vector<16x1xf32>
      %cst_206 = arith.constant 3.200000e+01 : f32
      %317 = vector.broadcast %cst_206 : f32 to vector<16x1xf32>
      %318 = arith.divf %316, %317 : vector<16x1xf32>
      %319 = vector.broadcast %309 : vector<16x1xf32> to vector<16x32xf32>
      %320 = arith.subf %303, %319 : vector<16x32xf32>
      %cst_207 = arith.constant 1.000000e-07 : f32
      %321 = vector.broadcast %cst_207 : f32 to vector<16x1xf32>
      %322 = arith.addf %318, %321 : vector<16x1xf32>
      %323 = math.rsqrt %322 : vector<16x1xf32>
      %324 = vector.broadcast %323 : vector<16x1xf32> to vector<16x32xf32>
      %325 = arith.mulf %320, %324 : vector<16x32xf32>
      %326 = vector.broadcast %304 : vector<1x32xf32> to vector<16x32xf32>
      %327 = arith.mulf %325, %326 : vector<16x32xf32>
      %328 = vector.broadcast %305 : vector<1x32xf32> to vector<16x32xf32>
      %329 = arith.addf %327, %328 : vector<16x32xf32>
      %c0_208 = arith.constant 0 : index
      %c0_209 = arith.constant 0 : index
      %330 = vector.load %arg27[%c0_208, %c0_209] : memref<16x32xf32, #tpu.memory_space<vmem>>, vector<16x32xf32>
      tpu.vector_store %arg27[%c0_208, %c0_209], %329 {strides = array<i32>} : memref<16x32xf32, #tpu.memory_space<vmem>>, vector<16x32xf32>,
    } else {
    }
    %c0 = arith.constant 0 : index
    %c0_1 = arith.constant 0 : index
    %3 = vector.load %arg27[%c0, %c0_1] : memref<16x32xf32, #tpu.memory_space<vmem>>, vector<16x32xf32>
    %4 = arith.truncf %3 : vector<16x32xf32> to vector<16x32xbf16>
    %c0_2 = arith.constant 0 : index
    %c0_3 = arith.constant 0 : index
    %c0_4 = arith.constant 0 : index
    %5 = vector.load %arg2[%c0_2, %c0_3, %c0_4] : memref<2x1x8xf32, #tpu.memory_space<vmem>>, vector<2x1x8xf32>
    %cst = arith.constant 0.000000e+00 : f32
    %6 = vector.broadcast %cst : f32 to vector<16x32xf32>
    %c0_5 = arith.constant 0 : index
    %c0_6 = arith.constant 0 : index
    %c0_7 = arith.constant 0 : index
    %c0_8 = arith.constant 0 : index
    %7 = vector.load %arg5[%c0_5, %c0_6, %c0_7, %c0_8] : memref<1x4x32x8xbf16, #tpu.memory_space<vmem>>, vector<1x1x32x8xbf16>
    %8 = vector.shape_cast %7 : vector<1x1x32x8xbf16> to vector<32x8xbf16>
    %cst_9 = arith.constant dense<0.000000e+00> : vector<16x8xf32>
    %9 = tpu.matmul %4, %8, %cst_9 {dimension_numbers = #tpu.dot_dimension_numbers<[1], [0], [0], [1], [0, 0, 1, 1], [], []>} : vector<16x32xbf16>, vector<32x8xbf16>, vector<16x8xf32> -> vector<16x8xf32>
    %c0_10 = arith.constant 0 : index
    %c0_11 = arith.constant 0 : index
    %c0_12 = arith.constant 0 : index
    %c0_13 = arith.constant 0 : index
    %10 = vector.load %arg6[%c0_10, %c0_11, %c0_12, %c0_13] : memref<1x4x1x8xf32, #tpu.memory_space<vmem>>, vector<1x1x1x8xf32>
    %11 = vector.shape_cast %10 : vector<1x1x1x8xf32> to vector<1x8xf32>
    %12 = vector.broadcast %11 : vector<1x8xf32> to vector<16x8xf32>
    %13 = arith.addf %9, %12 : vector<16x8xf32>
    %c0_14 = arith.constant 0 : index
    %c0_15 = arith.constant 0 : index
    %c0_16 = arith.constant 0 : index
    %c0_17 = arith.constant 0 : index
    %14 = vector.load %arg7[%c0_14, %c0_15, %c0_16, %c0_17] : memref<1x4x32x8xbf16, #tpu.memory_space<vmem>>, vector<1x1x32x8xbf16>
    %15 = vector.shape_cast %14 : vector<1x1x32x8xbf16> to vector<32x8xbf16>
    %cst_18 = arith.constant dense<0.000000e+00> : vector<16x8xf32>
    %16 = tpu.matmul %4, %15, %cst_18 {dimension_numbers = #tpu.dot_dimension_numbers<[1], [0], [0], [1], [0, 0, 1, 1], [], []>} : vector<16x32xbf16>, vector<32x8xbf16>, vector<16x8xf32> -> vector<16x8xf32>
    %c0_19 = arith.constant 0 : index
    %c0_20 = arith.constant 0 : index
    %c0_21 = arith.constant 0 : index
    %c0_22 = arith.constant 0 : index
    %17 = vector.load %arg8[%c0_19, %c0_20, %c0_21, %c0_22] : memref<1x4x1x8xf32, #tpu.memory_space<vmem>>, vector<1x1x1x8xf32>
    %18 = vector.shape_cast %17 : vector<1x1x1x8xf32> to vector<1x8xf32>
    %19 = vector.broadcast %18 : vector<1x8xf32> to vector<16x8xf32>
    %20 = arith.addf %16, %19 : vector<16x8xf32>
    %c0_23 = arith.constant 0 : index
    %c0_24 = arith.constant 0 : index
    %c0_25 = arith.constant 0 : index
    %c0_26 = arith.constant 0 : index
    %21 = vector.load %arg9[%c0_23, %c0_24, %c0_25, %c0_26] : memref<1x4x32x8xbf16, #tpu.memory_space<vmem>>, vector<1x1x32x8xbf16>
    %22 = vector.shape_cast %21 : vector<1x1x32x8xbf16> to vector<32x8xbf16>
    %cst_27 = arith.constant dense<0.000000e+00> : vector<16x8xf32>
    %23 = tpu.matmul %4, %22, %cst_27 {dimension_numbers = #tpu.dot_dimension_numbers<[1], [0], [0], [1], [0, 0, 1, 1], [], []>} : vector<16x32xbf16>, vector<32x8xbf16>, vector<16x8xf32> -> vector<16x8xf32>
    %c0_28 = arith.constant 0 : index
    %c0_29 = arith.constant 0 : index
    %c0_30 = arith.constant 0 : index
    %c0_31 = arith.constant 0 : index
    %24 = vector.load %arg10[%c0_28, %c0_29, %c0_30, %c0_31] : memref<1x4x1x8xf32, #tpu.memory_space<vmem>>, vector<1x1x1x8xf32>
    %25 = vector.shape_cast %24 : vector<1x1x1x8xf32> to vector<1x8xf32>
    %26 = vector.broadcast %25 : vector<1x8xf32> to vector<16x8xf32>
    %27 = arith.addf %23, %26 : vector<16x8xf32>
    %28 = vector.shape_cast %13 : vector<16x8xf32> to vector<2x8x8xf32>
    %29 = arith.truncf %28 : vector<2x8x8xf32> to vector<2x8x8xbf16>
    %30 = vector.shape_cast %20 : vector<16x8xf32> to vector<2x8x8xf32>
    %31 = arith.truncf %30 : vector<2x8x8xf32> to vector<2x8x8xbf16>
    %32 = vector.shape_cast %27 : vector<16x8xf32> to vector<2x8x8xf32>
    %33 = arith.truncf %32 : vector<2x8x8xf32> to vector<2x8x8xbf16>
    "tpu.trace_start"() <{level = 10 : i32, message = "bqd,bkd->bqk"}> : () -> ()
    %cst_32 = arith.constant dense<0.000000e+00> : vector<2x8x8xf32>
    %34 = tpu.matmul %29, %31, %cst_32 {dimension_numbers = #tpu.dot_dimension_numbers<[2], [2], [1], [1], [0, 0, 0, 1, 1, 1], [0], [0]>} : vector<2x8x8xbf16>, vector<2x8x8xbf16>, vector<2x8x8xf32> -> vector<2x8x8xf32>
    "tpu.trace_stop"() : () -> ()
    %cst_33 = arith.constant 0.353553385 : f32
    %35 = vector.broadcast %cst_33 : f32 to vector<2x8x8xf32>
    %36 = arith.mulf %34, %35 : vector<2x8x8xf32>
    %37 = vector.broadcast %5 : vector<2x1x8xf32> to vector<2x8x8xf32>
    %38 = arith.addf %36, %37 : vector<2x8x8xf32>
    %cst_34 = arith.constant dense<0xFF800000> : vector<2x8xf32>
    %39 = vector.multi_reduction <maximumf>, %38, %cst_34 [2] : vector<2x8x8xf32> to vector<2x8xf32>
    %40 = vector.shape_cast %39 : vector<2x8xf32> to vector<2x8x1xf32>
    %41 = vector.broadcast %40 : vector<2x8x1xf32> to vector<2x8x8xf32>
    %42 = arith.subf %38, %41 : vector<2x8x8xf32>
    %43 = math.exp %42 : vector<2x8x8xf32>
    %cst_35 = arith.constant dense<0.000000e+00> : vector<2x8xf32>
    %44 = vector.multi_reduction <add>, %43, %cst_35 [2] : vector<2x8x8xf32> to vector<2x8xf32>
    %45 = vector.shape_cast %44 : vector<2x8xf32> to vector<2x8x1xf32>
    %46 = tpu.reciprocal %45 {approx = true} : vector<2x8x1xf32> -> vector<2x8x1xf32>
    %47 = vector.broadcast %46 : vector<2x8x1xf32> to vector<2x8x8xf32>
    %48 = arith.mulf %43, %47 : vector<2x8x8xf32>
    %49 = arith.truncf %48 : vector<2x8x8xf32> to vector<2x8x8xbf16>
    "tpu.trace_start"() <{level = 10 : i32, message = "bqk,bkd->bqd"}> : () -> ()
    %cst_36 = arith.constant dense<0.000000e+00> : vector<2x8x8xf32>
    %50 = tpu.matmul %49, %33, %cst_36 {dimension_numbers = #tpu.dot_dimension_numbers<[2], [1], [1], [2], [0, 0, 0, 1, 1, 2], [0], [0]>} : vector<2x8x8xbf16>, vector<2x8x8xbf16>, vector<2x8x8xf32> -> vector<2x8x8xf32>
    "tpu.trace_stop"() : () -> ()
    %51 = vector.shape_cast %50 : vector<2x8x8xf32> to vector<16x8xf32>
    %52 = arith.truncf %51 : vector<16x8xf32> to vector<16x8xbf16>
    %c0_37 = arith.constant 0 : index
    %c0_38 = arith.constant 0 : index
    %c0_39 = arith.constant 0 : index
    %c0_40 = arith.constant 0 : index
    %53 = vector.load %arg11[%c0_37, %c0_38, %c0_39, %c0_40] : memref<1x4x8x32xbf16, #tpu.memory_space<vmem>>, vector<1x1x8x32xbf16>
    %54 = vector.shape_cast %53 : vector<1x1x8x32xbf16> to vector<8x32xbf16>
    %cst_41 = arith.constant dense<0.000000e+00> : vector<16x32xf32>
    %55 = tpu.matmul %52, %54, %cst_41 {dimension_numbers = #tpu.dot_dimension_numbers<[1], [0], [0], [1], [0, 0, 1, 1], [], []>} : vector<16x8xbf16>, vector<8x32xbf16>, vector<16x32xf32> -> vector<16x32xf32>
    %56 = arith.addf %6, %55 : vector<16x32xf32>
    %c0_42 = arith.constant 0 : index
    %c1 = arith.constant 1 : index
    %c0_43 = arith.constant 0 : index
    %c0_44 = arith.constant 0 : index
    %57 = vector.load %arg5[%c0_42, %c1, %c0_43, %c0_44] : memref<1x4x32x8xbf16, #tpu.memory_space<vmem>>, vector<1x1x32x8xbf16>
    %58 = vector.shape_cast %57 : vector<1x1x32x8xbf16> to vector<32x8xbf16>
    %cst_45 = arith.constant dense<0.000000e+00> : vector<16x8xf32>
    %59 = tpu.matmul %4, %58, %cst_45 {dimension_numbers = #tpu.dot_dimension_numbers<[1], [0], [0], [1], [0, 0, 1, 1], [], []>} : vector<16x32xbf16>, vector<32x8xbf16>, vector<16x8xf32> -> vector<16x8xf32>
    %c0_46 = arith.constant 0 : index
    %c1_47 = arith.constant 1 : index
    %c0_48 = arith.constant 0 : index
    %c0_49 = arith.constant 0 : index
    %60 = vector.load %arg6[%c0_46, %c1_47, %c0_48, %c0_49] : memref<1x4x1x8xf32, #tpu.memory_space<vmem>>, vector<1x1x1x8xf32>
    %61 = vector.shape_cast %60 : vector<1x1x1x8xf32> to vector<1x8xf32>
    %62 = vector.broadcast %61 : vector<1x8xf32> to vector<16x8xf32>
    %63 = arith.addf %59, %62 : vector<16x8xf32>
    %c0_50 = arith.constant 0 : index
    %c1_51 = arith.constant 1 : index
    %c0_52 = arith.constant 0 : index
    %c0_53 = arith.constant 0 : index
    %64 = vector.load %arg7[%c0_50, %c1_51, %c0_52, %c0_53] : memref<1x4x32x8xbf16, #tpu.memory_space<vmem>>, vector<1x1x32x8xbf16>
    %65 = vector.shape_cast %64 : vector<1x1x32x8xbf16> to vector<32x8xbf16>
    %cst_54 = arith.constant dense<0.000000e+00> : vector<16x8xf32>
    %66 = tpu.matmul %4, %65, %cst_54 {dimension_numbers = #tpu.dot_dimension_numbers<[1], [0], [0], [1], [0, 0, 1, 1], [], []>} : vector<16x32xbf16>, vector<32x8xbf16>, vector<16x8xf32> -> vector<16x8xf32>
    %c0_55 = arith.constant 0 : index
    %c1_56 = arith.constant 1 : index
    %c0_57 = arith.constant 0 : index
    %c0_58 = arith.constant 0 : index
    %67 = vector.load %arg8[%c0_55, %c1_56, %c0_57, %c0_58] : memref<1x4x1x8xf32, #tpu.memory_space<vmem>>, vector<1x1x1x8xf32>
    %68 = vector.shape_cast %67 : vector<1x1x1x8xf32> to vector<1x8xf32>
    %69 = vector.broadcast %68 : vector<1x8xf32> to vector<16x8xf32>
    %70 = arith.addf %66, %69 : vector<16x8xf32>
    %c0_59 = arith.constant 0 : index
    %c1_60 = arith.constant 1 : index
    %c0_61 = arith.constant 0 : index
    %c0_62 = arith.constant 0 : index
    %71 = vector.load %arg9[%c0_59, %c1_60, %c0_61, %c0_62] : memref<1x4x32x8xbf16, #tpu.memory_space<vmem>>, vector<1x1x32x8xbf16>
    %72 = vector.shape_cast %71 : vector<1x1x32x8xbf16> to vector<32x8xbf16>
    %cst_63 = arith.constant dense<0.000000e+00> : vector<16x8xf32>
    %73 = tpu.matmul %4, %72, %cst_63 {dimension_numbers = #tpu.dot_dimension_numbers<[1], [0], [0], [1], [0, 0, 1, 1], [], []>} : vector<16x32xbf16>, vector<32x8xbf16>, vector<16x8xf32> -> vector<16x8xf32>
    %c0_64 = arith.constant 0 : index
    %c1_65 = arith.constant 1 : index
    %c0_66 = arith.constant 0 : index
    %c0_67 = arith.constant 0 : index
    %74 = vector.load %arg10[%c0_64, %c1_65, %c0_66, %c0_67] : memref<1x4x1x8xf32, #tpu.memory_space<vmem>>, vector<1x1x1x8xf32>
    %75 = vector.shape_cast %74 : vector<1x1x1x8xf32> to vector<1x8xf32>
    %76 = vector.broadcast %75 : vector<1x8xf32> to vector<16x8xf32>
    %77 = arith.addf %73, %76 : vector<16x8xf32>
    %78 = vector.shape_cast %63 : vector<16x8xf32> to vector<2x8x8xf32>
    %79 = arith.truncf %78 : vector<2x8x8xf32> to vector<2x8x8xbf16>
    %80 = vector.shape_cast %70 : vector<16x8xf32> to vector<2x8x8xf32>
    %81 = arith.truncf %80 : vector<2x8x8xf32> to vector<2x8x8xbf16>
    %82 = vector.shape_cast %77 : vector<16x8xf32> to vector<2x8x8xf32>
    %83 = arith.truncf %82 : vector<2x8x8xf32> to vector<2x8x8xbf16>
    "tpu.trace_start"() <{level = 10 : i32, message = "bqd,bkd->bqk"}> : () -> ()
    %cst_68 = arith.constant dense<0.000000e+00> : vector<2x8x8xf32>
    %84 = tpu.matmul %79, %81, %cst_68 {dimension_numbers = #tpu.dot_dimension_numbers<[2], [2], [1], [1], [0, 0, 0, 1, 1, 1], [0], [0]>} : vector<2x8x8xbf16>, vector<2x8x8xbf16>, vector<2x8x8xf32> -> vector<2x8x8xf32>
    "tpu.trace_stop"() : () -> ()
    %cst_69 = arith.constant 0.353553385 : f32
    %85 = vector.broadcast %cst_69 : f32 to vector<2x8x8xf32>
    %86 = arith.mulf %84, %85 : vector<2x8x8xf32>
    %87 = vector.broadcast %5 : vector<2x1x8xf32> to vector<2x8x8xf32>
    %88 = arith.addf %86, %87 : vector<2x8x8xf32>
    %cst_70 = arith.constant dense<0xFF800000> : vector<2x8xf32>
    %89 = vector.multi_reduction <maximumf>, %88, %cst_70 [2] : vector<2x8x8xf32> to vector<2x8xf32>
    %90 = vector.shape_cast %89 : vector<2x8xf32> to vector<2x8x1xf32>
    %91 = vector.broadcast %90 : vector<2x8x1xf32> to vector<2x8x8xf32>
    %92 = arith.subf %88, %91 : vector<2x8x8xf32>
    %93 = math.exp %92 : vector<2x8x8xf32>
    %cst_71 = arith.constant dense<0.000000e+00> : vector<2x8xf32>
    %94 = vector.multi_reduction <add>, %93, %cst_71 [2] : vector<2x8x8xf32> to vector<2x8xf32>
    %95 = vector.shape_cast %94 : vector<2x8xf32> to vector<2x8x1xf32>
    %96 = tpu.reciprocal %95 {approx = true} : vector<2x8x1xf32> -> vector<2x8x1xf32>
    %97 = vector.broadcast %96 : vector<2x8x1xf32> to vector<2x8x8xf32>
    %98 = arith.mulf %93, %97 : vector<2x8x8xf32>
    %99 = arith.truncf %98 : vector<2x8x8xf32> to vector<2x8x8xbf16>
    "tpu.trace_start"() <{level = 10 : i32, message = "bqk,bkd->bqd"}> : () -> ()
    %cst_72 = arith.constant dense<0.000000e+00> : vector<2x8x8xf32>
    %100 = tpu.matmul %99, %83, %cst_72 {dimension_numbers = #tpu.dot_dimension_numbers<[2], [1], [1], [2], [0, 0, 0, 1, 1, 2], [0], [0]>} : vector<2x8x8xbf16>, vector<2x8x8xbf16>, vector<2x8x8xf32> -> vector<2x8x8xf32>
    "tpu.trace_stop"() : () -> ()
    %101 = vector.shape_cast %100 : vector<2x8x8xf32> to vector<16x8xf32>
    %102 = arith.truncf %101 : vector<16x8xf32> to vector<16x8xbf16>
    %c0_73 = arith.constant 0 : index
    %c1_74 = arith.constant 1 : index
    %c0_75 = arith.constant 0 : index
    %c0_76 = arith.constant 0 : index
    %103 = vector.load %arg11[%c0_73, %c1_74, %c0_75, %c0_76] : memref<1x4x8x32xbf16, #tpu.memory_space<vmem>>, vector<1x1x8x32xbf16>
    %104 = vector.shape_cast %103 : vector<1x1x8x32xbf16> to vector<8x32xbf16>
    %cst_77 = arith.constant dense<0.000000e+00> : vector<16x32xf32>
    %105 = tpu.matmul %102, %104, %cst_77 {dimension_numbers = #tpu.dot_dimension_numbers<[1], [0], [0], [1], [0, 0, 1, 1], [], []>} : vector<16x8xbf16>, vector<8x32xbf16>, vector<16x32xf32> -> vector<16x32xf32>
    %106 = arith.addf %56, %105 : vector<16x32xf32>
    %c0_78 = arith.constant 0 : index
    %c2 = arith.constant 2 : index
    %c0_79 = arith.constant 0 : index
    %c0_80 = arith.constant 0 : index
    %107 = vector.load %arg5[%c0_78, %c2, %c0_79, %c0_80] : memref<1x4x32x8xbf16, #tpu.memory_space<vmem>>, vector<1x1x32x8xbf16>
    %108 = vector.shape_cast %107 : vector<1x1x32x8xbf16> to vector<32x8xbf16>
    %cst_81 = arith.constant dense<0.000000e+00> : vector<16x8xf32>
    %109 = tpu.matmul %4, %108, %cst_81 {dimension_numbers = #tpu.dot_dimension_numbers<[1], [0], [0], [1], [0, 0, 1, 1], [], []>} : vector<16x32xbf16>, vector<32x8xbf16>, vector<16x8xf32> -> vector<16x8xf32>
    %c0_82 = arith.constant 0 : index
    %c2_83 = arith.constant 2 : index
    %c0_84 = arith.constant 0 : index
    %c0_85 = arith.constant 0 : index
    %110 = vector.load %arg6[%c0_82, %c2_83, %c0_84, %c0_85] : memref<1x4x1x8xf32, #tpu.memory_space<vmem>>, vector<1x1x1x8xf32>
    %111 = vector.shape_cast %110 : vector<1x1x1x8xf32> to vector<1x8xf32>
    %112 = vector.broadcast %111 : vector<1x8xf32> to vector<16x8xf32>
    %113 = arith.addf %109, %112 : vector<16x8xf32>
    %c0_86 = arith.constant 0 : index
    %c2_87 = arith.constant 2 : index
    %c0_88 = arith.constant 0 : index
    %c0_89 = arith.constant 0 : index
    %114 = vector.load %arg7[%c0_86, %c2_87, %c0_88, %c0_89] : memref<1x4x32x8xbf16, #tpu.memory_space<vmem>>, vector<1x1x32x8xbf16>
    %115 = vector.shape_cast %114 : vector<1x1x32x8xbf16> to vector<32x8xbf16>
    %cst_90 = arith.constant dense<0.000000e+00> : vector<16x8xf32>
    %116 = tpu.matmul %4, %115, %cst_90 {dimension_numbers = #tpu.dot_dimension_numbers<[1], [0], [0], [1], [0, 0, 1, 1], [], []>} : vector<16x32xbf16>, vector<32x8xbf16>, vector<16x8xf32> -> vector<16x8xf32>
    %c0_91 = arith.constant 0 : index
    %c2_92 = arith.constant 2 : index
    %c0_93 = arith.constant 0 : index
    %c0_94 = arith.constant 0 : index
    %117 = vector.load %arg8[%c0_91, %c2_92, %c0_93, %c0_94] : memref<1x4x1x8xf32, #tpu.memory_space<vmem>>, vector<1x1x1x8xf32>
    %118 = vector.shape_cast %117 : vector<1x1x1x8xf32> to vector<1x8xf32>
    %119 = vector.broadcast %118 : vector<1x8xf32> to vector<16x8xf32>
    %120 = arith.addf %116, %119 : vector<16x8xf32>
    %c0_95 = arith.constant 0 : index
    %c2_96 = arith.constant 2 : index
    %c0_97 = arith.constant 0 : index
    %c0_98 = arith.constant 0 : index
    %121 = vector.load %arg9[%c0_95, %c2_96, %c0_97, %c0_98] : memref<1x4x32x8xbf16, #tpu.memory_space<vmem>>, vector<1x1x32x8xbf16>
    %122 = vector.shape_cast %121 : vector<1x1x32x8xbf16> to vector<32x8xbf16>
    %cst_99 = arith.constant dense<0.000000e+00> : vector<16x8xf32>
    %123 = tpu.matmul %4, %122, %cst_99 {dimension_numbers = #tpu.dot_dimension_numbers<[1], [0], [0], [1], [0, 0, 1, 1], [], []>} : vector<16x32xbf16>, vector<32x8xbf16>, vector<16x8xf32> -> vector<16x8xf32>
    %c0_100 = arith.constant 0 : index
    %c2_101 = arith.constant 2 : index
    %c0_102 = arith.constant 0 : index
    %c0_103 = arith.constant 0 : index
    %124 = vector.load %arg10[%c0_100, %c2_101, %c0_102, %c0_103] : memref<1x4x1x8xf32, #tpu.memory_space<vmem>>, vector<1x1x1x8xf32>
    %125 = vector.shape_cast %124 : vector<1x1x1x8xf32> to vector<1x8xf32>
    %126 = vector.broadcast %125 : vector<1x8xf32> to vector<16x8xf32>
    %127 = arith.addf %123, %126 : vector<16x8xf32>
    %128 = vector.shape_cast %113 : vector<16x8xf32> to vector<2x8x8xf32>
    %129 = arith.truncf %128 : vector<2x8x8xf32> to vector<2x8x8xbf16>
    %130 = vector.shape_cast %120 : vector<16x8xf32> to vector<2x8x8xf32>
    %131 = arith.truncf %130 : vector<2x8x8xf32> to vector<2x8x8xbf16>
    %132 = vector.shape_cast %127 : vector<16x8xf32> to vector<2x8x8xf32>
    %133 = arith.truncf %132 : vector<2x8x8xf32> to vector<2x8x8xbf16>
    "tpu.trace_start"() <{level = 10 : i32, message = "bqd,bkd->bqk"}> : () -> ()
    %cst_104 = arith.constant dense<0.000000e+00> : vector<2x8x8xf32>
    %134 = tpu.matmul %129, %131, %cst_104 {dimension_numbers = #tpu.dot_dimension_numbers<[2], [2], [1], [1], [0, 0, 0, 1, 1, 1], [0], [0]>} : vector<2x8x8xbf16>, vector<2x8x8xbf16>, vector<2x8x8xf32> -> vector<2x8x8xf32>
    "tpu.trace_stop"() : () -> ()
    %cst_105 = arith.constant 0.353553385 : f32
    %135 = vector.broadcast %cst_105 : f32 to vector<2x8x8xf32>
    %136 = arith.mulf %134, %135 : vector<2x8x8xf32>
    %137 = vector.broadcast %5 : vector<2x1x8xf32> to vector<2x8x8xf32>
    %138 = arith.addf %136, %137 : vector<2x8x8xf32>
    %cst_106 = arith.constant dense<0xFF800000> : vector<2x8xf32>
    %139 = vector.multi_reduction <maximumf>, %138, %cst_106 [2] : vector<2x8x8xf32> to vector<2x8xf32>
    %140 = vector.shape_cast %139 : vector<2x8xf32> to vector<2x8x1xf32>
    %141 = vector.broadcast %140 : vector<2x8x1xf32> to vector<2x8x8xf32>
    %142 = arith.subf %138, %141 : vector<2x8x8xf32>
    %143 = math.exp %142 : vector<2x8x8xf32>
    %cst_107 = arith.constant dense<0.000000e+00> : vector<2x8xf32>
    %144 = vector.multi_reduction <add>, %143, %cst_107 [2] : vector<2x8x8xf32> to vector<2x8xf32>
    %145 = vector.shape_cast %144 : vector<2x8xf32> to vector<2x8x1xf32>
    %146 = tpu.reciprocal %145 {approx = true} : vector<2x8x1xf32> -> vector<2x8x1xf32>
    %147 = vector.broadcast %146 : vector<2x8x1xf32> to vector<2x8x8xf32>
    %148 = arith.mulf %143, %147 : vector<2x8x8xf32>
    %149 = arith.truncf %148 : vector<2x8x8xf32> to vector<2x8x8xbf16>
    "tpu.trace_start"() <{level = 10 : i32, message = "bqk,bkd->bqd"}> : () -> ()
    %cst_108 = arith.constant dense<0.000000e+00> : vector<2x8x8xf32>
    %150 = tpu.matmul %149, %133, %cst_108 {dimension_numbers = #tpu.dot_dimension_numbers<[2], [1], [1], [2], [0, 0, 0, 1, 1, 2], [0], [0]>} : vector<2x8x8xbf16>, vector<2x8x8xbf16>, vector<2x8x8xf32> -> vector<2x8x8xf32>
    "tpu.trace_stop"() : () -> ()
    %151 = vector.shape_cast %150 : vector<2x8x8xf32> to vector<16x8xf32>
    %152 = arith.truncf %151 : vector<16x8xf32> to vector<16x8xbf16>
    %c0_109 = arith.constant 0 : index
    %c2_110 = arith.constant 2 : index
    %c0_111 = arith.constant 0 : index
    %c0_112 = arith.constant 0 : index
    %153 = vector.load %arg11[%c0_109, %c2_110, %c0_111, %c0_112] : memref<1x4x8x32xbf16, #tpu.memory_space<vmem>>, vector<1x1x8x32xbf16>
    %154 = vector.shape_cast %153 : vector<1x1x8x32xbf16> to vector<8x32xbf16>
    %cst_113 = arith.constant dense<0.000000e+00> : vector<16x32xf32>
    %155 = tpu.matmul %152, %154, %cst_113 {dimension_numbers = #tpu.dot_dimension_numbers<[1], [0], [0], [1], [0, 0, 1, 1], [], []>} : vector<16x8xbf16>, vector<8x32xbf16>, vector<16x32xf32> -> vector<16x32xf32>
    %156 = arith.addf %106, %155 : vector<16x32xf32>
    %c0_114 = arith.constant 0 : index
    %c3 = arith.constant 3 : index
    %c0_115 = arith.constant 0 : index
    %c0_116 = arith.constant 0 : index
    %157 = vector.load %arg5[%c0_114, %c3, %c0_115, %c0_116] : memref<1x4x32x8xbf16, #tpu.memory_space<vmem>>, vector<1x1x32x8xbf16>
    %158 = vector.shape_cast %157 : vector<1x1x32x8xbf16> to vector<32x8xbf16>
    %cst_117 = arith.constant dense<0.000000e+00> : vector<16x8xf32>
    %159 = tpu.matmul %4, %158, %cst_117 {dimension_numbers = #tpu.dot_dimension_numbers<[1], [0], [0], [1], [0, 0, 1, 1], [], []>} : vector<16x32xbf16>, vector<32x8xbf16>, vector<16x8xf32> -> vector<16x8xf32>
    %c0_118 = arith.constant 0 : index
    %c3_119 = arith.constant 3 : index
    %c0_120 = arith.constant 0 : index
    %c0_121 = arith.constant 0 : index
    %160 = vector.load %arg6[%c0_118, %c3_119, %c0_120, %c0_121] : memref<1x4x1x8xf32, #tpu.memory_space<vmem>>, vector<1x1x1x8xf32>
    %161 = vector.shape_cast %160 : vector<1x1x1x8xf32> to vector<1x8xf32>
    %162 = vector.broadcast %161 : vector<1x8xf32> to vector<16x8xf32>
    %163 = arith.addf %159, %162 : vector<16x8xf32>
    %c0_122 = arith.constant 0 : index
    %c3_123 = arith.constant 3 : index
    %c0_124 = arith.constant 0 : index
    %c0_125 = arith.constant 0 : index
    %164 = vector.load %arg7[%c0_122, %c3_123, %c0_124, %c0_125] : memref<1x4x32x8xbf16, #tpu.memory_space<vmem>>, vector<1x1x32x8xbf16>
    %165 = vector.shape_cast %164 : vector<1x1x32x8xbf16> to vector<32x8xbf16>
    %cst_126 = arith.constant dense<0.000000e+00> : vector<16x8xf32>
    %166 = tpu.matmul %4, %165, %cst_126 {dimension_numbers = #tpu.dot_dimension_numbers<[1], [0], [0], [1], [0, 0, 1, 1], [], []>} : vector<16x32xbf16>, vector<32x8xbf16>, vector<16x8xf32> -> vector<16x8xf32>
    %c0_127 = arith.constant 0 : index
    %c3_128 = arith.constant 3 : index
    %c0_129 = arith.constant 0 : index
    %c0_130 = arith.constant 0 : index
    %167 = vector.load %arg8[%c0_127, %c3_128, %c0_129, %c0_130] : memref<1x4x1x8xf32, #tpu.memory_space<vmem>>, vector<1x1x1x8xf32>
    %168 = vector.shape_cast %167 : vector<1x1x1x8xf32> to vector<1x8xf32>
    %169 = vector.broadcast %168 : vector<1x8xf32> to vector<16x8xf32>
    %170 = arith.addf %166, %169 : vector<16x8xf32>
    %c0_131 = arith.constant 0 : index
    %c3_132 = arith.constant 3 : index
    %c0_133 = arith.constant 0 : index
    %c0_134 = arith.constant 0 : index
    %171 = vector.load %arg9[%c0_131, %c3_132, %c0_133, %c0_134] : memref<1x4x32x8xbf16, #tpu.memory_space<vmem>>, vector<1x1x32x8xbf16>
    %172 = vector.shape_cast %171 : vector<1x1x32x8xbf16> to vector<32x8xbf16>
    %cst_135 = arith.constant dense<0.000000e+00> : vector<16x8xf32>
    %173 = tpu.matmul %4, %172, %cst_135 {dimension_numbers = #tpu.dot_dimension_numbers<[1], [0], [0], [1], [0, 0, 1, 1], [], []>} : vector<16x32xbf16>, vector<32x8xbf16>, vector<16x8xf32> -> vector<16x8xf32>
    %c0_136 = arith.constant 0 : index
    %c3_137 = arith.constant 3 : index
    %c0_138 = arith.constant 0 : index
    %c0_139 = arith.constant 0 : index
    %174 = vector.load %arg10[%c0_136, %c3_137, %c0_138, %c0_139] : memref<1x4x1x8xf32, #tpu.memory_space<vmem>>, vector<1x1x1x8xf32>
    %175 = vector.shape_cast %174 : vector<1x1x1x8xf32> to vector<1x8xf32>
    %176 = vector.broadcast %175 : vector<1x8xf32> to vector<16x8xf32>
    %177 = arith.addf %173, %176 : vector<16x8xf32>
    %178 = vector.shape_cast %163 : vector<16x8xf32> to vector<2x8x8xf32>
    %179 = arith.truncf %178 : vector<2x8x8xf32> to vector<2x8x8xbf16>
    %180 = vector.shape_cast %170 : vector<16x8xf32> to vector<2x8x8xf32>
    %181 = arith.truncf %180 : vector<2x8x8xf32> to vector<2x8x8xbf16>
    %182 = vector.shape_cast %177 : vector<16x8xf32> to vector<2x8x8xf32>
    %183 = arith.truncf %182 : vector<2x8x8xf32> to vector<2x8x8xbf16>
    "tpu.trace_start"() <{level = 10 : i32, message = "bqd,bkd->bqk"}> : () -> ()
    %cst_140 = arith.constant dense<0.000000e+00> : vector<2x8x8xf32>
    %184 = tpu.matmul %179, %181, %cst_140 {dimension_numbers = #tpu.dot_dimension_numbers<[2], [2], [1], [1], [0, 0, 0, 1, 1, 1], [0], [0]>} : vector<2x8x8xbf16>, vector<2x8x8xbf16>, vector<2x8x8xf32> -> vector<2x8x8xf32>
    "tpu.trace_stop"() : () -> ()
    %cst_141 = arith.constant 0.353553385 : f32
    %185 = vector.broadcast %cst_141 : f32 to vector<2x8x8xf32>
    %186 = arith.mulf %184, %185 : vector<2x8x8xf32>
    %187 = vector.broadcast %5 : vector<2x1x8xf32> to vector<2x8x8xf32>
    %188 = arith.addf %186, %187 : vector<2x8x8xf32>
    %cst_142 = arith.constant dense<0xFF800000> : vector<2x8xf32>
    %189 = vector.multi_reduction <maximumf>, %188, %cst_142 [2] : vector<2x8x8xf32> to vector<2x8xf32>
    %190 = vector.shape_cast %189 : vector<2x8xf32> to vector<2x8x1xf32>
    %191 = vector.broadcast %190 : vector<2x8x1xf32> to vector<2x8x8xf32>
    %192 = arith.subf %188, %191 : vector<2x8x8xf32>
    %193 = math.exp %192 : vector<2x8x8xf32>
    %cst_143 = arith.constant dense<0.000000e+00> : vector<2x8xf32>
    %194 = vector.multi_reduction <add>, %193, %cst_143 [2] : vector<2x8x8xf32> to vector<2x8xf32>
    %195 = vector.shape_cast %194 : vector<2x8xf32> to vector<2x8x1xf32>
    %196 = tpu.reciprocal %195 {approx = true} : vector<2x8x1xf32> -> vector<2x8x1xf32>
    %197 = vector.broadcast %196 : vector<2x8x1xf32> to vector<2x8x8xf32>
    %198 = arith.mulf %193, %197 : vector<2x8x8xf32>
    %199 = arith.truncf %198 : vector<2x8x8xf32> to vector<2x8x8xbf16>
    "tpu.trace_start"() <{level = 10 : i32, message = "bqk,bkd->bqd"}> : () -> ()
    %cst_144 = arith.constant dense<0.000000e+00> : vector<2x8x8xf32>
    %200 = tpu.matmul %199, %183, %cst_144 {dimension_numbers = #tpu.dot_dimension_numbers<[2], [1], [1], [2], [0, 0, 0, 1, 1, 2], [0], [0]>} : vector<2x8x8xbf16>, vector<2x8x8xbf16>, vector<2x8x8xf32> -> vector<2x8x8xf32>
    "tpu.trace_stop"() : () -> ()
    %201 = vector.shape_cast %200 : vector<2x8x8xf32> to vector<16x8xf32>
    %202 = arith.truncf %201 : vector<16x8xf32> to vector<16x8xbf16>
    %c0_145 = arith.constant 0 : index
    %c3_146 = arith.constant 3 : index
    %c0_147 = arith.constant 0 : index
    %c0_148 = arith.constant 0 : index
    %203 = vector.load %arg11[%c0_145, %c3_146, %c0_147, %c0_148] : memref<1x4x8x32xbf16, #tpu.memory_space<vmem>>, vector<1x1x8x32xbf16>
    %204 = vector.shape_cast %203 : vector<1x1x8x32xbf16> to vector<8x32xbf16>
    %cst_149 = arith.constant dense<0.000000e+00> : vector<16x32xf32>
    %205 = tpu.matmul %202, %204, %cst_149 {dimension_numbers = #tpu.dot_dimension_numbers<[1], [0], [0], [1], [0, 0, 1, 1], [], []>} : vector<16x8xbf16>, vector<8x32xbf16>, vector<16x32xf32> -> vector<16x32xf32>
    %206 = arith.addf %156, %205 : vector<16x32xf32>
    %c0_150 = arith.constant 0 : index
    %c0_151 = arith.constant 0 : index
    %c0_152 = arith.constant 0 : index
    %207 = vector.load %arg12[%c0_150, %c0_151, %c0_152] : memref<1x1x32xf32, #tpu.memory_space<vmem>>, vector<1x1x32xf32>
    %208 = vector.shape_cast %207 : vector<1x1x32xf32> to vector<1x32xf32>
    %209 = vector.broadcast %208 : vector<1x32xf32> to vector<16x32xf32>
    %210 = arith.addf %206, %209 : vector<16x32xf32>
    %211 = arith.addf %210, %3 : vector<16x32xf32>
    %c0_153 = arith.constant 0 : index
    %c0_154 = arith.constant 0 : index
    %c0_155 = arith.constant 0 : index
    %212 = vector.load %arg13[%c0_153, %c0_154, %c0_155] : memref<1x1x32xf32, #tpu.memory_space<vmem>>, vector<1x1x32xf32>
    %213 = vector.shape_cast %212 : vector<1x1x32xf32> to vector<1x32xf32>
    %c0_156 = arith.constant 0 : index
    %c0_157 = arith.constant 0 : index
    %c0_158 = arith.constant 0 : index
    %214 = vector.load %arg14[%c0_156, %c0_157, %c0_158] : memref<1x1x32xf32, #tpu.memory_space<vmem>>, vector<1x1x32xf32>
    %215 = vector.shape_cast %214 : vector<1x1x32xf32> to vector<1x32xf32>
    %cst_159 = arith.constant dense<0.000000e+00> : vector<16xf32>
    %216 = vector.multi_reduction <add>, %211, %cst_159 [1] : vector<16x32xf32> to vector<16xf32>
    %217 = vector.shape_cast %216 : vector<16xf32> to vector<16x1xf32>
    %cst_160 = arith.constant 3.200000e+01 : f32
    %218 = vector.broadcast %cst_160 : f32 to vector<16x1xf32>
    %219 = arith.divf %217, %218 : vector<16x1xf32>
    %220 = vector.broadcast %219 : vector<16x1xf32> to vector<16x32xf32>
    %221 = arith.subf %211, %220 : vector<16x32xf32>
    %222 = vector.broadcast %219 : vector<16x1xf32> to vector<16x32xf32>
    %223 = arith.subf %211, %222 : vector<16x32xf32>
    %224 = arith.mulf %221, %223 : vector<16x32xf32>
    %cst_161 = arith.constant dense<0.000000e+00> : vector<16xf32>
    %225 = vector.multi_reduction <add>, %224, %cst_161 [1] : vector<16x32xf32> to vector<16xf32>
    %226 = vector.shape_cast %225 : vector<16xf32> to vector<16x1xf32>
    %cst_162 = arith.constant 3.200000e+01 : f32
    %227 = vector.broadcast %cst_162 : f32 to vector<16x1xf32>
    %228 = arith.divf %226, %227 : vector<16x1xf32>
    %229 = vector.broadcast %219 : vector<16x1xf32> to vector<16x32xf32>
    %230 = arith.subf %211, %229 : vector<16x32xf32>
    %cst_163 = arith.constant 1.000000e-07 : f32
    %231 = vector.broadcast %cst_163 : f32 to vector<16x1xf32>
    %232 = arith.addf %228, %231 : vector<16x1xf32>
    %233 = math.rsqrt %232 : vector<16x1xf32>
    %234 = vector.broadcast %233 : vector<16x1xf32> to vector<16x32xf32>
    %235 = arith.mulf %230, %234 : vector<16x32xf32>
    %236 = vector.broadcast %213 : vector<1x32xf32> to vector<16x32xf32>
    %237 = arith.mulf %235, %236 : vector<16x32xf32>
    %238 = vector.broadcast %215 : vector<1x32xf32> to vector<16x32xf32>
    %239 = arith.addf %237, %238 : vector<16x32xf32>
    %240 = arith.truncf %239 : vector<16x32xf32> to vector<16x32xbf16>
    %c0_164 = arith.constant 0 : index
    %c0_165 = arith.constant 0 : index
    %c0_166 = arith.constant 0 : index
    %241 = vector.load %arg15[%c0_164, %c0_165, %c0_166] : memref<1x32x64xbf16, #tpu.memory_space<vmem>>, vector<1x32x64xbf16>
    %242 = vector.shape_cast %241 : vector<1x32x64xbf16> to vector<32x64xbf16>
    %cst_167 = arith.constant dense<0.000000e+00> : vector<16x64xf32>
    %243 = tpu.matmul %240, %242, %cst_167 {dimension_numbers = #tpu.dot_dimension_numbers<[1], [0], [0], [1], [0, 0, 1, 1], [], []>} : vector<16x32xbf16>, vector<32x64xbf16>, vector<16x64xf32> -> vector<16x64xf32>
    %c0_168 = arith.constant 0 : index
    %c0_169 = arith.constant 0 : index
    %c0_170 = arith.constant 0 : index
    %244 = vector.load %arg16[%c0_168, %c0_169, %c0_170] : memref<1x1x64xf32, #tpu.memory_space<vmem>>, vector<1x1x64xf32>
    %245 = vector.shape_cast %244 : vector<1x1x64xf32> to vector<1x64xf32>
    %246 = vector.broadcast %245 : vector<1x64xf32> to vector<16x64xf32>
    %247 = arith.addf %243, %246 : vector<16x64xf32>
    %248 = arith.mulf %247, %247 : vector<16x64xf32>
    %249 = arith.mulf %247, %248 : vector<16x64xf32>
    %cst_171 = arith.constant 4.471500e-02 : f32
    %250 = vector.broadcast %cst_171 : f32 to vector<16x64xf32>
    %251 = arith.mulf %250, %249 : vector<16x64xf32>
    %252 = arith.addf %247, %251 : vector<16x64xf32>
    %cst_172 = arith.constant 0.797884583 : f32
    %253 = vector.broadcast %cst_172 : f32 to vector<16x64xf32>
    %254 = arith.mulf %253, %252 : vector<16x64xf32>
    %255 = math.tanh %254 : vector<16x64xf32>
    %cst_173 = arith.constant 1.000000e+00 : f32
    %256 = vector.broadcast %cst_173 : f32 to vector<16x64xf32>
    %257 = arith.addf %256, %255 : vector<16x64xf32>
    %cst_174 = arith.constant 5.000000e-01 : f32
    %258 = vector.broadcast %cst_174 : f32 to vector<16x64xf32>
    %259 = arith.mulf %258, %257 : vector<16x64xf32>
    %260 = arith.mulf %247, %259 : vector<16x64xf32>
    %261 = arith.truncf %260 : vector<16x64xf32> to vector<16x64xbf16>
    %c0_175 = arith.constant 0 : index
    %c0_176 = arith.constant 0 : index
    %c0_177 = arith.constant 0 : index
    %262 = vector.load %arg17[%c0_175, %c0_176, %c0_177] : memref<1x64x32xbf16, #tpu.memory_space<vmem>>, vector<1x64x32xbf16>
    %263 = vector.shape_cast %262 : vector<1x64x32xbf16> to vector<64x32xbf16>
    %cst_178 = arith.constant dense<0.000000e+00> : vector<16x32xf32>
    %264 = tpu.matmul %261, %263, %cst_178 {dimension_numbers = #tpu.dot_dimension_numbers<[1], [0], [0], [1], [0, 0, 1, 1], [], []>} : vector<16x64xbf16>, vector<64x32xbf16>, vector<16x32xf32> -> vector<16x32xf32>
    %c0_179 = arith.constant 0 : index
    %c0_180 = arith.constant 0 : index
    %c0_181 = arith.constant 0 : index
    %265 = vector.load %arg18[%c0_179, %c0_180, %c0_181] : memref<1x1x32xf32, #tpu.memory_space<vmem>>, vector<1x1x32xf32>
    %266 = vector.shape_cast %265 : vector<1x1x32xf32> to vector<1x32xf32>
    %267 = vector.broadcast %266 : vector<1x32xf32> to vector<16x32xf32>
    %268 = arith.addf %264, %267 : vector<16x32xf32>
    %269 = arith.addf %268, %239 : vector<16x32xf32>
    %c0_182 = arith.constant 0 : index
    %c0_183 = arith.constant 0 : index
    %c0_184 = arith.constant 0 : index
    %270 = vector.load %arg19[%c0_182, %c0_183, %c0_184] : memref<1x1x32xf32, #tpu.memory_space<vmem>>, vector<1x1x32xf32>
    %271 = vector.shape_cast %270 : vector<1x1x32xf32> to vector<1x32xf32>
    %c0_185 = arith.constant 0 : index
    %c0_186 = arith.constant 0 : index
    %c0_187 = arith.constant 0 : index
    %272 = vector.load %arg20[%c0_185, %c0_186, %c0_187] : memref<1x1x32xf32, #tpu.memory_space<vmem>>, vector<1x1x32xf32>
    %273 = vector.shape_cast %272 : vector<1x1x32xf32> to vector<1x32xf32>
    %cst_188 = arith.constant dense<0.000000e+00> : vector<16xf32>
    %274 = vector.multi_reduction <add>, %269, %cst_188 [1] : vector<16x32xf32> to vector<16xf32>
    %275 = vector.shape_cast %274 : vector<16xf32> to vector<16x1xf32>
    %cst_189 = arith.constant 3.200000e+01 : f32
    %276 = vector.broadcast %cst_189 : f32 to vector<16x1xf32>
    %277 = arith.divf %275, %276 : vector<16x1xf32>
    %278 = vector.broadcast %277 : vector<16x1xf32> to vector<16x32xf32>
    %279 = arith.subf %269, %278 : vector<16x32xf32>
    %280 = vector.broadcast %277 : vector<16x1xf32> to vector<16x32xf32>
    %281 = arith.subf %269, %280 : vector<16x32xf32>
    %282 = arith.mulf %279, %281 : vector<16x32xf32>
    %cst_190 = arith.constant dense<0.000000e+00> : vector<16xf32>
    %283 = vector.multi_reduction <add>, %282, %cst_190 [1] : vector<16x32xf32> to vector<16xf32>
    %284 = vector.shape_cast %283 : vector<16xf32> to vector<16x1xf32>
    %cst_191 = arith.constant 3.200000e+01 : f32
    %285 = vector.broadcast %cst_191 : f32 to vector<16x1xf32>
    %286 = arith.divf %284, %285 : vector<16x1xf32>
    %287 = vector.broadcast %277 : vector<16x1xf32> to vector<16x32xf32>
    %288 = arith.subf %269, %287 : vector<16x32xf32>
    %cst_192 = arith.constant 1.000000e-07 : f32
    %289 = vector.broadcast %cst_192 : f32 to vector<16x1xf32>
    %290 = arith.addf %286, %289 : vector<16x1xf32>
    %291 = math.rsqrt %290 : vector<16x1xf32>
    %292 = vector.broadcast %291 : vector<16x1xf32> to vector<16x32xf32>
    %293 = arith.mulf %288, %292 : vector<16x32xf32>
    %294 = vector.broadcast %271 : vector<1x32xf32> to vector<16x32xf32>
    %295 = arith.mulf %293, %294 : vector<16x32xf32>
    %296 = vector.broadcast %273 : vector<1x32xf32> to vector<16x32xf32>
    %297 = arith.addf %295, %296 : vector<16x32xf32>
    %c0_193 = arith.constant 0 : index
    %c0_194 = arith.constant 0 : index
    %298 = vector.load %arg27[%c0_193, %c0_194] : memref<16x32xf32, #tpu.memory_space<vmem>>, vector<16x32xf32>
    tpu.vector_store %arg27[%c0_193, %c0_194], %297 {strides = array<i32>} : memref<16x32xf32, #tpu.memory_space<vmem>>, vector<16x32xf32>,
    %c1_i32 = arith.constant 1 : i32
    %299 = arith.cmpi eq, %arg0, %c1_i32 : i32
    %300 = arith.extui %299 : i1 to i32
    %c0_i32_195 = arith.constant 0 : i32
    %301 = arith.cmpi ne, %300, %c0_i32_195 : i32
    scf.if %301 {
      %302 = vector.shape_cast %297 : vector<16x32xf32> to vector<2x8x32xf32>
      %c0_196 = arith.constant 0 : index
      %c0_197 = arith.constant 0 : index
      %c0_198 = arith.constant 0 : index
      %303 = vector.load %arg24[%c0_196, %c0_197, %c0_198] : memref<2x8x32xf32, #tpu.memory_space<vmem>>, vector<2x8x32xf32>
      tpu.vector_store %arg24[%c0_196, %c0_197, %c0_198], %302 {strides = array<i32>} : memref<2x8x32xf32, #tpu.memory_space<vmem>>, vector<2x8x32xf32>,
      %304 = vector.extract_strided_slice %302 {offsets = [0, 0, 0], sizes = [2, 1, 32], strides = [1, 1, 1]} : vector<2x8x32xf32> to vector<2x1x32xf32>
      %305 = vector.shape_cast %304 : vector<2x1x32xf32> to vector<2x32xf32>
      %c0_199 = arith.constant 0 : index
      %c0_200 = arith.constant 0 : index
      %306 = vector.load %arg21[%c0_199, %c0_200] : memref<32x3xf32, #tpu.memory_space<vmem>>, vector<32x3xf32>
      %cst_201 = arith.constant dense<0.000000e+00> : vector<2x3xf32>
      %307 = tpu.matmul %305, %306, %cst_201 {dimension_numbers = #tpu.dot_dimension_numbers<[1], [0], [0], [1], [0, 0, 1, 1], [], []>} : vector<2x32xf32>, vector<32x3xf32>, vector<2x3xf32> -> vector<2x3xf32>
      %c0_202 = arith.constant 0 : index
      %c0_203 = arith.constant 0 : index
      %308 = vector.load %arg22[%c0_202, %c0_203] : memref<1x3xf32, #tpu.memory_space<vmem>>, vector<1x3xf32>
      %309 = vector.broadcast %308 : vector<1x3xf32> to vector<2x3xf32>
      %310 = arith.addf %307, %309 : vector<2x3xf32>
      %c0_204 = arith.constant 0 : index
      %c0_205 = arith.constant 0 : index
      %311 = vector.load %arg25[%c0_204, %c0_205] : memref<2x3xf32, #tpu.memory_space<vmem>>, vector<2x3xf32>
      tpu.vector_store %arg25[%c0_204, %c0_205], %310 {strides = array<i32>} : memref<2x3xf32, #tpu.memory_space<vmem>>, vector<2x3xf32>,
      %cst_206 = arith.constant dense<0xFF800000> : vector<2xf32>
      %312 = vector.multi_reduction <maximumf>, %310, %cst_206 [1] : vector<2x3xf32> to vector<2xf32>
      %313 = vector.shape_cast %312 : vector<2xf32> to vector<2x1xf32>
      %314 = vector.broadcast %313 : vector<2x1xf32> to vector<2x3xf32>
      %315 = arith.subf %310, %314 : vector<2x3xf32>
      %316 = math.exp %315 : vector<2x3xf32>
      %cst_207 = arith.constant dense<0.000000e+00> : vector<2xf32>
      %317 = vector.multi_reduction <add>, %316, %cst_207 [1] : vector<2x3xf32> to vector<2xf32>
      %318 = vector.shape_cast %317 : vector<2xf32> to vector<2x1xf32>
      %319 = math.log %318 : vector<2x1xf32>
      %320 = arith.addf %319, %313 : vector<2x1xf32>
      %321 = vector.broadcast %320 : vector<2x1xf32> to vector<2x3xf32>
      %322 = arith.subf %310, %321 : vector<2x3xf32>
      %c0_208 = arith.constant 0 : index
      %c0_209 = arith.constant 0 : index
      %323 = vector.load %arg23[%c0_208, %c0_209] : memref<2x3xf32, #tpu.memory_space<vmem>>, vector<2x3xf32>
      %324 = arith.mulf %323, %322 : vector<2x3xf32>
      %cst_210 = arith.constant dense<0.000000e+00> : vector<2xf32>
      %325 = vector.multi_reduction <add>, %324, %cst_210 [1] : vector<2x3xf32> to vector<2xf32>
      %326 = vector.shape_cast %325 : vector<2xf32> to vector<2x1xf32>
      %cst_211 = arith.constant 0.000000e+00 : f32
      %327 = vector.broadcast %cst_211 : f32 to vector<2x1xf32>
      %328 = arith.subf %327, %326 : vector<2x1xf32>
      %329 = vector.shape_cast %328 : vector<2x1xf32> to vector<1x2x1xf32>
      %cst_212 = arith.constant dense<0.000000e+00> : vector<1xf32>
      %330 = vector.multi_reduction <add>, %329, %cst_212 [1, 2] : vector<1x2x1xf32> to vector<1xf32>
      %331 = vector.shape_cast %330 : vector<1xf32> to vector<1x1x1xf32>
      %332 = vector.extract %331[0, 0, 0] : f32 from vector<1x1x1xf32>
      %333 = vector.broadcast %332 : f32 to vector<1x1xf32>
      %cst_213 = arith.constant 2.000000e+00 : f32
      %334 = vector.broadcast %cst_213 : f32 to vector<1x1xf32>
      %335 = arith.divf %333, %334 : vector<1x1xf32>
      %c0_214 = arith.constant 0 : index
      %c0_215 = arith.constant 0 : index
      %336 = vector.load %arg26[%c0_214, %c0_215] : memref<1x1xf32, #tpu.memory_space<vmem>>, vector<1x1xf32>
      tpu.vector_store %arg26[%c0_214, %c0_215], %335 {strides = array<i32>} : memref<1x1xf32, #tpu.memory_space<vmem>>, vector<1x1xf32>,
    } else {
    }
    return
  }
  func.func @transform_0(%arg0: i32) -> (i32, i32, i32) {
    %c0_i32 = arith.constant 0 : i32
    %c0_i32_0 = arith.constant 0 : i32
    %c0_i32_1 = arith.constant 0 : i32
    %c0_i32_2 = arith.constant 0 : i32
    return %c0_i32, %c0_i32_0, %c0_i32_1 : i32, i32, i32
  }
  func.func @transform_1(%arg0: i32) -> (i32, i32, i32) {
    %c0_i32 = arith.constant 0 : i32
    %c0_i32_0 = arith.constant 0 : i32
    %c0_i32_1 = arith.constant 0 : i32
    %c0_i32_2 = arith.constant 0 : i32
    return %c0_i32, %c0_i32_0, %c0_i32_1 : i32, i32, i32
  }
  func.func @transform_2(%arg0: i32) -> (i32, i32) {
    %c0_i32 = arith.constant 0 : i32
    %c0_i32_0 = arith.constant 0 : i32
    %c0_i32_1 = arith.constant 0 : i32
    return %c0_i32, %c0_i32_0 : i32, i32
  }
  func.func @transform_3(%arg0: i32) -> (i32, i32) {
    %c0_i32 = arith.constant 0 : i32
    %c0_i32_0 = arith.constant 0 : i32
    %c0_i32_1 = arith.constant 0 : i32
    return %c0_i32, %c0_i32_0 : i32, i32
  }
  func.func @transform_4(%arg0: i32) -> (i32, i32, i32, i32) {
    %c0_i32 = arith.constant 0 : i32
    %c0_i32_0 = arith.constant 0 : i32
    %c0_i32_1 = arith.constant 0 : i32
    %c0_i32_2 = arith.constant 0 : i32
    return %arg0, %c0_i32, %c0_i32_0, %c0_i32_1 : i32, i32, i32, i32
  }
  func.func @transform_5(%arg0: i32) -> (i32, i32, i32, i32) {
    %c0_i32 = arith.constant 0 : i32
    %c0_i32_0 = arith.constant 0 : i32
    %c0_i32_1 = arith.constant 0 : i32
    %c0_i32_2 = arith.constant 0 : i32
    return %arg0, %c0_i32, %c0_i32_0, %c0_i32_1 : i32, i32, i32, i32
  }
  func.func @transform_6(%arg0: i32) -> (i32, i32, i32, i32) {
    %c0_i32 = arith.constant 0 : i32
    %c0_i32_0 = arith.constant 0 : i32
    %c0_i32_1 = arith.constant 0 : i32
    %c0_i32_2 = arith.constant 0 : i32
    return %arg0, %c0_i32, %c0_i32_0, %c0_i32_1 : i32, i32, i32, i32
  }
  func.func @transform_7(%arg0: i32) -> (i32, i32, i32, i32) {
    %c0_i32 = arith.constant 0 : i32
    %c0_i32_0 = arith.constant 0 : i32
    %c0_i32_1 = arith.constant 0 : i32
    %c0_i32_2 = arith.constant 0 : i32
    return %arg0, %c0_i32, %c0_i32_0, %c0_i32_1 : i32, i32, i32, i32
  }
  func.func @transform_8(%arg0: i32) -> (i32, i32, i32, i32) {
    %c0_i32 = arith.constant 0 : i32
    %c0_i32_0 = arith.constant 0 : i32
    %c0_i32_1 = arith.constant 0 : i32
    %c0_i32_2 = arith.constant 0 : i32
    return %arg0, %c0_i32, %c0_i32_0, %c0_i32_1 : i32, i32, i32, i32
  }
  func.func @transform_9(%arg0: i32) -> (i32, i32, i32, i32) {
    %c0_i32 = arith.constant 0 : i32
    %c0_i32_0 = arith.constant 0 : i32
    %c0_i32_1 = arith.constant 0 : i32
    %c0_i32_2 = arith.constant 0 : i32
    return %arg0, %c0_i32, %c0_i32_0, %c0_i32_1 : i32, i32, i32, i32
  }
  func.func @transform_10(%arg0: i32) -> (i32, i32, i32, i32) {
    %c0_i32 = arith.constant 0 : i32
    %c0_i32_0 = arith.constant 0 : i32
    %c0_i32_1 = arith.constant 0 : i32
    %c0_i32_2 = arith.constant 0 : i32
    return %arg0, %c0_i32, %c0_i32_0, %c0_i32_1 : i32, i32, i32, i32
  }
  func.func @transform_11(%arg0: i32) -> (i32, i32, i32) {
    %c0_i32 = arith.constant 0 : i32
    %c0_i32_0 = arith.constant 0 : i32
    %c0_i32_1 = arith.constant 0 : i32
    return %arg0, %c0_i32, %c0_i32_0 : i32, i32, i32
  }
  func.func @transform_12(%arg0: i32) -> (i32, i32, i32) {
    %c0_i32 = arith.constant 0 : i32
    %c0_i32_0 = arith.constant 0 : i32
    %c0_i32_1 = arith.constant 0 : i32
    return %arg0, %c0_i32, %c0_i32_0 : i32, i32, i32
  }
  func.func @transform_13(%arg0: i32) -> (i32, i32, i32) {
    %c0_i32 = arith.constant 0 : i32
    %c0_i32_0 = arith.constant 0 : i32
    %c0_i32_1 = arith.constant 0 : i32
    return %arg0, %c0_i32, %c0_i32_0 : i32, i32, i32
  }
  func.func @transform_14(%arg0: i32) -> (i32, i32, i32) {
    %c0_i32 = arith.constant 0 : i32
    %c0_i32_0 = arith.constant 0 : i32
    %c0_i32_1 = arith.constant 0 : i32
    return %arg0, %c0_i32, %c0_i32_0 : i32, i32, i32
  }
  func.func @transform_15(%arg0: i32) -> (i32, i32, i32) {
    %c0_i32 = arith.constant 0 : i32
    %c0_i32_0 = arith.constant 0 : i32
    %c0_i32_1 = arith.constant 0 : i32
    return %arg0, %c0_i32, %c0_i32_0 : i32, i32, i32
  }
  func.func @transform_16(%arg0: i32) -> (i32, i32, i32) {
    %c0_i32 = arith.constant 0 : i32
    %c0_i32_0 = arith.constant 0 : i32
    %c0_i32_1 = arith.constant 0 : i32
    return %arg0, %c0_i32, %c0_i32_0 : i32, i32, i32
  }
  func.func @transform_17(%arg0: i32) -> (i32, i32, i32) {
    %c0_i32 = arith.constant 0 : i32
    %c0_i32_0 = arith.constant 0 : i32
    %c0_i32_1 = arith.constant 0 : i32
    return %arg0, %c0_i32, %c0_i32_0 : i32, i32, i32
  }
  func.func @transform_18(%arg0: i32) -> (i32, i32, i32) {
    %c0_i32 = arith.constant 0 : i32
    %c0_i32_0 = arith.constant 0 : i32
    %c0_i32_1 = arith.constant 0 : i32
    return %arg0, %c0_i32, %c0_i32_0 : i32, i32, i32
  }
  func.func @transform_19(%arg0: i32) -> (i32, i32, i32) {
    %c0_i32 = arith.constant 0 : i32
    %c0_i32_0 = arith.constant 0 : i32
    %c0_i32_1 = arith.constant 0 : i32
    return %arg0, %c0_i32, %c0_i32_0 : i32, i32, i32
  }
  func.func @transform_20(%arg0: i32) -> (i32, i32) {
    %c0_i32 = arith.constant 0 : i32
    %c0_i32_0 = arith.constant 0 : i32
    %c0_i32_1 = arith.constant 0 : i32
    return %c0_i32, %c0_i32_0 : i32, i32
  }
  func.func @transform_21(%arg0: i32) -> (i32, i32) {
    %c0_i32 = arith.constant 0 : i32
    %c0_i32_0 = arith.constant 0 : i32
    %c0_i32_1 = arith.constant 0 : i32
    return %c0_i32, %c0_i32_0 : i32, i32
  }
  func.func @transform_22(%arg0: i32) -> (i32, i32) {
    %c0_i32 = arith.constant 0 : i32
    %c0_i32_0 = arith.constant 0 : i32
    %c0_i32_1 = arith.constant 0 : i32
    return %c0_i32, %c0_i32_0 : i32, i32
  }
  func.func @transform_23(%arg0: i32) -> (i32, i32, i32) {
    %c0_i32 = arith.constant 0 : i32
    %c0_i32_0 = arith.constant 0 : i32
    %c0_i32_1 = arith.constant 0 : i32
    %c0_i32_2 = arith.constant 0 : i32
    return %c0_i32, %c0_i32_0, %c0_i32_1 : i32, i32, i32
  }
  func.func @transform_24(%arg0: i32) -> (i32, i32) {
    %c0_i32 = arith.constant 0 : i32
    %c0_i32_0 = arith.constant 0 : i32
    %c0_i32_1 = arith.constant 0 : i32
    return %c0_i32, %c0_i32_0 : i32, i32
  }
  func.func @transform_25(%arg0: i32) -> (i32, i32) {
    %c0_i32 = arith.constant 0 : i32
    %c0_i32_0 = arith.constant 0 : i32
    %c0_i32_1 = arith.constant 0 : i32
    return %c0_i32, %c0_i32_0 : i32, i32
  }
}

</mosaic_0001>

<llo_original>
// kernel: deberta_forward.1
$region0: #{deberta_forward.1}
  #allocation0 [shape = 'u32[]', space=smem, size = 0x4, offset = 0x4, fixed_abs, tag = 'smem constant byte address 0x4 - core index']
  #allocation1 [shape = 'u32[144,128]{1,0:T(1,128)}', space=vmem, size = 0x12000, scoped, tag = 'internal scratch']
  #allocation2 [shape = 'f32[16,32]{1,0:T(8,128)}', space=vmem, size = 0x2000, scoped, tag = 'scratch operand']
  %s0 = inlined_call_operand.vmem [shape: f32[2,8,32], index: 0, kind: input, shape index: {}]
  %s1 = inlined_call_operand.vmem [shape: f32[2,1,8], index: 1, kind: input, shape index: {}]
  %s2 = inlined_call_operand.vmem [shape: f32[1,32], index: 2, kind: input, shape index: {}]
  %s3 = inlined_call_operand.vmem [shape: f32[1,32], index: 3, kind: input, shape index: {}]
  %s4 = inlined_call_operand.vmem [shape: bf16[2,4,32,8], index: 4, kind: input, shape index: {}]
  %s5 = inlined_call_operand.vmem [shape: f32[2,4,1,8], index: 5, kind: input, shape index: {}]
  %s6 = inlined_call_operand.vmem [shape: bf16[2,4,32,8], index: 6, kind: input, shape index: {}]
  %s7 = inlined_call_operand.vmem [shape: f32[2,4,1,8], index: 7, kind: input, shape index: {}]
  %s8 = inlined_call_operand.vmem [shape: bf16[2,4,32,8], index: 8, kind: input, shape index: {}]
  %s9 = inlined_call_operand.vmem [shape: f32[2,4,1,8], index: 9, kind: input, shape index: {}]
  %s10 = inlined_call_operand.vmem [shape: bf16[2,4,8,32], index: 10, kind: input, shape index: {}]
  %s11 = inlined_call_operand.vmem [shape: f32[2,1,32], index: 11, kind: input, shape index: {}]
  %s12 = inlined_call_operand.vmem [shape: f32[2,1,32], index: 12, kind: input, shape index: {}]
  %s13 = inlined_call_operand.vmem [shape: f32[2,1,32], index: 13, kind: input, shape index: {}]
  %s14 = inlined_call_operand.vmem [shape: bf16[2,32,64], index: 14, kind: input, shape index: {}]
  %s15 = inlined_call_operand.vmem [shape: f32[2,1,64], index: 15, kind: input, shape index: {}]
  %s16 = inlined_call_operand.vmem [shape: bf16[2,64,32], index: 16, kind: input, shape index: {}]
  %s17 = inlined_call_operand.vmem [shape: f32[2,1,32], index: 17, kind: input, shape index: {}]
  %s18 = inlined_call_operand.vmem [shape: f32[2,1,32], index: 18, kind: input, shape index: {}]
  %s19 = inlined_call_operand.vmem [shape: f32[2,1,32], index: 19, kind: input, shape index: {}]
  %s20 = inlined_call_operand.vmem [shape: f32[32,3], index: 20, kind: input, shape index: {}]
  %s21 = inlined_call_operand.vmem [shape: f32[1,3], index: 21, kind: input, shape index: {}]
  %s22 = inlined_call_operand.vmem [shape: f32[2,3], index: 22, kind: input, shape index: {}]
  %s23 = inlined_call_operand.hbm [shape: f32[2,8,32], index: 23, kind: output, shape index: {0}]
  %s24 = inlined_call_operand.hbm [shape: f32[2,3], index: 24, kind: output, shape index: {1}]
  %s25 = inlined_call_operand.hbm [shape: f32[1,1], index: 25, kind: output, shape index: {2}]
  %26 = xla_tuple %s23, %s24, %s25
  %s27 = sld [smem:[#allocation0]]
  $region149: #{deberta_forward.1} parent=0
    _
  %s29 = ssub.s32 1, %s27
  %s30 = scalar_select 0, %s29, %s27
  $region1: #{deberta_forward.1} parent=0
    #allocation3 [shape = 'u8[8192]{0}', space=vmem, size = 0x2000, scoped, tag = 'output window, operand 0, single buffered']
    #allocation4 [shape = 's32[2]{0}', space=sflag, size = 0x8, scoped, tag = 'scoped memory for deberta_forward.1']
    #allocation5 [shape = 'u8[1024]{0}', space=vmem, size = 0x400, scoped, tag = 'output window, operand 1, single buffered']
    #allocation6 [shape = 's32[1]{0}', space=sflag, size = 0x4, scoped, tag = 'scoped memory for deberta_forward.1']
    #allocation7 [shape = 'u8[512]{0}', space=vmem, size = 0x400, scoped, tag = 'output window, operand 2, single buffered']
    %31 = vsyncpa [#allocation4], 0
    %32 = vsyncpa [#allocation6], 0
    loop: start=0, step=1, limit=4
    $region2: #{deberta_forward.1} parent=1 // loop_pre_header
      _
    $region3: #{deberta_forward.1} parent=1 // loop_header
      %s34 = sphi 0, %s38
      %p35 = scmp.ge.s32.totalorder %s34, 4
      %s42 = sphi 0, %s42
      %s44 = sphi 0, %s42
      %s45 = sphi 0, %s44
      %s59 = sphi 0, %s45
      %s63 = sphi 0, %s63
      %s65 = sphi 0, %s63
      %s66 = sphi 0, %s65
      %s80 = sphi 0, %s66
      %s84 = sphi 0, %s84
      %s86 = sphi 0, %s84
      %s87 = sphi 0, %s86
      %s101 = sphi 0, %s87
      %s105 = sphi 0, %s105
      %s107 = sphi 0, %s105
      %s108 = sphi 0, %s107
      %s122 = sphi 0, %s108
      %s128 = sphi 0, %s130
      %s131 = sphi 0, %s128
      %s132 = sphi 0, %s131
      %s148 = sphi 0, %s132
      %s154 = sphi 0, %s156
      %s157 = sphi 0, %s154
      %s158 = sphi 0, %s157
      %s174 = sphi 0, %s158
      %s180 = sphi 0, %s182
      %s183 = sphi 0, %s180
      %s184 = sphi 0, %s183
      %s200 = sphi 0, %s184
      %s206 = sphi 0, %s208
      %s209 = sphi 0, %s206
      %s210 = sphi 0, %s209
      %s226 = sphi 0, %s210
      %s232 = sphi 0, %s234
      %s235 = sphi 0, %s232
      %s236 = sphi 0, %s235
      %s252 = sphi 0, %s236
      %s258 = sphi 0, %s260
      %s261 = sphi 0, %s258
      %s262 = sphi 0, %s261
      %s278 = sphi 0, %s262
      %s284 = sphi 0, %s286
      %s287 = sphi 0, %s284
      %s288 = sphi 0, %s287
      %s304 = sphi 0, %s288
      %s310 = sphi 0, %s312
      %s313 = sphi 0, %s310
      %s314 = sphi 0, %s313
      %s330 = sphi 0, %s314
      %s336 = sphi 0, %s338
      %s339 = sphi 0, %s336
      %s340 = sphi 0, %s339
      %s356 = sphi 0, %s340
      %s362 = sphi 0, %s364
      %s365 = sphi 0, %s362
      %s366 = sphi 0, %s365
      %s382 = sphi 0, %s366
      %s388 = sphi 0, %s390
      %s391 = sphi 0, %s388
      %s392 = sphi 0, %s391
      %s408 = sphi 0, %s392
      %s414 = sphi 0, %s416
      %s417 = sphi 0, %s414
      %s418 = sphi 0, %s417
      %s434 = sphi 0, %s418
      %s440 = sphi 0, %s442
      %s443 = sphi 0, %s440
      %s444 = sphi 0, %s443
      %s460 = sphi 0, %s444
      %s466 = sphi 0, %s468
      %s469 = sphi 0, %s466
      %s470 = sphi 0, %s469
      %s486 = sphi 0, %s470
      %s492 = sphi 0, %s494
      %s495 = sphi 0, %s492
      %s496 = sphi 0, %s495
      %s512 = sphi 0, %s496
      %s518 = sphi 0, %s520
      %s521 = sphi 0, %s518
      %s522 = sphi 0, %s521
      %s538 = sphi 0, %s522
      %s542 = sphi 0, %s542
      %s544 = sphi 0, %s542
      %s545 = sphi 0, %s544
      %s559 = sphi 0, %s545
      %s563 = sphi 0, %s563
      %s565 = sphi 0, %s563
      %s566 = sphi 0, %s565
      %s580 = sphi 0, %s566
      %s584 = sphi 0, %s584
      %s586 = sphi 0, %s584
      %s587 = sphi 0, %s586
      %s601 = sphi 0, %s587
      %s605 = sphi 0, %s605
      %s607 = sphi 0, %s605
      %s608 = sphi 0, %s607
      %s622 = sphi 0, %s608
      %s626 = sphi 0, %s626
      %s628 = sphi 0, %s626
      %s629 = sphi 0, %s628
      %s643 = sphi 0, %s629
      %s647 = sphi 0, %s647
      %s649 = sphi 0, %s647
      %s650 = sphi 0, %s649
      %s664 = sphi 0, %s650
    $region4: #{deberta_forward.1} parent=1 // loop_header_branch
      %37 = sbr.rel (%p35) target = $region8
    $region5: #{deberta_forward.1} parent=1 // loop_body
      %s39 = ssub.s32 %s34, 1
      %s40 = ssub.s32 %s34, 2
      %s41 = sadd.s32 %s34, 1
      %s43 = sadd.s32 %s42, 1
      %p46 = scmp.eq.s32.totalorder %s34, 1
      %p47 = scmp.ne.s32.totalorder %s42, %s44
      %p48 = scmp.eq.s32.totalorder %s34, 0
      %p49 = por %p47, %p48
      %p50 = scmp.ne.s32.totalorder %s42, %s44
      %p51 = scmp.eq.s32.totalorder %s39, 1
      %p52 = por %p50, %p51
      %p53 = scmp.ne.s32.totalorder %s44, %s45
      %p54 = scmp.eq.s32.totalorder %s39, 0
      %p55 = por %p53, %p54
      %p56 = scmp.ne.s32.totalorder %s44, %s45
      %p57 = scmp.eq.s32.totalorder %s40, 1
      %p58 = por %p56, %p57
      %p60 = scmp.ne.s32.totalorder %s45, %s59
      %p61 = scmp.eq.s32.totalorder %s40, 0
      %p62 = por %p60, %p61
      %s64 = sadd.s32 %s63, 1
      %p67 = scmp.eq.s32.totalorder %s34, 1
      %p68 = scmp.ne.s32.totalorder %s63, %s65
      %p69 = scmp.eq.s32.totalorder %s34, 0
      %p70 = por %p68, %p69
      %p71 = scmp.ne.s32.totalorder %s63, %s65
      %p72 = scmp.eq.s32.totalorder %s39, 1
      %p73 = por %p71, %p72
      %p74 = scmp.ne.s32.totalorder %s65, %s66
      %p75 = scmp.eq.s32.totalorder %s39, 0
      %p76 = por %p74, %p75
      %p77 = scmp.ne.s32.totalorder %s65, %s66
      %p78 = scmp.eq.s32.totalorder %s40, 1
      %p79 = por %p77, %p78
      %p81 = scmp.ne.s32.totalorder %s66, %s80
      %p82 = scmp.eq.s32.totalorder %s40, 0
      %p83 = por %p81, %p82
      %s85 = sadd.s32 %s84, 1
      %p88 = scmp.eq.s32.totalorder %s34, 1
      %p89 = scmp.ne.s32.totalorder %s84, %s86
      %p90 = scmp.eq.s32.totalorder %s34, 0
      %p91 = por %p89, %p90
      %p92 = scmp.ne.s32.totalorder %s84, %s86
      %p93 = scmp.eq.s32.totalorder %s39, 1
      %p94 = por %p92, %p93
      %p95 = scmp.ne.s32.totalorder %s86, %s87
      %p96 = scmp.eq.s32.totalorder %s39, 0
      %p97 = por %p95, %p96
      %p98 = scmp.ne.s32.totalorder %s86, %s87
      %p99 = scmp.eq.s32.totalorder %s40, 1
      %p100 = por %p98, %p99
      %p102 = scmp.ne.s32.totalorder %s87, %s101
      %p103 = scmp.eq.s32.totalorder %s40, 0
      %p104 = por %p102, %p103
      %s106 = sadd.s32 %s105, 1
      %p109 = scmp.eq.s32.totalorder %s34, 1
      %p110 = scmp.ne.s32.totalorder %s105, %s107
      %p111 = scmp.eq.s32.totalorder %s34, 0
      %p112 = por %p110, %p111
      %p113 = scmp.ne.s32.totalorder %s105, %s107
      %p114 = scmp.eq.s32.totalorder %s39, 1
      %p115 = por %p113, %p114
      %p116 = scmp.ne.s32.totalorder %s107, %s108
      %p117 = scmp.eq.s32.totalorder %s39, 0
      %p118 = por %p116, %p117
      %p119 = scmp.ne.s32.totalorder %s107, %s108
      %p120 = scmp.eq.s32.totalorder %s40, 1
      %p121 = por %p119, %p120
      %p123 = scmp.ne.s32.totalorder %s108, %s122
      %p124 = scmp.eq.s32.totalorder %s40, 0
      %p125 = por %p123, %p124
      %s126 = ssub.s32 %s34, %s41
      %p127 = scmp.eq.s32.totalorder %s126, 0
      %s129 = sadd.s32 %s128, 1
      %s130 = scalar_select %p127, %s128, %s129
      %p133 = pneg %p127
      %p134 = scmp.eq.s32.totalorder %s34, 1
      %p135 = por %p133, %p134
      %p136 = scmp.ne.s32.totalorder %s128, %s131
      %p137 = scmp.eq.s32.totalorder %s34, 0
      %p138 = por %p136, %p137
      %p139 = scmp.ne.s32.totalorder %s128, %s131
      %p140 = scmp.eq.s32.totalorder %s39, 1
      %p141 = por %p139, %p140
      %p142 = scmp.ne.s32.totalorder %s131, %s132
      %p143 = scmp.eq.s32.totalorder %s39, 0
      %p144 = por %p142, %p143
      %p145 = scmp.ne.s32.totalorder %s131, %s132
      %p146 = scmp.eq.s32.totalorder %s40, 1
      %p147 = por %p145, %p146
      %p149 = scmp.ne.s32.totalorder %s132, %s148
      %p150 = scmp.eq.s32.totalorder %s40, 0
      %p151 = por %p149, %p150
      %s152 = ssub.s32 %s34, %s41
      %p153 = scmp.eq.s32.totalorder %s152, 0
      %s155 = sadd.s32 %s154, 1
      %s156 = scalar_select %p153, %s154, %s155
      %p159 = pneg %p153
      %p160 = scmp.eq.s32.totalorder %s34, 1
      %p161 = por %p159, %p160
      %p162 = scmp.ne.s32.totalorder %s154, %s157
      %p163 = scmp.eq.s32.totalorder %s34, 0
      %p164 = por %p162, %p163
      %p165 = scmp.ne.s32.totalorder %s154, %s157
      %p166 = scmp.eq.s32.totalorder %s39, 1
      %p167 = por %p165, %p166
      %p168 = scmp.ne.s32.totalorder %s157, %s158
      %p169 = scmp.eq.s32.totalorder %s39, 0
      %p170 = por %p168, %p169
      %p171 = scmp.ne.s32.totalorder %s157, %s158
      %p172 = scmp.eq.s32.totalorder %s40, 1
      %p173 = por %p171, %p172
      %p175 = scmp.ne.s32.totalorder %s158, %s174
      %p176 = scmp.eq.s32.totalorder %s40, 0
      %p177 = por %p175, %p176
      %s178 = ssub.s32 %s34, %s41
      %p179 = scmp.eq.s32.totalorder %s178, 0
      %s181 = sadd.s32 %s180, 1
      %s182 = scalar_select %p179, %s180, %s181
      %p185 = pneg %p179
      %p186 = scmp.eq.s32.totalorder %s34, 1
      %p187 = por %p185, %p186
      %p188 = scmp.ne.s32.totalorder %s180, %s183
      %p189 = scmp.eq.s32.totalorder %s34, 0
      %p190 = por %p188, %p189
      %p191 = scmp.ne.s32.totalorder %s180, %s183
      %p192 = scmp.eq.s32.totalorder %s39, 1
      %p193 = por %p191, %p192
      %p194 = scmp.ne.s32.totalorder %s183, %s184
      %p195 = scmp.eq.s32.totalorder %s39, 0
      %p196 = por %p194, %p195
      %p197 = scmp.ne.s32.totalorder %s183, %s184
      %p198 = scmp.eq.s32.totalorder %s40, 1
      %p199 = por %p197, %p198
      %p201 = scmp.ne.s32.totalorder %s184, %s200
      %p202 = scmp.eq.s32.totalorder %s40, 0
      %p203 = por %p201, %p202
      %s204 = ssub.s32 %s34, %s41
      %p205 = scmp.eq.s32.totalorder %s204, 0
      %s207 = sadd.s32 %s206, 1
      %s208 = scalar_select %p205, %s206, %s207
      %p211 = pneg %p205
      %p212 = scmp.eq.s32.totalorder %s34, 1
      %p213 = por %p211, %p212
      %p214 = scmp.ne.s32.totalorder %s206, %s209
      %p215 = scmp.eq.s32.totalorder %s34, 0
      %p216 = por %p214, %p215
      %p217 = scmp.ne.s32.totalorder %s206, %s209
      %p218 = scmp.eq.s32.totalorder %s39, 1
      %p219 = por %p217, %p218
      %p220 = scmp.ne.s32.totalorder %s209, %s210
      %p221 = scmp.eq.s32.totalorder %s39, 0
      %p222 = por %p220, %p221
      %p223 = scmp.ne.s32.totalorder %s209, %s210
      %p224 = scmp.eq.s32.totalorder %s40, 1
      %p225 = por %p223, %p224
      %p227 = scmp.ne.s32.totalorder %s210, %s226
      %p228 = scmp.eq.s32.totalorder %s40, 0
      %p229 = por %p227, %p228
      %s230 = ssub.s32 %s34, %s41
      %p231 = scmp.eq.s32.totalorder %s230, 0
      %s233 = sadd.s32 %s232, 1
      %s234 = scalar_select %p231, %s232, %s233
      %p237 = pneg %p231
      %p238 = scmp.eq.s32.totalorder %s34, 1
      %p239 = por %p237, %p238
      %p240 = scmp.ne.s32.totalorder %s232, %s235
      %p241 = scmp.eq.s32.totalorder %s34, 0
      %p242 = por %p240, %p241
      %p243 = scmp.ne.s32.totalorder %s232, %s235
      %p244 = scmp.eq.s32.totalorder %s39, 1
      %p245 = por %p243, %p244
      %p246 = scmp.ne.s32.totalorder %s235, %s236
      %p247 = scmp.eq.s32.totalorder %s39, 0
      %p248 = por %p246, %p247
      %p249 = scmp.ne.s32.totalorder %s235, %s236
      %p250 = scmp.eq.s32.totalorder %s40, 1
      %p251 = por %p249, %p250
      %p253 = scmp.ne.s32.totalorder %s236, %s252
      %p254 = scmp.eq.s32.totalorder %s40, 0
      %p255 = por %p253, %p254
      %s256 = ssub.s32 %s34, %s41
      %p257 = scmp.eq.s32.totalorder %s256, 0
      %s259 = sadd.s32 %s258, 1
      %s260 = scalar_select %p257, %s258, %s259
      %p263 = pneg %p257
      %p264 = scmp.eq.s32.totalorder %s34, 1
      %p265 = por %p263, %p264
      %p266 = scmp.ne.s32.totalorder %s258, %s261
      %p267 = scmp.eq.s32.totalorder %s34, 0
      %p268 = por %p266, %p267
      %p269 = scmp.ne.s32.totalorder %s258, %s261
      %p270 = scmp.eq.s32.totalorder %s39, 1
      %p271 = por %p269, %p270
      %p272 = scmp.ne.s32.totalorder %s261, %s262
      %p273 = scmp.eq.s32.totalorder %s39, 0
      %p274 = por %p272, %p273
      %p275 = scmp.ne.s32.totalorder %s261, %s262
      %p276 = scmp.eq.s32.totalorder %s40, 1
      %p277 = por %p275, %p276
      %p279 = scmp.ne.s32.totalorder %s262, %s278
      %p280 = scmp.eq.s32.totalorder %s40, 0
      %p281 = por %p279, %p280
      %s282 = ssub.s32 %s34, %s41
      %p283 = scmp.eq.s32.totalorder %s282, 0
      %s285 = sadd.s32 %s284, 1
      %s286 = scalar_select %p283, %s284, %s285
      %p289 = pneg %p283
      %p290 = scmp.eq.s32.totalorder %s34, 1
      %p291 = por %p289, %p290
      %p292 = scmp.ne.s32.totalorder %s284, %s287
      %p293 = scmp.eq.s32.totalorder %s34, 0
      %p294 = por %p292, %p293
      %p295 = scmp.ne.s32.totalorder %s284, %s287
      %p296 = scmp.eq.s32.totalorder %s39, 1
      %p297 = por %p295, %p296
      %p298 = scmp.ne.s32.totalorder %s287, %s288
      %p299 = scmp.eq.s32.totalorder %s39, 0
      %p300 = por %p298, %p299
      %p301 = scmp.ne.s32.totalorder %s287, %s288
      %p302 = scmp.eq.s32.totalorder %s40, 1
      %p303 = por %p301, %p302
      %p305 = scmp.ne.s32.totalorder %s288, %s304
      %p306 = scmp.eq.s32.totalorder %s40, 0
      %p307 = por %p305, %p306
      %s308 = ssub.s32 %s34, %s41
      %p309 = scmp.eq.s32.totalorder %s308, 0
      %s311 = sadd.s32 %s310, 1
      %s312 = scalar_select %p309, %s310, %s311
      %p315 = pneg %p309
      %p316 = scmp.eq.s32.totalorder %s34, 1
      %p317 = por %p315, %p316
      %p318 = scmp.ne.s32.totalorder %s310, %s313
      %p319 = scmp.eq.s32.totalorder %s34, 0
      %p320 = por %p318, %p319
      %p321 = scmp.ne.s32.totalorder %s310, %s313
      %p322 = scmp.eq.s32.totalorder %s39, 1
      %p323 = por %p321, %p322
      %p324 = scmp.ne.s32.totalorder %s313, %s314
      %p325 = scmp.eq.s32.totalorder %s39, 0
      %p326 = por %p324, %p325
      %p327 = scmp.ne.s32.totalorder %s313, %s314
      %p328 = scmp.eq.s32.totalorder %s40, 1
      %p329 = por %p327, %p328
      %p331 = scmp.ne.s32.totalorder %s314, %s330
      %p332 = scmp.eq.s32.totalorder %s40, 0
      %p333 = por %p331, %p332
      %s334 = ssub.s32 %s34, %s41
      %p335 = scmp.eq.s32.totalorder %s334, 0
      %s337 = sadd.s32 %s336, 1
      %s338 = scalar_select %p335, %s336, %s337
      %p341 = pneg %p335
      %p342 = scmp.eq.s32.totalorder %s34, 1
      %p343 = por %p341, %p342
      %p344 = scmp.ne.s32.totalorder %s336, %s339
      %p345 = scmp.eq.s32.totalorder %s34, 0
      %p346 = por %p344, %p345
      %p347 = scmp.ne.s32.totalorder %s336, %s339
      %p348 = scmp.eq.s32.totalorder %s39, 1
      %p349 = por %p347, %p348
      %p350 = scmp.ne.s32.totalorder %s339, %s340
      %p351 = scmp.eq.s32.totalorder %s39, 0
      %p352 = por %p350, %p351
      %p353 = scmp.ne.s32.totalorder %s339, %s340
      %p354 = scmp.eq.s32.totalorder %s40, 1
      %p355 = por %p353, %p354
      %p357 = scmp.ne.s32.totalorder %s340, %s356
      %p358 = scmp.eq.s32.totalorder %s40, 0
      %p359 = por %p357, %p358
      %s360 = ssub.s32 %s34, %s41
      %p361 = scmp.eq.s32.totalorder %s360, 0
      %s363 = sadd.s32 %s362, 1
      %s364 = scalar_select %p361, %s362, %s363
      %p367 = pneg %p361
      %p368 = scmp.eq.s32.totalorder %s34, 1
      %p369 = por %p367, %p368
      %p370 = scmp.ne.s32.totalorder %s362, %s365
      %p371 = scmp.eq.s32.totalorder %s34, 0
      %p372 = por %p370, %p371
      %p373 = scmp.ne.s32.totalorder %s362, %s365
      %p374 = scmp.eq.s32.totalorder %s39, 1
      %p375 = por %p373, %p374
      %p376 = scmp.ne.s32.totalorder %s365, %s366
      %p377 = scmp.eq.s32.totalorder %s39, 0
      %p378 = por %p376, %p377
      %p379 = scmp.ne.s32.totalorder %s365, %s366
      %p380 = scmp.eq.s32.totalorder %s40, 1
      %p381 = por %p379, %p380
      %p383 = scmp.ne.s32.totalorder %s366, %s382
      %p384 = scmp.eq.s32.totalorder %s40, 0
      %p385 = por %p383, %p384
      %s386 = ssub.s32 %s34, %s41
      %p387 = scmp.eq.s32.totalorder %s386, 0
      %s389 = sadd.s32 %s388, 1
      %s390 = scalar_select %p387, %s388, %s389
      %p393 = pneg %p387
      %p394 = scmp.eq.s32.totalorder %s34, 1
      %p395 = por %p393, %p394
      %p396 = scmp.ne.s32.totalorder %s388, %s391
      %p397 = scmp.eq.s32.totalorder %s34, 0
      %p398 = por %p396, %p397
      %p399 = scmp.ne.s32.totalorder %s388, %s391
      %p400 = scmp.eq.s32.totalorder %s39, 1
      %p401 = por %p399, %p400
      %p402 = scmp.ne.s32.totalorder %s391, %s392
      %p403 = scmp.eq.s32.totalorder %s39, 0
      %p404 = por %p402, %p403
      %p405 = scmp.ne.s32.totalorder %s391, %s392
      %p406 = scmp.eq.s32.totalorder %s40, 1
      %p407 = por %p405, %p406
      %p409 = scmp.ne.s32.totalorder %s392, %s408
      %p410 = scmp.eq.s32.totalorder %s40, 0
      %p411 = por %p409, %p410
      %s412 = ssub.s32 %s34, %s41
      %p413 = scmp.eq.s32.totalorder %s412, 0
      %s415 = sadd.s32 %s414, 1
      %s416 = scalar_select %p413, %s414, %s415
      %p419 = pneg %p413
      %p420 = scmp.eq.s32.totalorder %s34, 1
      %p421 = por %p419, %p420
      %p422 = scmp.ne.s32.totalorder %s414, %s417
      %p423 = scmp.eq.s32.totalorder %s34, 0
      %p424 = por %p422, %p423
      %p425 = scmp.ne.s32.totalorder %s414, %s417
      %p426 = scmp.eq.s32.totalorder %s39, 1
      %p427 = por %p425, %p426
      %p428 = scmp.ne.s32.totalorder %s417, %s418
      %p429 = scmp.eq.s32.totalorder %s39, 0
      %p430 = por %p428, %p429
      %p431 = scmp.ne.s32.totalorder %s417, %s418
      %p432 = scmp.eq.s32.totalorder %s40, 1
      %p433 = por %p431, %p432
      %p435 = scmp.ne.s32.totalorder %s418, %s434
      %p436 = scmp.eq.s32.totalorder %s40, 0
      %p437 = por %p435, %p436
      %s438 = ssub.s32 %s34, %s41
      %p439 = scmp.eq.s32.totalorder %s438, 0
      %s441 = sadd.s32 %s440, 1
      %s442 = scalar_select %p439, %s440, %s441
      %p445 = pneg %p439
      %p446 = scmp.eq.s32.totalorder %s34, 1
      %p447 = por %p445, %p446
      %p448 = scmp.ne.s32.totalorder %s440, %s443
      %p449 = scmp.eq.s32.totalorder %s34, 0
      %p450 = por %p448, %p449
      %p451 = scmp.ne.s32.totalorder %s440, %s443
      %p452 = scmp.eq.s32.totalorder %s39, 1
      %p453 = por %p451, %p452
      %p454 = scmp.ne.s32.totalorder %s443, %s444
      %p455 = scmp.eq.s32.totalorder %s39, 0
      %p456 = por %p454, %p455
      %p457 = scmp.ne.s32.totalorder %s443, %s444
      %p458 = scmp.eq.s32.totalorder %s40, 1
      %p459 = por %p457, %p458
      %p461 = scmp.ne.s32.totalorder %s444, %s460
      %p462 = scmp.eq.s32.totalorder %s40, 0
      %p463 = por %p461, %p462
      %s464 = ssub.s32 %s34, %s41
      %p465 = scmp.eq.s32.totalorder %s464, 0
      %s467 = sadd.s32 %s466, 1
      %s468 = scalar_select %p465, %s466, %s467
      %p471 = pneg %p465
      %p472 = scmp.eq.s32.totalorder %s34, 1
      %p473 = por %p471, %p472
      %p474 = scmp.ne.s32.totalorder %s466, %s469
      %p475 = scmp.eq.s32.totalorder %s34, 0
      %p476 = por %p474, %p475
      %p477 = scmp.ne.s32.totalorder %s466, %s469
      %p478 = scmp.eq.s32.totalorder %s39, 1
      %p479 = por %p477, %p478
      %p480 = scmp.ne.s32.totalorder %s469, %s470
      %p481 = scmp.eq.s32.totalorder %s39, 0
      %p482 = por %p480, %p481
      %p483 = scmp.ne.s32.totalorder %s469, %s470
      %p484 = scmp.eq.s32.totalorder %s40, 1
      %p485 = por %p483, %p484
      %p487 = scmp.ne.s32.totalorder %s470, %s486
      %p488 = scmp.eq.s32.totalorder %s40, 0
      %p489 = por %p487, %p488
      %s490 = ssub.s32 %s34, %s41
      %p491 = scmp.eq.s32.totalorder %s490, 0
      %s493 = sadd.s32 %s492, 1
      %s494 = scalar_select %p491, %s492, %s493
      %p497 = pneg %p491
      %p498 = scmp.eq.s32.totalorder %s34, 1
      %p499 = por %p497, %p498
      %p500 = scmp.ne.s32.totalorder %s492, %s495
      %p501 = scmp.eq.s32.totalorder %s34, 0
      %p502 = por %p500, %p501
      %p503 = scmp.ne.s32.totalorder %s492, %s495
      %p504 = scmp.eq.s32.totalorder %s39, 1
      %p505 = por %p503, %p504
      %p506 = scmp.ne.s32.totalorder %s495, %s496
      %p507 = scmp.eq.s32.totalorder %s39, 0
      %p508 = por %p506, %p507
      %p509 = scmp.ne.s32.totalorder %s495, %s496
      %p510 = scmp.eq.s32.totalorder %s40, 1
      %p511 = por %p509, %p510
      %p513 = scmp.ne.s32.totalorder %s496, %s512
      %p514 = scmp.eq.s32.totalorder %s40, 0
      %p515 = por %p513, %p514
      %s516 = ssub.s32 %s34, %s41
      %p517 = scmp.eq.s32.totalorder %s516, 0
      %s519 = sadd.s32 %s518, 1
      %s520 = scalar_select %p517, %s518, %s519
      %p523 = pneg %p517
      %p524 = scmp.eq.s32.totalorder %s34, 1
      %p525 = por %p523, %p524
      %p526 = scmp.ne.s32.totalorder %s518, %s521
      %p527 = scmp.eq.s32.totalorder %s34, 0
      %p528 = por %p526, %p527
      %p529 = scmp.ne.s32.totalorder %s518, %s521
      %p530 = scmp.eq.s32.totalorder %s39, 1
      %p531 = por %p529, %p530
      %p532 = scmp.ne.s32.totalorder %s521, %s522
      %p533 = scmp.eq.s32.totalorder %s39, 0
      %p534 = por %p532, %p533
      %p535 = scmp.ne.s32.totalorder %s521, %s522
      %p536 = scmp.eq.s32.totalorder %s40, 1
      %p537 = por %p535, %p536
      %p539 = scmp.ne.s32.totalorder %s522, %s538
      %p540 = scmp.eq.s32.totalorder %s40, 0
      %p541 = por %p539, %p540
      %s543 = sadd.s32 %s542, 1
      %p546 = scmp.eq.s32.totalorder %s34, 1
      %p547 = scmp.ne.s32.totalorder %s542, %s544
      %p548 = scmp.eq.s32.totalorder %s34, 0
      %p549 = por %p547, %p548
      %p550 = scmp.ne.s32.totalorder %s542, %s544
      %p551 = scmp.eq.s32.totalorder %s39, 1
      %p552 = por %p550, %p551
      %p553 = scmp.ne.s32.totalorder %s544, %s545
      %p554 = scmp.eq.s32.totalorder %s39, 0
      %p555 = por %p553, %p554
      %p556 = scmp.ne.s32.totalorder %s544, %s545
      %p557 = scmp.eq.s32.totalorder %s40, 1
      %p558 = por %p556, %p557
      %p560 = scmp.ne.s32.totalorder %s545, %s559
      %p561 = scmp.eq.s32.totalorder %s40, 0
      %p562 = por %p560, %p561
      %s564 = sadd.s32 %s563, 1
      %p567 = scmp.eq.s32.totalorder %s34, 1
      %p568 = scmp.ne.s32.totalorder %s563, %s565
      %p569 = scmp.eq.s32.totalorder %s34, 0
      %p570 = por %p568, %p569
      %p571 = scmp.ne.s32.totalorder %s563, %s565
      %p572 = scmp.eq.s32.totalorder %s39, 1
      %p573 = por %p571, %p572
      %p574 = scmp.ne.s32.totalorder %s565, %s566
      %p575 = scmp.eq.s32.totalorder %s39, 0
      %p576 = por %p574, %p575
      %p577 = scmp.ne.s32.totalorder %s565, %s566
      %p578 = scmp.eq.s32.totalorder %s40, 1
      %p579 = por %p577, %p578
      %p581 = scmp.ne.s32.totalorder %s566, %s580
      %p582 = scmp.eq.s32.totalorder %s40, 0
      %p583 = por %p581, %p582
      %s585 = sadd.s32 %s584, 1
      %p588 = scmp.eq.s32.totalorder %s34, 1
      %p589 = scmp.ne.s32.totalorder %s584, %s586
      %p590 = scmp.eq.s32.totalorder %s34, 0
      %p591 = por %p589, %p590
      %p592 = scmp.ne.s32.totalorder %s584, %s586
      %p593 = scmp.eq.s32.totalorder %s39, 1
      %p594 = por %p592, %p593
      %p595 = scmp.ne.s32.totalorder %s586, %s587
      %p596 = scmp.eq.s32.totalorder %s39, 0
      %p597 = por %p595, %p596
      %p598 = scmp.ne.s32.totalorder %s586, %s587
      %p599 = scmp.eq.s32.totalorder %s40, 1
      %p600 = por %p598, %p599
      %p602 = scmp.ne.s32.totalorder %s587, %s601
      %p603 = scmp.eq.s32.totalorder %s40, 0
      %p604 = por %p602, %p603
      %s606 = sadd.s32 %s605, 1
      %p609 = scmp.eq.s32.totalorder %s34, 1
      %p610 = scmp.ne.s32.totalorder %s605, %s607
      %p611 = scmp.eq.s32.totalorder %s34, 0
      %p612 = por %p610, %p611
      %p613 = scmp.ne.s32.totalorder %s605, %s607
      %p614 = scmp.eq.s32.totalorder %s39, 1
      %p615 = por %p613, %p614
      %p616 = scmp.ne.s32.totalorder %s607, %s608
      %p617 = scmp.eq.s32.totalorder %s39, 0
      %p618 = por %p616, %p617
      %p619 = scmp.ne.s32.totalorder %s607, %s608
      %p620 = scmp.eq.s32.totalorder %s40, 1
      %p621 = por %p619, %p620
      %p623 = scmp.ne.s32.totalorder %s608, %s622
      %p624 = scmp.eq.s32.totalorder %s40, 0
      %p625 = por %p623, %p624
      %s627 = sadd.s32 %s626, 1
      %p630 = scmp.eq.s32.totalorder %s34, 1
      %p631 = scmp.ne.s32.totalorder %s626, %s628
      %p632 = scmp.eq.s32.totalorder %s34, 0
      %p633 = por %p631, %p632
      %p634 = scmp.ne.s32.totalorder %s626, %s628
      %p635 = scmp.eq.s32.totalorder %s39, 1
      %p636 = por %p634, %p635
      %p637 = scmp.ne.s32.totalorder %s628, %s629
      %p638 = scmp.eq.s32.totalorder %s39, 0
      %p639 = por %p637, %p638
      %p640 = scmp.ne.s32.totalorder %s628, %s629
      %p641 = scmp.eq.s32.totalorder %s40, 1
      %p642 = por %p640, %p641
      %p644 = scmp.ne.s32.totalorder %s629, %s643
      %p645 = scmp.eq.s32.totalorder %s40, 0
      %p646 = por %p644, %p645
      %s648 = sadd.s32 %s647, 1
      %p651 = scmp.eq.s32.totalorder %s34, 1
      %p652 = scmp.ne.s32.totalorder %s647, %s649
      %p653 = scmp.eq.s32.totalorder %s34, 0
      %p654 = por %p652, %p653
      %p655 = scmp.ne.s32.totalorder %s647, %s649
      %p656 = scmp.eq.s32.totalorder %s39, 1
      %p657 = por %p655, %p656
      %p658 = scmp.ne.s32.totalorder %s649, %s650
      %p659 = scmp.eq.s32.totalorder %s39, 0
      %p660 = por %p658, %p659
      %p661 = scmp.ne.s32.totalorder %s649, %s650
      %p662 = scmp.eq.s32.totalorder %s40, 1
      %p663 = por %p661, %p662
      %p665 = scmp.ne.s32.totalorder %s650, %s664
      %p666 = scmp.eq.s32.totalorder %s40, 0
      %p667 = por %p665, %p666
      %p668 = scmp.le.s32.totalorder 1, %s34
      %p669 = scmp.lt.s32.totalorder %s34, 3
      %p670 = pnand %p668, %p669
      %p671 = pneg %p670
      // Predicated region
      $region9: #{deberta_forward.1} parent=5 // pred_check
        _
      $region10: #{deberta_forward.1} parent=5 // pred_check_branch
        %673 = sbr.rel (%p670) target = $region12
      $region11: #{deberta_forward.1} parent=5 // pred_region
        %s674 = ssub.s32 %s34, 1
        // Predicated region
        $region13: #{deberta_forward.1} parent=11 // pred_check
          %p675 = pneg %p55
        $region14: #{deberta_forward.1} parent=11 // pred_check_branch
          %677 = sbr.rel (%p675) target = $region16
        $region15: #{deberta_forward.1} parent=11 // pred_region
          _
        $region16: #{deberta_forward.1} parent=11 // pred_fallthru
          _
        // Predicated region
        $region17: #{deberta_forward.1} parent=11 // pred_check
          %p678 = pneg %p76
        $region18: #{deberta_forward.1} parent=11 // pred_check_branch
          %680 = sbr.rel (%p678) target = $region20
        $region19: #{deberta_forward.1} parent=11 // pred_region
          _
        $region20: #{deberta_forward.1} parent=11 // pred_fallthru
          _
        // Predicated region
        $region21: #{deberta_forward.1} parent=11 // pred_check
          %p681 = pneg %p97
        $region22: #{deberta_forward.1} parent=11 // pred_check_branch
          %683 = sbr.rel (%p681) target = $region24
        $region23: #{deberta_forward.1} parent=11 // pred_region
          _
        $region24: #{deberta_forward.1} parent=11 // pred_fallthru
          _
        // Predicated region
        $region25: #{deberta_forward.1} parent=11 // pred_check
          %p684 = pneg %p118
        $region26: #{deberta_forward.1} parent=11 // pred_check_branch
          %686 = sbr.rel (%p684) target = $region28
        $region27: #{deberta_forward.1} parent=11 // pred_region
          _
        $region28: #{deberta_forward.1} parent=11 // pred_fallthru
          _
        // Predicated region
        $region29: #{deberta_forward.1} parent=11 // pred_check
          %p687 = pneg %p555
        $region30: #{deberta_forward.1} parent=11 // pred_check_branch
          %689 = sbr.rel (%p687) target = $region32
        $region31: #{deberta_forward.1} parent=11 // pred_region
          _
        $region32: #{deberta_forward.1} parent=11 // pred_fallthru
          _
        // Predicated region
        $region33: #{deberta_forward.1} parent=11 // pred_check
          %p690 = pneg %p576
        $region34: #{deberta_forward.1} parent=11 // pred_check_branch
          %692 = sbr.rel (%p690) target = $region36
        $region35: #{deberta_forward.1} parent=11 // pred_region
          _
        $region36: #{deberta_forward.1} parent=11 // pred_fallthru
          _
        // Predicated region
        $region37: #{deberta_forward.1} parent=11 // pred_check
          %p693 = pneg %p597
        $region38: #{deberta_forward.1} parent=11 // pred_check_branch
          %695 = sbr.rel (%p693) target = $region40
        $region39: #{deberta_forward.1} parent=11 // pred_region
          _
        $region40: #{deberta_forward.1} parent=11 // pred_fallthru
          _
      $region12: #{deberta_forward.1} parent=5 // pred_fallthru
        _
      %p696 = scmp.lt.s32.totalorder %s34, 2
      // Predicated region
      $region41: #{deberta_forward.1} parent=5 // pred_check
        %p697 = pneg %p696
      $region42: #{deberta_forward.1} parent=5 // pred_check_branch
        %699 = sbr.rel (%p697) target = $region44
      $region43: #{deberta_forward.1} parent=5 // pred_region
        // Predicated region
        $region45: #{deberta_forward.1} parent=43 // pred_check
          %p700 = pneg %p138
        $region46: #{deberta_forward.1} parent=43 // pred_check_branch
          %702 = sbr.rel (%p700) target = $region48
        $region47: #{deberta_forward.1} parent=43 // pred_region
          %p703 = scmp.lt.s32.totalorder %s34, 1
          %s704 = scalar_select %p703, %s34, 1
          %s705 = smul.addr %s704, 16
          %s706 = smul.addr %s705, 4
          %s707 = scalar_lea.vmem %s4, %s706
        $region48: #{deberta_forward.1} parent=43 // pred_fallthru
          _
        // Predicated region
        $region49: #{deberta_forward.1} parent=43 // pred_check
          %p708 = pneg %p164
        $region50: #{deberta_forward.1} parent=43 // pred_check_branch
          %710 = sbr.rel (%p708) target = $region52
        $region51: #{deberta_forward.1} parent=43 // pred_region
          %p711 = scmp.lt.s32.totalorder %s34, 1
          %s712 = scalar_select %p711, %s34, 1
          %s713 = smul.addr %s712, 4
          %s714 = scalar_lea.vmem %s5, %s713
        $region52: #{deberta_forward.1} parent=43 // pred_fallthru
          _
        // Predicated region
        $region53: #{deberta_forward.1} parent=43 // pred_check
          %p715 = pneg %p190
        $region54: #{deberta_forward.1} parent=43 // pred_check_branch
          %717 = sbr.rel (%p715) target = $region56
        $region55: #{deberta_forward.1} parent=43 // pred_region
          %p718 = scmp.lt.s32.totalorder %s34, 1
          %s719 = scalar_select %p718, %s34, 1
          %s720 = smul.addr %s719, 16
          %s721 = smul.addr %s720, 4
          %s722 = scalar_lea.vmem %s6, %s721
        $region56: #{deberta_forward.1} parent=43 // pred_fallthru
          _
        // Predicated region
        $region57: #{deberta_forward.1} parent=43 // pred_check
          %p723 = pneg %p216
        $region58: #{deberta_forward.1} parent=43 // pred_check_branch
          %725 = sbr.rel (%p723) target = $region60
        $region59: #{deberta_forward.1} parent=43 // pred_region
          %p726 = scmp.lt.s32.totalorder %s34, 1
          %s727 = scalar_select %p726, %s34, 1
          %s728 = smul.addr %s727, 4
          %s729 = scalar_lea.vmem %s7, %s728
        $region60: #{deberta_forward.1} parent=43 // pred_fallthru
          _
        // Predicated region
        $region61: #{deberta_forward.1} parent=43 // pred_check
          %p730 = pneg %p242
        $region62: #{deberta_forward.1} parent=43 // pred_check_branch
          %732 = sbr.rel (%p730) target = $region64
        $region63: #{deberta_forward.1} parent=43 // pred_region
          %p733 = scmp.lt.s32.totalorder %s34, 1
          %s734 = scalar_select %p733, %s34, 1
          %s735 = smul.addr %s734, 16
          %s736 = smul.addr %s735, 4
          %s737 = scalar_lea.vmem %s8, %s736
        $region64: #{deberta_forward.1} parent=43 // pred_fallthru
          _
        // Predicated region
        $region65: #{deberta_forward.1} parent=43 // pred_check
          %p738 = pneg %p268
        $region66: #{deberta_forward.1} parent=43 // pred_check_branch
          %740 = sbr.rel (%p738) target = $region68
        $region67: #{deberta_forward.1} parent=43 // pred_region
          %p741 = scmp.lt.s32.totalorder %s34, 1
          %s742 = scalar_select %p741, %s34, 1
          %s743 = smul.addr %s742, 4
          %s744 = scalar_lea.vmem %s9, %s743
        $region68: #{deberta_forward.1} parent=43 // pred_fallthru
          _
        // Predicated region
        $region69: #{deberta_forward.1} parent=43 // pred_check
          %p745 = pneg %p294
        $region70: #{deberta_forward.1} parent=43 // pred_check_branch
          %747 = sbr.rel (%p745) target = $region72
        $region71: #{deberta_forward.1} parent=43 // pred_region
          %p748 = scmp.lt.s32.totalorder %s34, 1
          %s749 = scalar_select %p748, %s34, 1
          %s750 = smul.addr %s749, 4
          %s751 = smul.addr %s750, 4
          %s752 = scalar_lea.vmem %s10, %s751
        $region72: #{deberta_forward.1} parent=43 // pred_fallthru
          _
        // Predicated region
        $region73: #{deberta_forward.1} parent=43 // pred_check
          %p753 = pneg %p320
        $region74: #{deberta_forward.1} parent=43 // pred_check_branch
          %755 = sbr.rel (%p753) target = $region76
        $region75: #{deberta_forward.1} parent=43 // pred_region
          %p756 = scmp.lt.s32.totalorder %s34, 1
          %s757 = scalar_select %p756, %s34, 1
          %s758 = scalar_lea.vmem %s11, %s757
        $region76: #{deberta_forward.1} parent=43 // pred_fallthru
          _
        // Predicated region
        $region77: #{deberta_forward.1} parent=43 // pred_check
          %p759 = pneg %p346
        $region78: #{deberta_forward.1} parent=43 // pred_check_branch
          %761 = sbr.rel (%p759) target = $region80
        $region79: #{deberta_forward.1} parent=43 // pred_region
          %p762 = scmp.lt.s32.totalorder %s34, 1
          %s763 = scalar_select %p762, %s34, 1
          %s764 = scalar_lea.vmem %s12, %s763
        $region80: #{deberta_forward.1} parent=43 // pred_fallthru
          _
        // Predicated region
        $region81: #{deberta_forward.1} parent=43 // pred_check
          %p765 = pneg %p372
        $region82: #{deberta_forward.1} parent=43 // pred_check_branch
          %767 = sbr.rel (%p765) target = $region84
        $region83: #{deberta_forward.1} parent=43 // pred_region
          %p768 = scmp.lt.s32.totalorder %s34, 1
          %s769 = scalar_select %p768, %s34, 1
          %s770 = scalar_lea.vmem %s13, %s769
        $region84: #{deberta_forward.1} parent=43 // pred_fallthru
          _
        // Predicated region
        $region85: #{deberta_forward.1} parent=43 // pred_check
          %p771 = pneg %p398
        $region86: #{deberta_forward.1} parent=43 // pred_check_branch
          %773 = sbr.rel (%p771) target = $region88
        $region87: #{deberta_forward.1} parent=43 // pred_region
          %p774 = scmp.lt.s32.totalorder %s34, 1
          %s775 = scalar_select %p774, %s34, 1
          %s776 = smul.addr %s775, 4
          %s777 = smul.addr %s776, 4
          %s778 = scalar_lea.vmem %s14, %s777
        $region88: #{deberta_forward.1} parent=43 // pred_fallthru
          _
        // Predicated region
        $region89: #{deberta_forward.1} parent=43 // pred_check
          %p779 = pneg %p424
        $region90: #{deberta_forward.1} parent=43 // pred_check_branch
          %781 = sbr.rel (%p779) target = $region92
        $region91: #{deberta_forward.1} parent=43 // pred_region
          %p782 = scmp.lt.s32.totalorder %s34, 1
          %s783 = scalar_select %p782, %s34, 1
          %s784 = scalar_lea.vmem %s15, %s783
        $region92: #{deberta_forward.1} parent=43 // pred_fallthru
          _
        // Predicated region
        $region93: #{deberta_forward.1} parent=43 // pred_check
          %p785 = pneg %p450
        $region94: #{deberta_forward.1} parent=43 // pred_check_branch
          %787 = sbr.rel (%p785) target = $region96
        $region95: #{deberta_forward.1} parent=43 // pred_region
          %p788 = scmp.lt.s32.totalorder %s34, 1
          %s789 = scalar_select %p788, %s34, 1
          %s790 = smul.addr %s789, 8
          %s791 = smul.addr %s790, 4
          %s792 = scalar_lea.vmem %s16, %s791
        $region96: #{deberta_forward.1} parent=43 // pred_fallthru
          _
        // Predicated region
        $region97: #{deberta_forward.1} parent=43 // pred_check
          %p793 = pneg %p476
        $region98: #{deberta_forward.1} parent=43 // pred_check_branch
          %795 = sbr.rel (%p793) target = $region100
        $region99: #{deberta_forward.1} parent=43 // pred_region
          %p796 = scmp.lt.s32.totalorder %s34, 1
          %s797 = scalar_select %p796, %s34, 1
          %s798 = scalar_lea.vmem %s17, %s797
        $region100: #{deberta_forward.1} parent=43 // pred_fallthru
          _
        // Predicated region
        $region101: #{deberta_forward.1} parent=43 // pred_check
          %p799 = pneg %p502
        $region102: #{deberta_forward.1} parent=43 // pred_check_branch
          %801 = sbr.rel (%p799) target = $region104
        $region103: #{deberta_forward.1} parent=43 // pred_region
          %p802 = scmp.lt.s32.totalorder %s34, 1
          %s803 = scalar_select %p802, %s34, 1
          %s804 = scalar_lea.vmem %s18, %s803
        $region104: #{deberta_forward.1} parent=43 // pred_fallthru
          _
        // Predicated region
        $region105: #{deberta_forward.1} parent=43 // pred_check
          %p805 = pneg %p528
        $region106: #{deberta_forward.1} parent=43 // pred_check_branch
          %807 = sbr.rel (%p805) target = $region108
        $region107: #{deberta_forward.1} parent=43 // pred_region
          %p808 = scmp.lt.s32.totalorder %s34, 1
          %s809 = scalar_select %p808, %s34, 1
          %s810 = scalar_lea.vmem %s19, %s809
        $region108: #{deberta_forward.1} parent=43 // pred_fallthru
          _
      $region44: #{deberta_forward.1} parent=5 // pred_fallthru
        _
      %p811 = scmp.le.s32.totalorder 1, %s34
      %p812 = scmp.lt.s32.totalorder %s34, 3
      %p813 = pnand %p811, %p812
      %p814 = pneg %p813
      // Predicated region
      $region109: #{deberta_forward.1} parent=5 // pred_check
        _
      $region110: #{deberta_forward.1} parent=5 // pred_check_branch
        %816 = sbr.rel (%p813) target = $region112
      $region111: #{deberta_forward.1} parent=5 // pred_region
        %s817 = ssub.s32 %s34, 1
        %p818 = pneg %p55
        %p819 = pneg %p52
        %p820 = pneg %p76
        %p821 = pneg %p73
        %p822 = pneg %p97
        %p823 = pneg %p94
        %p824 = pneg %p118
        %p825 = pneg %p115
        %p826 = scmp.lt.s32.totalorder %s39, 1
        %s827 = scalar_select %p826, %s39, 1
        %s828 = smul.addr %s827, 16
        %s829 = smul.addr %s828, 4
        %s830 = scalar_lea.vmem %s4, %s829
        %p831 = pneg %p144
        %p832 = pneg %p141
        %p833 = scmp.lt.s32.totalorder %s39, 1
        %s834 = scalar_select %p833, %s39, 1
        %s835 = smul.addr %s834, 4
        %s836 = scalar_lea.vmem %s5, %s835
        %p837 = pneg %p170
        %p838 = pneg %p167
        %p839 = scmp.lt.s32.totalorder %s39, 1
        %s840 = scalar_select %p839, %s39, 1
        %s841 = smul.addr %s840, 16
        %s842 = smul.addr %s841, 4
        %s843 = scalar_lea.vmem %s6, %s842
        %p844 = pneg %p196
        %p845 = pneg %p193
        %p846 = scmp.lt.s32.totalorder %s39, 1
        %s847 = scalar_select %p846, %s39, 1
        %s848 = smul.addr %s847, 4
        %s849 = scalar_lea.vmem %s7, %s848
        %p850 = pneg %p222
        %p851 = pneg %p219
        %p852 = scmp.lt.s32.totalorder %s39, 1
        %s853 = scalar_select %p852, %s39, 1
        %s854 = smul.addr %s853, 16
        %s855 = smul.addr %s854, 4
        %s856 = scalar_lea.vmem %s8, %s855
        %p857 = pneg %p248
        %p858 = pneg %p245
        %p859 = scmp.lt.s32.totalorder %s39, 1
        %s860 = scalar_select %p859, %s39, 1
        %s861 = smul.addr %s860, 4
        %s862 = scalar_lea.vmem %s9, %s861
        %p863 = pneg %p274
        %p864 = pneg %p271
        %p865 = scmp.lt.s32.totalorder %s39, 1
        %s866 = scalar_select %p865, %s39, 1
        %s867 = smul.addr %s866, 4
        %s868 = smul.addr %s867, 4
        %s869 = scalar_lea.vmem %s10, %s868
        %p870 = pneg %p300
        %p871 = pneg %p297
        %p872 = scmp.lt.s32.totalorder %s39, 1
        %s873 = scalar_select %p872, %s39, 1
        %s874 = scalar_lea.vmem %s11, %s873
        %p875 = pneg %p326
        %p876 = pneg %p323
        %p877 = scmp.lt.s32.totalorder %s39, 1
        %s878 = scalar_select %p877, %s39, 1
        %s879 = scalar_lea.vmem %s12, %s878
        %p880 = pneg %p352
        %p881 = pneg %p349
        %p882 = scmp.lt.s32.totalorder %s39, 1
        %s883 = scalar_select %p882, %s39, 1
        %s884 = scalar_lea.vmem %s13, %s883
        %p885 = pneg %p378
        %p886 = pneg %p375
        %p887 = scmp.lt.s32.totalorder %s39, 1
        %s888 = scalar_select %p887, %s39, 1
        %s889 = smul.addr %s888, 4
        %s890 = smul.addr %s889, 4
        %s891 = scalar_lea.vmem %s14, %s890
        %p892 = pneg %p404
        %p893 = pneg %p401
        %p894 = scmp.lt.s32.totalorder %s39, 1
        %s895 = scalar_select %p894, %s39, 1
        %s896 = scalar_lea.vmem %s15, %s895
        %p897 = pneg %p430
        %p898 = pneg %p427
        %p899 = scmp.lt.s32.totalorder %s39, 1
        %s900 = scalar_select %p899, %s39, 1
        %s901 = smul.addr %s900, 8
        %s902 = smul.addr %s901, 4
        %s903 = scalar_lea.vmem %s16, %s902
        %p904 = pneg %p456
        %p905 = pneg %p453
        %p906 = scmp.lt.s32.totalorder %s39, 1
        %s907 = scalar_select %p906, %s39, 1
        %s908 = scalar_lea.vmem %s17, %s907
        %p909 = pneg %p482
        %p910 = pneg %p479
        %p911 = scmp.lt.s32.totalorder %s39, 1
        %s912 = scalar_select %p911, %s39, 1
        %s913 = scalar_lea.vmem %s18, %s912
        %p914 = pneg %p508
        %p915 = pneg %p505
        %p916 = scmp.lt.s32.totalorder %s39, 1
        %s917 = scalar_select %p916, %s39, 1
        %s918 = scalar_lea.vmem %s19, %s917
        %p919 = pneg %p534
        %p920 = pneg %p531
        %p921 = pneg %p555
        %p922 = pneg %p552
        %p923 = pneg %p576
        %p924 = pneg %p573
        %p925 = pneg %p597
        %p926 = pneg %p594
        %p927 = pneg %p618
        %p928 = pneg %p615
        %p929 = pneg %p639
        %p930 = pneg %p636
        %p931 = pneg %p660
        %p932 = pneg %p657
        %p933 = scmp.lt.s32.totalorder %s39, 1
        %s934 = scalar_select %p933, %s39, 1
        %s935 = smul.addr %s934, 16
        %s936 = smul.addr %s935, 4
        %s937 = scalar_lea.vmem %s4, %s936
        %p938 = scmp.lt.s32.totalorder %s39, 1
        %s939 = scalar_select %p938, %s39, 1
        %s940 = smul.addr %s939, 4
        %s941 = scalar_lea.vmem %s5, %s940
        %p942 = scmp.lt.s32.totalorder %s39, 1
        %s943 = scalar_select %p942, %s39, 1
        %s944 = smul.addr %s943, 16
        %s945 = smul.addr %s944, 4
        %s946 = scalar_lea.vmem %s6, %s945
        %p947 = scmp.lt.s32.totalorder %s39, 1
        %s948 = scalar_select %p947, %s39, 1
        %s949 = smul.addr %s948, 4
        %s950 = scalar_lea.vmem %s7, %s949
        %p951 = scmp.lt.s32.totalorder %s39, 1
        %s952 = scalar_select %p951, %s39, 1
        %s953 = smul.addr %s952, 16
        %s954 = smul.addr %s953, 4
        %s955 = scalar_lea.vmem %s8, %s954
        %p956 = scmp.lt.s32.totalorder %s39, 1
        %s957 = scalar_select %p956, %s39, 1
        %s958 = smul.addr %s957, 4
        %s959 = scalar_lea.vmem %s9, %s958
        %p960 = scmp.lt.s32.totalorder %s39, 1
        %s961 = scalar_select %p960, %s39, 1
        %s962 = smul.addr %s961, 4
        %s963 = smul.addr %s962, 4
        %s964 = scalar_lea.vmem %s10, %s963
        %p965 = scmp.lt.s32.totalorder %s39, 1
        %s966 = scalar_select %p965, %s39, 1
        %s967 = scalar_lea.vmem %s11, %s966
        %p968 = scmp.lt.s32.totalorder %s39, 1
        %s969 = scalar_select %p968, %s39, 1
        %s970 = scalar_lea.vmem %s12, %s969
        %p971 = scmp.lt.s32.totalorder %s39, 1
        %s972 = scalar_select %p971, %s39, 1
        %s973 = scalar_lea.vmem %s13, %s972
        %p974 = scmp.lt.s32.totalorder %s39, 1
        %s975 = scalar_select %p974, %s39, 1
        %s976 = smul.addr %s975, 4
        %s977 = smul.addr %s976, 4
        %s978 = scalar_lea.vmem %s14, %s977
        %p979 = scmp.lt.s32.totalorder %s39, 1
        %s980 = scalar_select %p979, %s39, 1
        %s981 = scalar_lea.vmem %s15, %s980
        %p982 = scmp.lt.s32.totalorder %s39, 1
        %s983 = scalar_select %p982, %s39, 1
        %s984 = smul.addr %s983, 8
        %s985 = smul.addr %s984, 4
        %s986 = scalar_lea.vmem %s16, %s985
        %p987 = scmp.lt.s32.totalorder %s39, 1
        %s988 = scalar_select %p987, %s39, 1
        %s989 = scalar_lea.vmem %s17, %s988
        %p990 = scmp.lt.s32.totalorder %s39, 1
        %s991 = scalar_select %p990, %s39, 1
        %s992 = scalar_lea.vmem %s18, %s991
        %p993 = scmp.lt.s32.totalorder %s39, 1
        %s994 = scalar_select %p993, %s39, 1
        %s995 = scalar_lea.vmem %s19, %s994
        %p997 = scmp.eq.s32.totalorder %s39, 0
        // Predicated region
        $region113: #{deberta_forward.1} parent=111 // pred_check
          %p998 = pneg %p997
        $region114: #{deberta_forward.1} parent=111 // pred_check_branch
          %1000 = sbr.rel (%p998) target = $region116
        $region115: #{deberta_forward.1} parent=111 // pred_region
          %v1001 = vld [vmem:[%s0] sm:$0xff]
          %v1002 = vld [vmem:[%s0 + $0x8] sm:$0xff]
          %v1003 = vld [vmem:[%s2] sm:$0x1]
          %v1004 = vld [vmem:[%s3] sm:$0x1]
          %vm1005 = vcmask 261120
          %v1006 = vsel %vm1005, %v1001, 0.0
          %1007 = vadd.xlane.f32.xlu0 %v1006
          %v1008 = vpop.xlane.xlu0 %1007
          %v1009 = vsel %vm1005, %v1002, 0.0
          %1010 = vadd.xlane.f32.xlu0 %v1009
          %v1011 = vpop.xlane.xlu0 %1010
          %v1012 = vrcp.pop 32.0
          %v1013 = vmul.f32 %v1008, %v1012
          %v1014 = vmul.f32 %v1011, %v1012
          %v1015 = vsub.f32 %v1001, %v1013
          %v1016 = vsub.f32 %v1002, %v1014
          %v1017 = vmul.f32 %v1015, %v1015
          %v1018 = vmul.f32 %v1016, %v1016
          %v1019 = vsel %vm1005, %v1017, 0.0
          %1020 = vadd.xlane.f32.xlu0 %v1019
          %v1021 = vpop.xlane.xlu0 %1020
          %v1022 = vsel %vm1005, %v1018, 0.0
          %1023 = vadd.xlane.f32.xlu0 %v1022
          %v1024 = vpop.xlane.xlu0 %1023
          %v1025 = vmul.f32 %v1021, %v1012
          %v1026 = vmul.f32 %v1024, %v1012
          %v1027 = vadd.f32 %v1025, 1e-07
          %v1028 = vadd.f32 %v1026, 1e-07
          %v1029 = vrsqrt.pop %v1027
          %v1030 = vrsqrt.pop %v1028
          %v1031 = vmul.f32 %v1015, %v1029
          %v1032 = vmul.f32 %v1016, %v1030
          %v1034 = vlaneseq
          %v1035 = vshrl.u32 %v1034, 7
          %v1036 = vsub.s32 0, %v1035
          %v1037 = vrot.slane %v1003, %v1036
          %v1039 = vmul.f32 %v1031, %v1037
          %v1040 = vmul.f32 %v1032, %v1037
          %v1042 = vlaneseq
          %v1043 = vshrl.u32 %v1042, 7
          %v1044 = vsub.s32 0, %v1043
          %v1045 = vrot.slane %v1004, %v1044
          %v1047 = vadd.f32 %v1039, %v1045
          %v1048 = vadd.f32 %v1040, %v1045
          %1049 = vst.msk [vmem:[#allocation2] sm:$0xff] %vm1005, %v1047
          %1050 = vst.msk [vmem:[#allocation2 + $0x8] sm:$0xff] %vm1005, %v1048
        $region116: #{deberta_forward.1} parent=111 // pred_fallthru
          _
        %v1051 = vld [vmem:[#allocation2] sm:$0xff]
        %v1052 = vld [vmem:[#allocation2 + $0x8] sm:$0xff]
        %v1053 = vpack.c.bf16 %v1052, %v1051
        %v1054 = vld [vmem:[%s1] sm:$0x1]
        %v1055 = vld [vmem:[%s1 + $0x1] sm:$0x1]
        %v1056 = vld [vmem:[%s937] sm:$0xf]
        %v1057 = vld [vmem:[%s937 + $0x4] sm:$0xf]
        %v1058 = vld [vmem:[%s937 + $0x8] sm:$0xf]
        %v1059 = vld [vmem:[%s937 + $0xc] sm:$0xf]
        %v1060 = vld [vmem:[%s941] sm:$0x1]
        %v1062 = vlaneseq
        %v1063 = vshrl.u32 %v1062, 7
        %v1064 = vsub.s32 0, %v1063
        %v1065 = vrot.slane %v1060, %v1064
        %v1071 = vunpack.c.l.b16 %v1056
        %v1072 = vunpack.c.l.b16 %v1057
        %v1073 = vunpack.c.l.b16 %v1058
        %v1074 = vunpack.c.l.b16 %v1059
        %v1075 = vpack.c.b16 %v1072, %v1071
        %v1076 = vpack.c.b16 %v1074, %v1073
        %vm1079 = vcmask 261120
        %v1081 = vsel %vm1079, %v1053, 0
        %1083 = vmatprep.subr.bf16.mxu0 0
        %1084 = vmatpush1.bf16.msra.mxu0 0
        %1085 = vmatprep.subr.bf16.mxu0 0
        %1086 = vmatpush1.bf16.msra.mxu0 0
        %1087 = vmatprep.subr.bf16.mxu0 0
        %1088 = vmatpush1.bf16.msra.mxu0 0
        %1089 = vmatprep.subr.bf16.mxu0 0
        %1090 = vmatpush1.bf16.msra.mxu0 0
        %1091 = vmatprep.subr.bf16.mxu0 0
        %1092 = vmatpush1.bf16.msra.mxu0 0
        %1093 = vmatprep.subr.bf16.mxu0 0
        %1094 = vmatpush1.bf16.msra.mxu0 0
        %1095 = vmatprep.subr.bf16.mxu0 0
        %1096 = vmatpush1.bf16.msra.mxu0 %v1076
        %1097 = vmatprep.subr.bf16.mxu0 0
        %1098 = vmatpush1.bf16.msra.mxu0 %v1075
        %1099 = vmatprep.subr.bf16.mxu0 0
        %1100 = vmatpush2.bf16.msra.mxu0 0
        %1101 = vmatprep.subr.bf16.mxu0 0
        %1102 = vmatpush2.bf16.msra.mxu0 0
        %1103 = vmatprep.subr.bf16.mxu0 0
        %1104 = vmatpush2.bf16.msra.mxu0 0
        %1105 = vmatprep.subr.bf16.mxu0 0
        %1106 = vmatpush2.bf16.msra.mxu0 0
        %1107 = vmatprep.subr.bf16.mxu0 0
        %1108 = vmatpush2.bf16.msra.mxu0 0
        %1109 = vmatprep.subr.bf16.mxu0 0
        %1110 = vmatpush2.bf16.msra.mxu0 0
        %1111 = vmatprep.subr.bf16.mxu0 0
        %1112 = vmatpush2.bf16.msra.mxu0 0
        %1113 = vmatprep.subr.bf16.mxu0 0
        %1114 = vmatpush2.bf16.msra.mxu0 0
        %1115 = vmatprep.mubr.bf16.mxu0 0
        %1116 = vmatmul.mubr.bf16.gmra.mxu0 %v1081
        %v1117 = vpop.f32.mrf.mxu0
        %v1118 = vadd.f32 %v1065, %v1117
        %v1119 = vpop.f32.mrf.mxu0
        %v1120 = vpop.f32.mrf.mxu0
        %v1121 = vadd.f32 %v1065, %v1120
        %v1122 = vpop.f32.mrf.mxu0
        %1123 = vdwg.mxu0
        %v1124 = vld [vmem:[%s946] sm:$0xf]
        %v1125 = vld [vmem:[%s946 + $0x4] sm:$0xf]
        %v1126 = vld [vmem:[%s946 + $0x8] sm:$0xf]
        %v1127 = vld [vmem:[%s946 + $0xc] sm:$0xf]
        %v1128 = vld [vmem:[%s950] sm:$0x1]
        %v1130 = vlaneseq
        %v1131 = vshrl.u32 %v1130, 7
        %v1132 = vsub.s32 0, %v1131
        %v1133 = vrot.slane %v1128, %v1132
        %v1139 = vunpack.c.l.b16 %v1124
        %v1140 = vunpack.c.l.b16 %v1125
        %v1141 = vunpack.c.l.b16 %v1126
        %v1142 = vunpack.c.l.b16 %v1127
        %v1143 = vpack.c.b16 %v1140, %v1139
        %v1144 = vpack.c.b16 %v1142, %v1141
        %1147 = vmatprep.subr.bf16.mxu0 0
        %1148 = vmatpush1.bf16.msra.mxu0 0
        %1149 = vmatprep.subr.bf16.mxu0 0
        %1150 = vmatpush1.bf16.msra.mxu0 0
        %1151 = vmatprep.subr.bf16.mxu0 0
        %1152 = vmatpush1.bf16.msra.mxu0 0
        %1153 = vmatprep.subr.bf16.mxu0 0
        %1154 = vmatpush1.bf16.msra.mxu0 0
        %1155 = vmatprep.subr.bf16.mxu0 0
        %1156 = vmatpush1.bf16.msra.mxu0 0
        %1157 = vmatprep.subr.bf16.mxu0 0
        %1158 = vmatpush1.bf16.msra.mxu0 0
        %1159 = vmatprep.subr.bf16.mxu0 0
        %1160 = vmatpush1.bf16.msra.mxu0 %v1144
        %1161 = vmatprep.subr.bf16.mxu0 0
        %1162 = vmatpush1.bf16.msra.mxu0 %v1143
        %1163 = vmatprep.subr.bf16.mxu0 0
        %1164 = vmatpush2.bf16.msra.mxu0 0
        %1165 = vmatprep.subr.bf16.mxu0 0
        %1166 = vmatpush2.bf16.msra.mxu0 0
        %1167 = vmatprep.subr.bf16.mxu0 0
        %1168 = vmatpush2.bf16.msra.mxu0 0
        %1169 = vmatprep.subr.bf16.mxu0 0
        %1170 = vmatpush2.bf16.msra.mxu0 0
        %1171 = vmatprep.subr.bf16.mxu0 0
        %1172 = vmatpush2.bf16.msra.mxu0 0
        %1173 = vmatprep.subr.bf16.mxu0 0
        %1174 = vmatpush2.bf16.msra.mxu0 0
        %1175 = vmatprep.subr.bf16.mxu0 0
        %1176 = vmatpush2.bf16.msra.mxu0 0
        %1177 = vmatprep.subr.bf16.mxu0 0
        %1178 = vmatpush2.bf16.msra.mxu0 0
        %1179 = vmatprep.mubr.bf16.mxu0 0
        %1180 = vmatmul.mubr.bf16.gmra.mxu0 %v1081
        %v1181 = vpop.f32.mrf.mxu0
        %v1182 = vadd.f32 %v1133, %v1181
        %v1183 = vpop.f32.mrf.mxu0
        %v1184 = vpop.f32.mrf.mxu0
        %v1185 = vadd.f32 %v1133, %v1184
        %v1186 = vpop.f32.mrf.mxu0
        %1187 = vdwg.mxu0
        %v1188 = vld [vmem:[%s955] sm:$0xf]
        %v1189 = vld [vmem:[%s955 + $0x4] sm:$0xf]
        %v1190 = vld [vmem:[%s955 + $0x8] sm:$0xf]
        %v1191 = vld [vmem:[%s955 + $0xc] sm:$0xf]
        %v1192 = vld [vmem:[%s959] sm:$0x1]
        %v1194 = vlaneseq
        %v1195 = vshrl.u32 %v1194, 7
        %v1196 = vsub.s32 0, %v1195
        %v1197 = vrot.slane %v1192, %v1196
        %v1203 = vunpack.c.l.b16 %v1188
        %v1204 = vunpack.c.l.b16 %v1189
        %v1205 = vunpack.c.l.b16 %v1190
        %v1206 = vunpack.c.l.b16 %v1191
        %v1207 = vpack.c.b16 %v1204, %v1203
        %v1208 = vpack.c.b16 %v1206, %v1205
        %1211 = vmatprep.subr.bf16.mxu0 0
        %1212 = vmatpush1.bf16.msra.mxu0 0
        %1213 = vmatprep.subr.bf16.mxu0 0
        %1214 = vmatpush1.bf16.msra.mxu0 0
        %1215 = vmatprep.subr.bf16.mxu0 0
        %1216 = vmatpush1.bf16.msra.mxu0 0
        %1217 = vmatprep.subr.bf16.mxu0 0
        %1218 = vmatpush1.bf16.msra.mxu0 0
        %1219 = vmatprep.subr.bf16.mxu0 0
        %1220 = vmatpush1.bf16.msra.mxu0 0
        %1221 = vmatprep.subr.bf16.mxu0 0
        %1222 = vmatpush1.bf16.msra.mxu0 0
        %1223 = vmatprep.subr.bf16.mxu0 0
        %1224 = vmatpush1.bf16.msra.mxu0 %v1208
        %1225 = vmatprep.subr.bf16.mxu0 0
        %1226 = vmatpush1.bf16.msra.mxu0 %v1207
        %1227 = vmatprep.subr.bf16.mxu0 0
        %1228 = vmatpush2.bf16.msra.mxu0 0
        %1229 = vmatprep.subr.bf16.mxu0 0
        %1230 = vmatpush2.bf16.msra.mxu0 0
        %1231 = vmatprep.subr.bf16.mxu0 0
        %1232 = vmatpush2.bf16.msra.mxu0 0
        %1233 = vmatprep.subr.bf16.mxu0 0
        %1234 = vmatpush2.bf16.msra.mxu0 0
        %1235 = vmatprep.subr.bf16.mxu0 0
        %1236 = vmatpush2.bf16.msra.mxu0 0
        %1237 = vmatprep.subr.bf16.mxu0 0
        %1238 = vmatpush2.bf16.msra.mxu0 0
        %1239 = vmatprep.subr.bf16.mxu0 0
        %1240 = vmatpush2.bf16.msra.mxu0 0
        %1241 = vmatprep.subr.bf16.mxu0 0
        %1242 = vmatpush2.bf16.msra.mxu0 0
        %1243 = vmatprep.mubr.bf16.mxu0 0
        %1244 = vmatmul.mubr.bf16.gmra.mxu0 %v1081
        %v1245 = vpop.f32.mrf.mxu0
        %v1246 = vadd.f32 %v1197, %v1245
        %v1247 = vpop.f32.mrf.mxu0
        %v1248 = vpop.f32.mrf.mxu0
        %v1249 = vadd.f32 %v1197, %v1248
        %v1250 = vpop.f32.mrf.mxu0
        %1251 = vdwg.mxu0
        %v1252 = vpack.c.bf16 %v1118, %v1118
        %v1253 = vpack.c.bf16 %v1121, %v1121
        %v1254 = vpack.c.bf16 %v1182, %v1182
        %v1255 = vpack.c.bf16 %v1185, %v1185
        %v1256 = vpack.c.bf16 %v1246, %v1246
        %v1257 = vpack.c.bf16 %v1249, %v1249
        %vm1258 = vcmask 64512
        %v1260 = vsel %vm1258, %v1252, 0
        %v1263 = vsel %vm1258, %v1254, 0
        %1265 = vmatprep.subr.bf16.mxu0 0
        %1266 = vmatpush1.bf16.xpose.msra.mxu0 0
        %1267 = vmatprep.subr.bf16.mxu0 0
        %1268 = vmatpush1.bf16.xpose.msra.mxu0 0
        %1269 = vmatprep.subr.bf16.mxu0 0
        %1270 = vmatpush1.bf16.xpose.msra.mxu0 0
        %1271 = vmatprep.subr.bf16.mxu0 0
        %1272 = vmatpush1.bf16.xpose.msra.mxu0 0
        %1273 = vmatprep.subr.bf16.mxu0 0
        %1274 = vmatpush1.bf16.xpose.msra.mxu0 0
        %1275 = vmatprep.subr.bf16.mxu0 0
        %1276 = vmatpush1.bf16.xpose.msra.mxu0 0
        %1277 = vmatprep.subr.bf16.mxu0 0
        %1278 = vmatpush1.bf16.xpose.msra.mxu0 0
        %1279 = vmatprep.subr.bf16.mxu0 0
        %1280 = vmatpush1.bf16.xpose.msra.mxu0 %v1263
        %1281 = vmatprep.subr.bf16.mxu0 0
        %1282 = vmatpush2.bf16.xpose.msra.mxu0 0
        %1283 = vmatprep.subr.bf16.mxu0 0
        %1284 = vmatpush2.bf16.xpose.msra.mxu0 0
        %1285 = vmatprep.subr.bf16.mxu0 0
        %1286 = vmatpush2.bf16.xpose.msra.mxu0 0
        %1287 = vmatprep.subr.bf16.mxu0 0
        %1288 = vmatpush2.bf16.xpose.msra.mxu0 0
        %1289 = vmatprep.subr.bf16.mxu0 0
        %1290 = vmatpush2.bf16.xpose.msra.mxu0 0
        %1291 = vmatprep.subr.bf16.mxu0 0
        %1292 = vmatpush2.bf16.xpose.msra.mxu0 0
        %1293 = vmatprep.subr.bf16.mxu0 0
        %1294 = vmatpush2.bf16.xpose.msra.mxu0 0
        %1295 = vmatprep.subr.bf16.mxu0 0
        %1296 = vmatpush2.bf16.xpose.msra.mxu0 0
        %1297 = vmatprep.mubr.bf16.mxu0 0
        %1298 = vmatmul.mubr.bf16.gmra.mxu0 %v1260
        %v1299 = vpop.f32.mrf.mxu0
        %v1300 = vadd.f32 0.0, %v1299
        %v1301 = vpop.f32.mrf.mxu0
        %v1302 = vpop.f32.mrf.mxu0
        %v1303 = vpop.f32.mrf.mxu0
        %1304 = vdwg.mxu0
        %v1306 = vsel %vm1258, %v1253, 0
        %v1309 = vsel %vm1258, %v1255, 0
        %1311 = vmatprep.subr.bf16.mxu0 0
        %1312 = vmatpush1.bf16.xpose.msra.mxu0 0
        %1313 = vmatprep.subr.bf16.mxu0 0
        %1314 = vmatpush1.bf16.xpose.msra.mxu0 0
        %1315 = vmatprep.subr.bf16.mxu0 0
        %1316 = vmatpush1.bf16.xpose.msra.mxu0 0
        %1317 = vmatprep.subr.bf16.mxu0 0
        %1318 = vmatpush1.bf16.xpose.msra.mxu0 0
        %1319 = vmatprep.subr.bf16.mxu0 0
        %1320 = vmatpush1.bf16.xpose.msra.mxu0 0
        %1321 = vmatprep.subr.bf16.mxu0 0
        %1322 = vmatpush1.bf16.xpose.msra.mxu0 0
        %1323 = vmatprep.subr.bf16.mxu0 0
        %1324 = vmatpush1.bf16.xpose.msra.mxu0 0
        %1325 = vmatprep.subr.bf16.mxu0 0
        %1326 = vmatpush1.bf16.xpose.msra.mxu0 %v1309
        %1327 = vmatprep.subr.bf16.mxu0 0
        %1328 = vmatpush2.bf16.xpose.msra.mxu0 0
        %1329 = vmatprep.subr.bf16.mxu0 0
        %1330 = vmatpush2.bf16.xpose.msra.mxu0 0
        %1331 = vmatprep.subr.bf16.mxu0 0
        %1332 = vmatpush2.bf16.xpose.msra.mxu0 0
        %1333 = vmatprep.subr.bf16.mxu0 0
        %1334 = vmatpush2.bf16.xpose.msra.mxu0 0
        %1335 = vmatprep.subr.bf16.mxu0 0
        %1336 = vmatpush2.bf16.xpose.msra.mxu0 0
        %1337 = vmatprep.subr.bf16.mxu0 0
        %1338 = vmatpush2.bf16.xpose.msra.mxu0 0
        %1339 = vmatprep.subr.bf16.mxu0 0
        %1340 = vmatpush2.bf16.xpose.msra.mxu0 0
        %1341 = vmatprep.subr.bf16.mxu0 0
        %1342 = vmatpush2.bf16.xpose.msra.mxu0 0
        %1343 = vmatprep.mubr.bf16.mxu0 0
        %1344 = vmatmul.mubr.bf16.gmra.mxu0 %v1306
        %v1345 = vpop.f32.mrf.mxu0
        %v1346 = vadd.f32 0.0, %v1345
        %v1347 = vpop.f32.mrf.mxu0
        %v1348 = vpop.f32.mrf.mxu0
        %v1349 = vpop.f32.mrf.mxu0
        %1350 = vdwg.mxu0
        %v1351 = vmul.f32 %v1300, 0.35355338
        %v1352 = vmul.f32 %v1346, 0.35355338
        %v1355 = vlaneseq
        %v1356 = vshrl.u32 %v1355, 7
        %v1357 = vsub.s32 0, %v1356
        %v1358 = vrot.slane %v1054, %v1357
        %v1359 = vlaneseq
        %v1360 = vshrl.u32 %v1359, 7
        %v1361 = vsub.s32 0, %v1360
        %v1362 = vrot.slane %v1055, %v1361
        %v1365 = vadd.f32 %v1351, %v1358
        %v1366 = vadd.f32 %v1352, %v1362
        %v1367 = vsel %vm1258, %v1365, -inf
        %1368 = vmax.xlane.f32.xlu0 %v1367
        %v1369 = vpop.xlane.xlu0 %1368
        %v1370 = vsel %vm1258, %v1366, -inf
        %1371 = vmax.xlane.f32.xlu0 %v1370
        %v1372 = vpop.xlane.xlu0 %1371
        %v1373 = vsub.f32 %v1365, %v1369
        %v1374 = vsub.f32 %v1366, %v1372
        %v1375 = vmul.f32 %v1373, 1.442695
        %v1376 = vpow.pop %v1375
        %v1377 = vmul.f32 %v1374, 1.442695
        %v1378 = vpow.pop %v1377
        %v1379 = vsel %vm1258, %v1376, 0.0
        %1380 = vadd.xlane.f32.xlu0 %v1379
        %v1381 = vpop.xlane.xlu0 %1380
        %v1382 = vsel %vm1258, %v1378, 0.0
        %1383 = vadd.xlane.f32.xlu0 %v1382
        %v1384 = vpop.xlane.xlu0 %1383
        %v1385 = vrcp.pop %v1381
        %v1386 = vrcp.pop %v1384
        %v1387 = vmul.f32 %v1376, %v1385
        %v1388 = vmul.f32 %v1378, %v1386
        %v1389 = vpack.c.bf16 %v1387, %v1387
        %v1390 = vpack.c.bf16 %v1388, %v1388
        %v1392 = vsel %vm1258, %v1389, 0
        %vm1394 = vcmask 1043456
        %v1396 = vsel %vm1394, %v1256, 0
        %1398 = vmatprep.subr.bf16.mxu0 0
        %1399 = vmatpush1.bf16.msra.mxu0 0
        %1400 = vmatprep.subr.bf16.mxu0 0
        %1401 = vmatpush1.bf16.msra.mxu0 0
        %1402 = vmatprep.subr.bf16.mxu0 0
        %1403 = vmatpush1.bf16.msra.mxu0 0
        %1404 = vmatprep.subr.bf16.mxu0 0
        %1405 = vmatpush1.bf16.msra.mxu0 0
        %1406 = vmatprep.subr.bf16.mxu0 0
        %1407 = vmatpush1.bf16.msra.mxu0 0
        %1408 = vmatprep.subr.bf16.mxu0 0
        %1409 = vmatpush1.bf16.msra.mxu0 0
        %1410 = vmatprep.subr.bf16.mxu0 0
        %1411 = vmatpush1.bf16.msra.mxu0 0
        %1412 = vmatprep.subr.bf16.mxu0 0
        %1413 = vmatpush1.bf16.msra.mxu0 %v1396
        %1414 = vmatprep.subr.bf16.mxu0 0
        %1415 = vmatpush2.bf16.msra.mxu0 0
        %1416 = vmatprep.subr.bf16.mxu0 0
        %1417 = vmatpush2.bf16.msra.mxu0 0
        %1418 = vmatprep.subr.bf16.mxu0 0
        %1419 = vmatpush2.bf16.msra.mxu0 0
        %1420 = vmatprep.subr.bf16.mxu0 0
        %1421 = vmatpush2.bf16.msra.mxu0 0
        %1422 = vmatprep.subr.bf16.mxu0 0
        %1423 = vmatpush2.bf16.msra.mxu0 0
        %1424 = vmatprep.subr.bf16.mxu0 0
        %1425 = vmatpush2.bf16.msra.mxu0 0
        %1426 = vmatprep.subr.bf16.mxu0 0
        %1427 = vmatpush2.bf16.msra.mxu0 0
        %1428 = vmatprep.subr.bf16.mxu0 0
        %1429 = vmatpush2.bf16.msra.mxu0 0
        %1430 = vmatprep.mubr.bf16.mxu0 0
        %1431 = vmatmul.mubr.bf16.gmra.mxu0 %v1392
        %v1432 = vpop.f32.mrf.mxu0
        %v1433 = vadd.f32 0.0, %v1432
        %v1434 = vpop.f32.mrf.mxu0
        %v1435 = vpop.f32.mrf.mxu0
        %v1436 = vpop.f32.mrf.mxu0
        %1437 = vdwg.mxu0
        %v1439 = vsel %vm1258, %v1390, 0
        %v1442 = vsel %vm1394, %v1257, 0
        %1444 = vmatprep.subr.bf16.mxu0 0
        %1445 = vmatpush1.bf16.msra.mxu0 0
        %1446 = vmatprep.subr.bf16.mxu0 0
        %1447 = vmatpush1.bf16.msra.mxu0 0
        %1448 = vmatprep.subr.bf16.mxu0 0
        %1449 = vmatpush1.bf16.msra.mxu0 0
        %1450 = vmatprep.subr.bf16.mxu0 0
        %1451 = vmatpush1.bf16.msra.mxu0 0
        %1452 = vmatprep.subr.bf16.mxu0 0
        %1453 = vmatpush1.bf16.msra.mxu0 0
        %1454 = vmatprep.subr.bf16.mxu0 0
        %1455 = vmatpush1.bf16.msra.mxu0 0
        %1456 = vmatprep.subr.bf16.mxu0 0
        %1457 = vmatpush1.bf16.msra.mxu0 0
        %1458 = vmatprep.subr.bf16.mxu0 0
        %1459 = vmatpush1.bf16.msra.mxu0 %v1442
        %1460 = vmatprep.subr.bf16.mxu0 0
        %1461 = vmatpush2.bf16.msra.mxu0 0
        %1462 = vmatprep.subr.bf16.mxu0 0
        %1463 = vmatpush2.bf16.msra.mxu0 0
        %1464 = vmatprep.subr.bf16.mxu0 0
        %1465 = vmatpush2.bf16.msra.mxu0 0
        %1466 = vmatprep.subr.bf16.mxu0 0
        %1467 = vmatpush2.bf16.msra.mxu0 0
        %1468 = vmatprep.subr.bf16.mxu0 0
        %1469 = vmatpush2.bf16.msra.mxu0 0
        %1470 = vmatprep.subr.bf16.mxu0 0
        %1471 = vmatpush2.bf16.msra.mxu0 0
        %1472 = vmatprep.subr.bf16.mxu0 0
        %1473 = vmatpush2.bf16.msra.mxu0 0
        %1474 = vmatprep.subr.bf16.mxu0 0
        %1475 = vmatpush2.bf16.msra.mxu0 0
        %1476 = vmatprep.mubr.bf16.mxu0 0
        %1477 = vmatmul.mubr.bf16.gmra.mxu0 %v1439
        %v1478 = vpop.f32.mrf.mxu0
        %v1479 = vadd.f32 0.0, %v1478
        %v1480 = vpop.f32.mrf.mxu0
        %v1481 = vpop.f32.mrf.mxu0
        %v1482 = vpop.f32.mrf.mxu0
        %1483 = vdwg.mxu0
        %v1484 = vpack.c.bf16 %v1479, %v1433
        %v1485 = vld [vmem:[%s964] sm:$0xf]
        %s1486 = scalar_lea.vmem %s937, 16
        %v1487 = vld [vmem:[%s1486] sm:$0xf]
        %v1488 = vld [vmem:[%s1486 + $0x4] sm:$0xf]
        %v1489 = vld [vmem:[%s1486 + $0x8] sm:$0xf]
        %v1490 = vld [vmem:[%s1486 + $0xc] sm:$0xf]
        %s1491 = scalar_lea.vmem %s941, 1
        %v1492 = vld [vmem:[%s1491] sm:$0x1]
        %v1494 = vlaneseq
        %v1495 = vshrl.u32 %v1494, 7
        %v1496 = vsub.s32 0, %v1495
        %v1497 = vrot.slane %v1492, %v1496
        %v1503 = vunpack.c.l.b16 %v1487
        %v1504 = vunpack.c.l.b16 %v1488
        %v1505 = vunpack.c.l.b16 %v1489
        %v1506 = vunpack.c.l.b16 %v1490
        %v1507 = vpack.c.b16 %v1504, %v1503
        %v1508 = vpack.c.b16 %v1506, %v1505
        %1511 = vmatprep.subr.bf16.mxu0 0
        %1512 = vmatpush1.bf16.msra.mxu0 0
        %1513 = vmatprep.subr.bf16.mxu0 0
        %1514 = vmatpush1.bf16.msra.mxu0 0
        %1515 = vmatprep.subr.bf16.mxu0 0
        %1516 = vmatpush1.bf16.msra.mxu0 0
        %1517 = vmatprep.subr.bf16.mxu0 0
        %1518 = vmatpush1.bf16.msra.mxu0 0
        %1519 = vmatprep.subr.bf16.mxu0 0
        %1520 = vmatpush1.bf16.msra.mxu0 0
        %1521 = vmatprep.subr.bf16.mxu0 0
        %1522 = vmatpush1.bf16.msra.mxu0 0
        %1523 = vmatprep.subr.bf16.mxu0 0
        %1524 = vmatpush1.bf16.msra.mxu0 %v1508
        %1525 = vmatprep.subr.bf16.mxu0 0
        %1526 = vmatpush1.bf16.msra.mxu0 %v1507
        %1527 = vmatprep.subr.bf16.mxu0 0
        %1528 = vmatpush2.bf16.msra.mxu0 0
        %1529 = vmatprep.subr.bf16.mxu0 0
        %1530 = vmatpush2.bf16.msra.mxu0 0
        %1531 = vmatprep.subr.bf16.mxu0 0
        %1532 = vmatpush2.bf16.msra.mxu0 0
        %1533 = vmatprep.subr.bf16.mxu0 0
        %1534 = vmatpush2.bf16.msra.mxu0 0
        %1535 = vmatprep.subr.bf16.mxu0 0
        %1536 = vmatpush2.bf16.msra.mxu0 0
        %1537 = vmatprep.subr.bf16.mxu0 0
        %1538 = vmatpush2.bf16.msra.mxu0 0
        %1539 = vmatprep.subr.bf16.mxu0 0
        %1540 = vmatpush2.bf16.msra.mxu0 0
        %1541 = vmatprep.subr.bf16.mxu0 0
        %1542 = vmatpush2.bf16.msra.mxu0 0
        %1543 = vmatprep.mubr.bf16.mxu0 0
        %1544 = vmatmul.mubr.bf16.gmra.mxu0 %v1081
        %v1545 = vpop.f32.mrf.mxu0
        %v1546 = vadd.f32 %v1497, %v1545
        %v1547 = vpop.f32.mrf.mxu0
        %v1548 = vpop.f32.mrf.mxu0
        %v1549 = vadd.f32 %v1497, %v1548
        %v1550 = vpop.f32.mrf.mxu0
        %1551 = vdwg.mxu0
        %s1552 = scalar_lea.vmem %s946, 16
        %v1553 = vld [vmem:[%s1552] sm:$0xf]
        %v1554 = vld [vmem:[%s1552 + $0x4] sm:$0xf]
        %v1555 = vld [vmem:[%s1552 + $0x8] sm:$0xf]
        %v1556 = vld [vmem:[%s1552 + $0xc] sm:$0xf]
        %s1557 = scalar_lea.vmem %s950, 1
        %v1558 = vld [vmem:[%s1557] sm:$0x1]
        %v1560 = vlaneseq
        %v1561 = vshrl.u32 %v1560, 7
        %v1562 = vsub.s32 0, %v1561
        %v1563 = vrot.slane %v1558, %v1562
        %v1569 = vunpack.c.l.b16 %v1553
        %v1570 = vunpack.c.l.b16 %v1554
        %v1571 = vunpack.c.l.b16 %v1555
        %v1572 = vunpack.c.l.b16 %v1556
        %v1573 = vpack.c.b16 %v1570, %v1569
        %v1574 = vpack.c.b16 %v1572, %v1571
        %1577 = vmatprep.subr.bf16.mxu0 0
        %1578 = vmatpush1.bf16.msra.mxu0 0
        %1579 = vmatprep.subr.bf16.mxu0 0
        %1580 = vmatpush1.bf16.msra.mxu0 0
        %1581 = vmatprep.subr.bf16.mxu0 0
        %1582 = vmatpush1.bf16.msra.mxu0 0
        %1583 = vmatprep.subr.bf16.mxu0 0
        %1584 = vmatpush1.bf16.msra.mxu0 0
        %1585 = vmatprep.subr.bf16.mxu0 0
        %1586 = vmatpush1.bf16.msra.mxu0 0
        %1587 = vmatprep.subr.bf16.mxu0 0
        %1588 = vmatpush1.bf16.msra.mxu0 0
        %1589 = vmatprep.subr.bf16.mxu0 0
        %1590 = vmatpush1.bf16.msra.mxu0 %v1574
        %1591 = vmatprep.subr.bf16.mxu0 0
        %1592 = vmatpush1.bf16.msra.mxu0 %v1573
        %1593 = vmatprep.subr.bf16.mxu0 0
        %1594 = vmatpush2.bf16.msra.mxu0 0
        %1595 = vmatprep.subr.bf16.mxu0 0
        %1596 = vmatpush2.bf16.msra.mxu0 0
        %1597 = vmatprep.subr.bf16.mxu0 0
        %1598 = vmatpush2.bf16.msra.mxu0 0
        %1599 = vmatprep.subr.bf16.mxu0 0
        %1600 = vmatpush2.bf16.msra.mxu0 0
        %1601 = vmatprep.subr.bf16.mxu0 0
        %1602 = vmatpush2.bf16.msra.mxu0 0
        %1603 = vmatprep.subr.bf16.mxu0 0
        %1604 = vmatpush2.bf16.msra.mxu0 0
        %1605 = vmatprep.subr.bf16.mxu0 0
        %1606 = vmatpush2.bf16.msra.mxu0 0
        %1607 = vmatprep.subr.bf16.mxu0 0
        %1608 = vmatpush2.bf16.msra.mxu0 0
        %1609 = vmatprep.mubr.bf16.mxu0 0
        %1610 = vmatmul.mubr.bf16.gmra.mxu0 %v1081
        %v1611 = vpop.f32.mrf.mxu0
        %v1612 = vadd.f32 %v1563, %v1611
        %v1613 = vpop.f32.mrf.mxu0
        %v1614 = vpop.f32.mrf.mxu0
        %v1615 = vadd.f32 %v1563, %v1614
        %v1616 = vpop.f32.mrf.mxu0
        %1617 = vdwg.mxu0
        %s1618 = scalar_lea.vmem %s955, 16
        %v1619 = vld [vmem:[%s1618] sm:$0xf]
        %v1620 = vld [vmem:[%s1618 + $0x4] sm:$0xf]
        %v1621 = vld [vmem:[%s1618 + $0x8] sm:$0xf]
        %v1622 = vld [vmem:[%s1618 + $0xc] sm:$0xf]
        %s1623 = scalar_lea.vmem %s959, 1
        %v1624 = vld [vmem:[%s1623] sm:$0x1]
        %v1626 = vlaneseq
        %v1627 = vshrl.u32 %v1626, 7
        %v1628 = vsub.s32 0, %v1627
        %v1629 = vrot.slane %v1624, %v1628
        %v1635 = vunpack.c.l.b16 %v1619
        %v1636 = vunpack.c.l.b16 %v1620
        %v1637 = vunpack.c.l.b16 %v1621
        %v1638 = vunpack.c.l.b16 %v1622
        %v1639 = vpack.c.b16 %v1636, %v1635
        %v1640 = vpack.c.b16 %v1638, %v1637
        %1643 = vmatprep.subr.bf16.mxu0 0
        %1644 = vmatpush1.bf16.msra.mxu0 0
        %1645 = vmatprep.subr.bf16.mxu0 0
        %1646 = vmatpush1.bf16.msra.mxu0 0
        %1647 = vmatprep.subr.bf16.mxu0 0
        %1648 = vmatpush1.bf16.msra.mxu0 0
        %1649 = vmatprep.subr.bf16.mxu0 0
        %1650 = vmatpush1.bf16.msra.mxu0 0
        %1651 = vmatprep.subr.bf16.mxu0 0
        %1652 = vmatpush1.bf16.msra.mxu0 0
        %1653 = vmatprep.subr.bf16.mxu0 0
        %1654 = vmatpush1.bf16.msra.mxu0 0
        %1655 = vmatprep.subr.bf16.mxu0 0
        %1656 = vmatpush1.bf16.msra.mxu0 %v1640
        %1657 = vmatprep.subr.bf16.mxu0 0
        %1658 = vmatpush1.bf16.msra.mxu0 %v1639
        %1659 = vmatprep.subr.bf16.mxu0 0
        %1660 = vmatpush2.bf16.msra.mxu0 0
        %1661 = vmatprep.subr.bf16.mxu0 0
        %1662 = vmatpush2.bf16.msra.mxu0 0
        %1663 = vmatprep.subr.bf16.mxu0 0
        %1664 = vmatpush2.bf16.msra.mxu0 0
        %1665 = vmatprep.subr.bf16.mxu0 0
        %1666 = vmatpush2.bf16.msra.mxu0 0
        %1667 = vmatprep.subr.bf16.mxu0 0
        %1668 = vmatpush2.bf16.msra.mxu0 0
        %1669 = vmatprep.subr.bf16.mxu0 0
        %1670 = vmatpush2.bf16.msra.mxu0 0
        %1671 = vmatprep.subr.bf16.mxu0 0
        %1672 = vmatpush2.bf16.msra.mxu0 0
        %1673 = vmatprep.subr.bf16.mxu0 0
        %1674 = vmatpush2.bf16.msra.mxu0 0
        %1675 = vmatprep.mubr.bf16.mxu0 0
        %1676 = vmatmul.mubr.bf16.gmra.mxu0 %v1081
        %v1677 = vpop.f32.mrf.mxu0
        %v1678 = vadd.f32 %v1629, %v1677
        %v1679 = vpop.f32.mrf.mxu0
        %v1680 = vpop.f32.mrf.mxu0
        %v1681 = vadd.f32 %v1629, %v1680
        %v1682 = vpop.f32.mrf.mxu0
        %1683 = vdwg.mxu0
        %v1684 = vpack.c.bf16 %v1546, %v1546
        %v1685 = vpack.c.bf16 %v1549, %v1549
        %v1686 = vpack.c.bf16 %v1612, %v1612
        %v1687 = vpack.c.bf16 %v1615, %v1615
        %v1688 = vpack.c.bf16 %v1678, %v1678
        %v1689 = vpack.c.bf16 %v1681, %v1681
        %v1691 = vsel %vm1258, %v1684, 0
        %v1694 = vsel %vm1258, %v1686, 0
        %1696 = vmatprep.subr.bf16.mxu0 0
        %1697 = vmatpush1.bf16.xpose.msra.mxu0 0
        %1698 = vmatprep.subr.bf16.mxu0 0
        %1699 = vmatpush1.bf16.xpose.msra.mxu0 0
        %1700 = vmatprep.subr.bf16.mxu0 0
        %1701 = vmatpush1.bf16.xpose.msra.mxu0 0
        %1702 = vmatprep.subr.bf16.mxu0 0
        %1703 = vmatpush1.bf16.xpose.msra.mxu0 0
        %1704 = vmatprep.subr.bf16.mxu0 0
        %1705 = vmatpush1.bf16.xpose.msra.mxu0 0
        %1706 = vmatprep.subr.bf16.mxu0 0
        %1707 = vmatpush1.bf16.xpose.msra.mxu0 0
        %1708 = vmatprep.subr.bf16.mxu0 0
        %1709 = vmatpush1.bf16.xpose.msra.mxu0 0
        %1710 = vmatprep.subr.bf16.mxu0 0
        %1711 = vmatpush1.bf16.xpose.msra.mxu0 %v1694
        %1712 = vmatprep.subr.bf16.mxu0 0
        %1713 = vmatpush2.bf16.xpose.msra.mxu0 0
        %1714 = vmatprep.subr.bf16.mxu0 0
        %1715 = vmatpush2.bf16.xpose.msra.mxu0 0
        %1716 = vmatprep.subr.bf16.mxu0 0
        %1717 = vmatpush2.bf16.xpose.msra.mxu0 0
        %1718 = vmatprep.subr.bf16.mxu0 0
        %1719 = vmatpush2.bf16.xpose.msra.mxu0 0
        %1720 = vmatprep.subr.bf16.mxu0 0
        %1721 = vmatpush2.bf16.xpose.msra.mxu0 0
        %1722 = vmatprep.subr.bf16.mxu0 0
        %1723 = vmatpush2.bf16.xpose.msra.mxu0 0
        %1724 = vmatprep.subr.bf16.mxu0 0
        %1725 = vmatpush2.bf16.xpose.msra.mxu0 0
        %1726 = vmatprep.subr.bf16.mxu0 0
        %1727 = vmatpush2.bf16.xpose.msra.mxu0 0
        %1728 = vmatprep.mubr.bf16.mxu0 0
        %1729 = vmatmul.mubr.bf16.gmra.mxu0 %v1691
        %v1730 = vpop.f32.mrf.mxu0
        %v1731 = vadd.f32 0.0, %v1730
        %v1732 = vpop.f32.mrf.mxu0
        %v1733 = vpop.f32.mrf.mxu0
        %v1734 = vpop.f32.mrf.mxu0
        %1735 = vdwg.mxu0
        %v1737 = vsel %vm1258, %v1685, 0
        %v1740 = vsel %vm1258, %v1687, 0
        %1742 = vmatprep.subr.bf16.mxu0 0
        %1743 = vmatpush1.bf16.xpose.msra.mxu0 0
        %1744 = vmatprep.subr.bf16.mxu0 0
        %1745 = vmatpush1.bf16.xpose.msra.mxu0 0
        %1746 = vmatprep.subr.bf16.mxu0 0
        %1747 = vmatpush1.bf16.xpose.msra.mxu0 0
        %1748 = vmatprep.subr.bf16.mxu0 0
        %1749 = vmatpush1.bf16.xpose.msra.mxu0 0
        %1750 = vmatprep.subr.bf16.mxu0 0
        %1751 = vmatpush1.bf16.xpose.msra.mxu0 0
        %1752 = vmatprep.subr.bf16.mxu0 0
        %1753 = vmatpush1.bf16.xpose.msra.mxu0 0
        %1754 = vmatprep.subr.bf16.mxu0 0
        %1755 = vmatpush1.bf16.xpose.msra.mxu0 0
        %1756 = vmatprep.subr.bf16.mxu0 0
        %1757 = vmatpush1.bf16.xpose.msra.mxu0 %v1740
        %1758 = vmatprep.subr.bf16.mxu0 0
        %1759 = vmatpush2.bf16.xpose.msra.mxu0 0
        %1760 = vmatprep.subr.bf16.mxu0 0
        %1761 = vmatpush2.bf16.xpose.msra.mxu0 0
        %1762 = vmatprep.subr.bf16.mxu0 0
        %1763 = vmatpush2.bf16.xpose.msra.mxu0 0
        %1764 = vmatprep.subr.bf16.mxu0 0
        %1765 = vmatpush2.bf16.xpose.msra.mxu0 0
        %1766 = vmatprep.subr.bf16.mxu0 0
        %1767 = vmatpush2.bf16.xpose.msra.mxu0 0
        %1768 = vmatprep.subr.bf16.mxu0 0
        %1769 = vmatpush2.bf16.xpose.msra.mxu0 0
        %1770 = vmatprep.subr.bf16.mxu0 0
        %1771 = vmatpush2.bf16.xpose.msra.mxu0 0
        %1772 = vmatprep.subr.bf16.mxu0 0
        %1773 = vmatpush2.bf16.xpose.msra.mxu0 0
        %1774 = vmatprep.mubr.bf16.mxu0 0
        %1775 = vmatmul.mubr.bf16.gmra.mxu0 %v1737
        %v1776 = vpop.f32.mrf.mxu0
        %v1777 = vadd.f32 0.0, %v1776
        %v1778 = vpop.f32.mrf.mxu0
        %v1779 = vpop.f32.mrf.mxu0
        %v1780 = vpop.f32.mrf.mxu0
        %1781 = vdwg.mxu0
        %v1782 = vmul.f32 %v1731, 0.35355338
        %v1783 = vmul.f32 %v1777, 0.35355338
        %v1784 = vadd.f32 %v1782, %v1358
        %v1785 = vadd.f32 %v1783, %v1362
        %v1786 = vsel %vm1258, %v1784, -inf
        %1787 = vmax.xlane.f32.xlu0 %v1786
        %v1788 = vpop.xlane.xlu0 %1787
        %v1789 = vsel %vm1258, %v1785, -inf
        %1790 = vmax.xlane.f32.xlu0 %v1789
        %v1791 = vpop.xlane.xlu0 %1790
        %v1792 = vsub.f32 %v1784, %v1788
        %v1793 = vsub.f32 %v1785, %v1791
        %v1794 = vmul.f32 %v1792, 1.442695
        %v1795 = vpow.pop %v1794
        %v1796 = vmul.f32 %v1793, 1.442695
        %v1797 = vpow.pop %v1796
        %v1798 = vsel %vm1258, %v1795, 0.0
        %1799 = vadd.xlane.f32.xlu0 %v1798
        %v1800 = vpop.xlane.xlu0 %1799
        %v1801 = vsel %vm1258, %v1797, 0.0
        %1802 = vadd.xlane.f32.xlu0 %v1801
        %v1803 = vpop.xlane.xlu0 %1802
        %v1804 = vrcp.pop %v1800
        %v1805 = vrcp.pop %v1803
        %v1806 = vmul.f32 %v1795, %v1804
        %v1807 = vmul.f32 %v1797, %v1805
        %v1808 = vpack.c.bf16 %v1806, %v1806
        %v1809 = vpack.c.bf16 %v1807, %v1807
        %v1811 = vsel %vm1258, %v1808, 0
        %v1814 = vsel %vm1394, %v1688, 0
        %1816 = vmatprep.subr.bf16.mxu0 0
        %1817 = vmatpush1.bf16.msra.mxu0 0
        %1818 = vmatprep.subr.bf16.mxu0 0
        %1819 = vmatpush1.bf16.msra.mxu0 0
        %1820 = vmatprep.subr.bf16.mxu0 0
        %1821 = vmatpush1.bf16.msra.mxu0 0
        %1822 = vmatprep.subr.bf16.mxu0 0
        %1823 = vmatpush1.bf16.msra.mxu0 0
        %1824 = vmatprep.subr.bf16.mxu0 0
        %1825 = vmatpush1.bf16.msra.mxu0 0
        %1826 = vmatprep.subr.bf16.mxu0 0
        %1827 = vmatpush1.bf16.msra.mxu0 0
        %1828 = vmatprep.subr.bf16.mxu0 0
        %1829 = vmatpush1.bf16.msra.mxu0 0
        %1830 = vmatprep.subr.bf16.mxu0 0
        %1831 = vmatpush1.bf16.msra.mxu0 %v1814
        %1832 = vmatprep.subr.bf16.mxu0 0
        %1833 = vmatpush2.bf16.msra.mxu0 0
        %1834 = vmatprep.subr.bf16.mxu0 0
        %1835 = vmatpush2.bf16.msra.mxu0 0
        %1836 = vmatprep.subr.bf16.mxu0 0
        %1837 = vmatpush2.bf16.msra.mxu0 0
        %1838 = vmatprep.subr.bf16.mxu0 0
        %1839 = vmatpush2.bf16.msra.mxu0 0
        %1840 = vmatprep.subr.bf16.mxu0 0
        %1841 = vmatpush2.bf16.msra.mxu0 0
        %1842 = vmatprep.subr.bf16.mxu0 0
        %1843 = vmatpush2.bf16.msra.mxu0 0
        %1844 = vmatprep.subr.bf16.mxu0 0
        %1845 = vmatpush2.bf16.msra.mxu0 0
        %1846 = vmatprep.subr.bf16.mxu0 0
        %1847 = vmatpush2.bf16.msra.mxu0 0
        %1848 = vmatprep.mubr.bf16.mxu0 0
        %1849 = vmatmul.mubr.bf16.gmra.mxu0 %v1811
        %v1850 = vpop.f32.mrf.mxu0
        %v1851 = vadd.f32 0.0, %v1850
        %v1852 = vpop.f32.mrf.mxu0
        %v1853 = vpop.f32.mrf.mxu0
        %v1854 = vpop.f32.mrf.mxu0
        %1855 = vdwg.mxu0
        %v1857 = vsel %vm1258, %v1809, 0
        %v1860 = vsel %vm1394, %v1689, 0
        %1862 = vmatprep.subr.bf16.mxu0 0
        %1863 = vmatpush1.bf16.msra.mxu0 0
        %1864 = vmatprep.subr.bf16.mxu0 0
        %1865 = vmatpush1.bf16.msra.mxu0 0
        %1866 = vmatprep.subr.bf16.mxu0 0
        %1867 = vmatpush1.bf16.msra.mxu0 0
        %1868 = vmatprep.subr.bf16.mxu0 0
        %1869 = vmatpush1.bf16.msra.mxu0 0
        %1870 = vmatprep.subr.bf16.mxu0 0
        %1871 = vmatpush1.bf16.msra.mxu0 0
        %1872 = vmatprep.subr.bf16.mxu0 0
        %1873 = vmatpush1.bf16.msra.mxu0 0
        %1874 = vmatprep.subr.bf16.mxu0 0
        %1875 = vmatpush1.bf16.msra.mxu0 0
        %1876 = vmatprep.subr.bf16.mxu0 0
        %1877 = vmatpush1.bf16.msra.mxu0 %v1860
        %1878 = vmatprep.subr.bf16.mxu0 0
        %1879 = vmatpush2.bf16.msra.mxu0 0
        %1880 = vmatprep.subr.bf16.mxu0 0
        %1881 = vmatpush2.bf16.msra.mxu0 0
        %1882 = vmatprep.subr.bf16.mxu0 0
        %1883 = vmatpush2.bf16.msra.mxu0 0
        %1884 = vmatprep.subr.bf16.mxu0 0
        %1885 = vmatpush2.bf16.msra.mxu0 0
        %1886 = vmatprep.subr.bf16.mxu0 0
        %1887 = vmatpush2.bf16.msra.mxu0 0
        %1888 = vmatprep.subr.bf16.mxu0 0
        %1889 = vmatpush2.bf16.msra.mxu0 0
        %1890 = vmatprep.subr.bf16.mxu0 0
        %1891 = vmatpush2.bf16.msra.mxu0 0
        %1892 = vmatprep.subr.bf16.mxu0 0
        %1893 = vmatpush2.bf16.msra.mxu0 0
        %1894 = vmatprep.mubr.bf16.mxu0 0
        %1895 = vmatmul.mubr.bf16.gmra.mxu0 %v1857
        %v1896 = vpop.f32.mrf.mxu0
        %v1897 = vadd.f32 0.0, %v1896
        %v1898 = vpop.f32.mrf.mxu0
        %v1899 = vpop.f32.mrf.mxu0
        %v1900 = vpop.f32.mrf.mxu0
        %1901 = vdwg.mxu0
        %v1902 = vpack.c.bf16 %v1897, %v1851
        %s1903 = scalar_lea.vmem %s964, 4
        %v1904 = vld [vmem:[%s1903] sm:$0xf]
        %v1906 = vsel %vm1258, %v1902, 0
        %v1909 = vsel %vm1394, %v1904, 0
        %1911 = vmatprep.subr.bf16.mxu0 0
        %1912 = vmatpush1.bf16.msra.mxu0 0
        %1913 = vmatprep.subr.bf16.mxu0 0
        %1914 = vmatpush1.bf16.msra.mxu0 0
        %1915 = vmatprep.subr.bf16.mxu0 0
        %1916 = vmatpush1.bf16.msra.mxu0 0
        %1917 = vmatprep.subr.bf16.mxu0 0
        %1918 = vmatpush1.bf16.msra.mxu0 0
        %1919 = vmatprep.subr.bf16.mxu0 0
        %1920 = vmatpush1.bf16.msra.mxu0 0
        %1921 = vmatprep.subr.bf16.mxu0 0
        %1922 = vmatpush1.bf16.msra.mxu0 0
        %1923 = vmatprep.subr.bf16.mxu0 0
        %1924 = vmatpush1.bf16.msra.mxu0 0
        %1925 = vmatprep.subr.bf16.mxu0 0
        %1926 = vmatpush1.bf16.msra.mxu0 %v1909
        %1927 = vmatprep.subr.bf16.mxu0 0
        %1928 = vmatpush2.bf16.msra.mxu0 0
        %1929 = vmatprep.subr.bf16.mxu0 0
        %1930 = vmatpush2.bf16.msra.mxu0 0
        %1931 = vmatprep.subr.bf16.mxu0 0
        %1932 = vmatpush2.bf16.msra.mxu0 0
        %1933 = vmatprep.subr.bf16.mxu0 0
        %1934 = vmatpush2.bf16.msra.mxu0 0
        %1935 = vmatprep.subr.bf16.mxu0 0
        %1936 = vmatpush2.bf16.msra.mxu0 0
        %1937 = vmatprep.subr.bf16.mxu0 0
        %1938 = vmatpush2.bf16.msra.mxu0 0
        %1939 = vmatprep.subr.bf16.mxu0 0
        %1940 = vmatpush2.bf16.msra.mxu0 0
        %1941 = vmatprep.subr.bf16.mxu0 0
        %1942 = vmatpush2.bf16.msra.mxu0 0
        %1943 = vmatprep.mubr.bf16.mxu0 0
        %1944 = vmatmul.mubr.bf16.gmra.mxu0 %v1906
        %v1945 = vpop.f32.mrf.mxu0
        %v1946 = vadd.f32 0.0, %v1945
        %v1947 = vpop.f32.mrf.mxu0
        %v1948 = vpop.f32.mrf.mxu0
        %v1949 = vadd.f32 0.0, %v1948
        %v1950 = vpop.f32.mrf.mxu0
        %1951 = vdwg.mxu0
        %v1953 = vsel %vm1258, %v1484, 0
        %v1956 = vsel %vm1394, %v1485, 0
        %1958 = vmatprep.subr.bf16.mxu0 0
        %1959 = vmatpush1.bf16.msra.mxu0 0
        %1960 = vmatprep.subr.bf16.mxu0 0
        %1961 = vmatpush1.bf16.msra.mxu0 0
        %1962 = vmatprep.subr.bf16.mxu0 0
        %1963 = vmatpush1.bf16.msra.mxu0 0
        %1964 = vmatprep.subr.bf16.mxu0 0
        %1965 = vmatpush1.bf16.msra.mxu0 0
        %1966 = vmatprep.subr.bf16.mxu0 0
        %1967 = vmatpush1.bf16.msra.mxu0 0
        %1968 = vmatprep.subr.bf16.mxu0 0
        %1969 = vmatpush1.bf16.msra.mxu0 0
        %1970 = vmatprep.subr.bf16.mxu0 0
        %1971 = vmatpush1.bf16.msra.mxu0 0
        %1972 = vmatprep.subr.bf16.mxu0 0
        %1973 = vmatpush1.bf16.msra.mxu0 %v1956
        %1974 = vmatprep.subr.bf16.mxu0 0
        %1975 = vmatpush2.bf16.msra.mxu0 0
        %1976 = vmatprep.subr.bf16.mxu0 0
        %1977 = vmatpush2.bf16.msra.mxu0 0
        %1978 = vmatprep.subr.bf16.mxu0 0
        %1979 = vmatpush2.bf16.msra.mxu0 0
        %1980 = vmatprep.subr.bf16.mxu0 0
        %1981 = vmatpush2.bf16.msra.mxu0 0
        %1982 = vmatprep.subr.bf16.mxu0 0
        %1983 = vmatpush2.bf16.msra.mxu0 0
        %1984 = vmatprep.subr.bf16.mxu0 0
        %1985 = vmatpush2.bf16.msra.mxu0 0
        %1986 = vmatprep.subr.bf16.mxu0 0
        %1987 = vmatpush2.bf16.msra.mxu0 0
        %1988 = vmatprep.subr.bf16.mxu0 0
        %1989 = vmatpush2.bf16.msra.mxu0 0
        %1990 = vmatprep.mubr.bf16.mxu0 0
        %1991 = vmatmul.mubr.bf16.gmra.mxu0 %v1953
        %v1992 = vpop.f32.mrf.mxu0
        %v1993 = vadd.f32 %v1946, %v1992
        %v1994 = vpop.f32.mrf.mxu0
        %v1995 = vpop.f32.mrf.mxu0
        %v1996 = vadd.f32 %v1949, %v1995
        %v1997 = vpop.f32.mrf.mxu0
        %1998 = vdwg.mxu0
        %s1999 = scalar_lea.vmem %s937, 32
        %v2000 = vld [vmem:[%s1999] sm:$0xf]
        %v2001 = vld [vmem:[%s1999 + $0x4] sm:$0xf]
        %v2002 = vld [vmem:[%s1999 + $0x8] sm:$0xf]
        %v2003 = vld [vmem:[%s1999 + $0xc] sm:$0xf]
        %s2004 = scalar_lea.vmem %s941, 2
        %v2005 = vld [vmem:[%s2004] sm:$0x1]
        %v2007 = vlaneseq
        %v2008 = vshrl.u32 %v2007, 7
        %v2009 = vsub.s32 0, %v2008
        %v2010 = vrot.slane %v2005, %v2009
        %v2016 = vunpack.c.l.b16 %v2000
        %v2017 = vunpack.c.l.b16 %v2001
        %v2018 = vunpack.c.l.b16 %v2002
        %v2019 = vunpack.c.l.b16 %v2003
        %v2020 = vpack.c.b16 %v2017, %v2016
        %v2021 = vpack.c.b16 %v2019, %v2018
        %2024 = vmatprep.subr.bf16.mxu0 0
        %2025 = vmatpush1.bf16.msra.mxu0 0
        %2026 = vmatprep.subr.bf16.mxu0 0
        %2027 = vmatpush1.bf16.msra.mxu0 0
        %2028 = vmatprep.subr.bf16.mxu0 0
        %2029 = vmatpush1.bf16.msra.mxu0 0
        %2030 = vmatprep.subr.bf16.mxu0 0
        %2031 = vmatpush1.bf16.msra.mxu0 0
        %2032 = vmatprep.subr.bf16.mxu0 0
        %2033 = vmatpush1.bf16.msra.mxu0 0
        %2034 = vmatprep.subr.bf16.mxu0 0
        %2035 = vmatpush1.bf16.msra.mxu0 0
        %2036 = vmatprep.subr.bf16.mxu0 0
        %2037 = vmatpush1.bf16.msra.mxu0 %v2021
        %2038 = vmatprep.subr.bf16.mxu0 0
        %2039 = vmatpush1.bf16.msra.mxu0 %v2020
        %2040 = vmatprep.subr.bf16.mxu0 0
        %2041 = vmatpush2.bf16.msra.mxu0 0
        %2042 = vmatprep.subr.bf16.mxu0 0
        %2043 = vmatpush2.bf16.msra.mxu0 0
        %2044 = vmatprep.subr.bf16.mxu0 0
        %2045 = vmatpush2.bf16.msra.mxu0 0
        %2046 = vmatprep.subr.bf16.mxu0 0
        %2047 = vmatpush2.bf16.msra.mxu0 0
        %2048 = vmatprep.subr.bf16.mxu0 0
        %2049 = vmatpush2.bf16.msra.mxu0 0
        %2050 = vmatprep.subr.bf16.mxu0 0
        %2051 = vmatpush2.bf16.msra.mxu0 0
        %2052 = vmatprep.subr.bf16.mxu0 0
        %2053 = vmatpush2.bf16.msra.mxu0 0
        %2054 = vmatprep.subr.bf16.mxu0 0
        %2055 = vmatpush2.bf16.msra.mxu0 0
        %2056 = vmatprep.mubr.bf16.mxu0 0
        %2057 = vmatmul.mubr.bf16.gmra.mxu0 %v1081
        %v2058 = vpop.f32.mrf.mxu0
        %v2059 = vadd.f32 %v2010, %v2058
        %v2060 = vpop.f32.mrf.mxu0
        %v2061 = vpop.f32.mrf.mxu0
        %v2062 = vadd.f32 %v2010, %v2061
        %v2063 = vpop.f32.mrf.mxu0
        %2064 = vdwg.mxu0
        %s2065 = scalar_lea.vmem %s946, 32
        %v2066 = vld [vmem:[%s2065] sm:$0xf]
        %v2067 = vld [vmem:[%s2065 + $0x4] sm:$0xf]
        %v2068 = vld [vmem:[%s2065 + $0x8] sm:$0xf]
        %v2069 = vld [vmem:[%s2065 + $0xc] sm:$0xf]
        %s2070 = scalar_lea.vmem %s950, 2
        %v2071 = vld [vmem:[%s2070] sm:$0x1]
        %v2073 = vlaneseq
        %v2074 = vshrl.u32 %v2073, 7
        %v2075 = vsub.s32 0, %v2074
        %v2076 = vrot.slane %v2071, %v2075
        %v2082 = vunpack.c.l.b16 %v2066
        %v2083 = vunpack.c.l.b16 %v2067
        %v2084 = vunpack.c.l.b16 %v2068
        %v2085 = vunpack.c.l.b16 %v2069
        %v2086 = vpack.c.b16 %v2083, %v2082
        %v2087 = vpack.c.b16 %v2085, %v2084
        %2090 = vmatprep.subr.bf16.mxu0 0
        %2091 = vmatpush1.bf16.msra.mxu0 0
        %2092 = vmatprep.subr.bf16.mxu0 0
        %2093 = vmatpush1.bf16.msra.mxu0 0
        %2094 = vmatprep.subr.bf16.mxu0 0
        %2095 = vmatpush1.bf16.msra.mxu0 0
        %2096 = vmatprep.subr.bf16.mxu0 0
        %2097 = vmatpush1.bf16.msra.mxu0 0
        %2098 = vmatprep.subr.bf16.mxu0 0
        %2099 = vmatpush1.bf16.msra.mxu0 0
        %2100 = vmatprep.subr.bf16.mxu0 0
        %2101 = vmatpush1.bf16.msra.mxu0 0
        %2102 = vmatprep.subr.bf16.mxu0 0
        %2103 = vmatpush1.bf16.msra.mxu0 %v2087
        %2104 = vmatprep.subr.bf16.mxu0 0
        %2105 = vmatpush1.bf16.msra.mxu0 %v2086
        %2106 = vmatprep.subr.bf16.mxu0 0
        %2107 = vmatpush2.bf16.msra.mxu0 0
        %2108 = vmatprep.subr.bf16.mxu0 0
        %2109 = vmatpush2.bf16.msra.mxu0 0
        %2110 = vmatprep.subr.bf16.mxu0 0
        %2111 = vmatpush2.bf16.msra.mxu0 0
        %2112 = vmatprep.subr.bf16.mxu0 0
        %2113 = vmatpush2.bf16.msra.mxu0 0
        %2114 = vmatprep.subr.bf16.mxu0 0
        %2115 = vmatpush2.bf16.msra.mxu0 0
        %2116 = vmatprep.subr.bf16.mxu0 0
        %2117 = vmatpush2.bf16.msra.mxu0 0
        %2118 = vmatprep.subr.bf16.mxu0 0
        %2119 = vmatpush2.bf16.msra.mxu0 0
        %2120 = vmatprep.subr.bf16.mxu0 0
        %2121 = vmatpush2.bf16.msra.mxu0 0
        %2122 = vmatprep.mubr.bf16.mxu0 0
        %2123 = vmatmul.mubr.bf16.gmra.mxu0 %v1081
        %v2124 = vpop.f32.mrf.mxu0
        %v2125 = vadd.f32 %v2076, %v2124
        %v2126 = vpop.f32.mrf.mxu0
        %v2127 = vpop.f32.mrf.mxu0
        %v2128 = vadd.f32 %v2076, %v2127
        %v2129 = vpop.f32.mrf.mxu0
        %2130 = vdwg.mxu0
        %s2131 = scalar_lea.vmem %s955, 32
        %v2132 = vld [vmem:[%s2131] sm:$0xf]
        %v2133 = vld [vmem:[%s2131 + $0x4] sm:$0xf]
        %v2134 = vld [vmem:[%s2131 + $0x8] sm:$0xf]
        %v2135 = vld [vmem:[%s2131 + $0xc] sm:$0xf]
        %s2136 = scalar_lea.vmem %s959, 2
        %v2137 = vld [vmem:[%s2136] sm:$0x1]
        %v2139 = vlaneseq
        %v2140 = vshrl.u32 %v2139, 7
        %v2141 = vsub.s32 0, %v2140
        %v2142 = vrot.slane %v2137, %v2141
        %v2148 = vunpack.c.l.b16 %v2132
        %v2149 = vunpack.c.l.b16 %v2133
        %v2150 = vunpack.c.l.b16 %v2134
        %v2151 = vunpack.c.l.b16 %v2135
        %v2152 = vpack.c.b16 %v2149, %v2148
        %v2153 = vpack.c.b16 %v2151, %v2150
        %2156 = vmatprep.subr.bf16.mxu0 0
        %2157 = vmatpush1.bf16.msra.mxu0 0
        %2158 = vmatprep.subr.bf16.mxu0 0
        %2159 = vmatpush1.bf16.msra.mxu0 0
        %2160 = vmatprep.subr.bf16.mxu0 0
        %2161 = vmatpush1.bf16.msra.mxu0 0
        %2162 = vmatprep.subr.bf16.mxu0 0
        %2163 = vmatpush1.bf16.msra.mxu0 0
        %2164 = vmatprep.subr.bf16.mxu0 0
        %2165 = vmatpush1.bf16.msra.mxu0 0
        %2166 = vmatprep.subr.bf16.mxu0 0
        %2167 = vmatpush1.bf16.msra.mxu0 0
        %2168 = vmatprep.subr.bf16.mxu0 0
        %2169 = vmatpush1.bf16.msra.mxu0 %v2153
        %2170 = vmatprep.subr.bf16.mxu0 0
        %2171 = vmatpush1.bf16.msra.mxu0 %v2152
        %2172 = vmatprep.subr.bf16.mxu0 0
        %2173 = vmatpush2.bf16.msra.mxu0 0
        %2174 = vmatprep.subr.bf16.mxu0 0
        %2175 = vmatpush2.bf16.msra.mxu0 0
        %2176 = vmatprep.subr.bf16.mxu0 0
        %2177 = vmatpush2.bf16.msra.mxu0 0
        %2178 = vmatprep.subr.bf16.mxu0 0
        %2179 = vmatpush2.bf16.msra.mxu0 0
        %2180 = vmatprep.subr.bf16.mxu0 0
        %2181 = vmatpush2.bf16.msra.mxu0 0
        %2182 = vmatprep.subr.bf16.mxu0 0
        %2183 = vmatpush2.bf16.msra.mxu0 0
        %2184 = vmatprep.subr.bf16.mxu0 0
        %2185 = vmatpush2.bf16.msra.mxu0 0
        %2186 = vmatprep.subr.bf16.mxu0 0
        %2187 = vmatpush2.bf16.msra.mxu0 0
        %2188 = vmatprep.mubr.bf16.mxu0 0
        %2189 = vmatmul.mubr.bf16.gmra.mxu0 %v1081
        %v2190 = vpop.f32.mrf.mxu0
        %v2191 = vadd.f32 %v2142, %v2190
        %v2192 = vpop.f32.mrf.mxu0
        %v2193 = vpop.f32.mrf.mxu0
        %v2194 = vadd.f32 %v2142, %v2193
        %v2195 = vpop.f32.mrf.mxu0
        %2196 = vdwg.mxu0
        %v2197 = vpack.c.bf16 %v2059, %v2059
        %v2198 = vpack.c.bf16 %v2062, %v2062
        %v2199 = vpack.c.bf16 %v2125, %v2125
        %v2200 = vpack.c.bf16 %v2128, %v2128
        %v2201 = vpack.c.bf16 %v2191, %v2191
        %v2202 = vpack.c.bf16 %v2194, %v2194
        %v2204 = vsel %vm1258, %v2197, 0
        %v2207 = vsel %vm1258, %v2199, 0
        %2209 = vmatprep.subr.bf16.mxu0 0
        %2210 = vmatpush1.bf16.xpose.msra.mxu0 0
        %2211 = vmatprep.subr.bf16.mxu0 0
        %2212 = vmatpush1.bf16.xpose.msra.mxu0 0
        %2213 = vmatprep.subr.bf16.mxu0 0
        %2214 = vmatpush1.bf16.xpose.msra.mxu0 0
        %2215 = vmatprep.subr.bf16.mxu0 0
        %2216 = vmatpush1.bf16.xpose.msra.mxu0 0
        %2217 = vmatprep.subr.bf16.mxu0 0
        %2218 = vmatpush1.bf16.xpose.msra.mxu0 0
        %2219 = vmatprep.subr.bf16.mxu0 0
        %2220 = vmatpush1.bf16.xpose.msra.mxu0 0
        %2221 = vmatprep.subr.bf16.mxu0 0
        %2222 = vmatpush1.bf16.xpose.msra.mxu0 0
        %2223 = vmatprep.subr.bf16.mxu0 0
        %2224 = vmatpush1.bf16.xpose.msra.mxu0 %v2207
        %2225 = vmatprep.subr.bf16.mxu0 0
        %2226 = vmatpush2.bf16.xpose.msra.mxu0 0
        %2227 = vmatprep.subr.bf16.mxu0 0
        %2228 = vmatpush2.bf16.xpose.msra.mxu0 0
        %2229 = vmatprep.subr.bf16.mxu0 0
        %2230 = vmatpush2.bf16.xpose.msra.mxu0 0
        %2231 = vmatprep.subr.bf16.mxu0 0
        %2232 = vmatpush2.bf16.xpose.msra.mxu0 0
        %2233 = vmatprep.subr.bf16.mxu0 0
        %2234 = vmatpush2.bf16.xpose.msra.mxu0 0
        %2235 = vmatprep.subr.bf16.mxu0 0
        %2236 = vmatpush2.bf16.xpose.msra.mxu0 0
        %2237 = vmatprep.subr.bf16.mxu0 0
        %2238 = vmatpush2.bf16.xpose.msra.mxu0 0
        %2239 = vmatprep.subr.bf16.mxu0 0
        %2240 = vmatpush2.bf16.xpose.msra.mxu0 0
        %2241 = vmatprep.mubr.bf16.mxu0 0
        %2242 = vmatmul.mubr.bf16.gmra.mxu0 %v2204
        %v2243 = vpop.f32.mrf.mxu0
        %v2244 = vadd.f32 0.0, %v2243
        %v2245 = vpop.f32.mrf.mxu0
        %v2246 = vpop.f32.mrf.mxu0
        %v2247 = vpop.f32.mrf.mxu0
        %2248 = vdwg.mxu0
        %v2250 = vsel %vm1258, %v2198, 0
        %v2253 = vsel %vm1258, %v2200, 0
        %2255 = vmatprep.subr.bf16.mxu0 0
        %2256 = vmatpush1.bf16.xpose.msra.mxu0 0
        %2257 = vmatprep.subr.bf16.mxu0 0
        %2258 = vmatpush1.bf16.xpose.msra.mxu0 0
        %2259 = vmatprep.subr.bf16.mxu0 0
        %2260 = vmatpush1.bf16.xpose.msra.mxu0 0
        %2261 = vmatprep.subr.bf16.mxu0 0
        %2262 = vmatpush1.bf16.xpose.msra.mxu0 0
        %2263 = vmatprep.subr.bf16.mxu0 0
        %2264 = vmatpush1.bf16.xpose.msra.mxu0 0
        %2265 = vmatprep.subr.bf16.mxu0 0
        %2266 = vmatpush1.bf16.xpose.msra.mxu0 0
        %2267 = vmatprep.subr.bf16.mxu0 0
        %2268 = vmatpush1.bf16.xpose.msra.mxu0 0
        %2269 = vmatprep.subr.bf16.mxu0 0
        %2270 = vmatpush1.bf16.xpose.msra.mxu0 %v2253
        %2271 = vmatprep.subr.bf16.mxu0 0
        %2272 = vmatpush2.bf16.xpose.msra.mxu0 0
        %2273 = vmatprep.subr.bf16.mxu0 0
        %2274 = vmatpush2.bf16.xpose.msra.mxu0 0
        %2275 = vmatprep.subr.bf16.mxu0 0
        %2276 = vmatpush2.bf16.xpose.msra.mxu0 0
        %2277 = vmatprep.subr.bf16.mxu0 0
        %2278 = vmatpush2.bf16.xpose.msra.mxu0 0
        %2279 = vmatprep.subr.bf16.mxu0 0
        %2280 = vmatpush2.bf16.xpose.msra.mxu0 0
        %2281 = vmatprep.subr.bf16.mxu0 0
        %2282 = vmatpush2.bf16.xpose.msra.mxu0 0
        %2283 = vmatprep.subr.bf16.mxu0 0
        %2284 = vmatpush2.bf16.xpose.msra.mxu0 0
        %2285 = vmatprep.subr.bf16.mxu0 0
        %2286 = vmatpush2.bf16.xpose.msra.mxu0 0
        %2287 = vmatprep.mubr.bf16.mxu0 0
        %2288 = vmatmul.mubr.bf16.gmra.mxu0 %v2250
        %v2289 = vpop.f32.mrf.mxu0
        %v2290 = vadd.f32 0.0, %v2289
        %v2291 = vpop.f32.mrf.mxu0
        %v2292 = vpop.f32.mrf.mxu0
        %v2293 = vpop.f32.mrf.mxu0
        %2294 = vdwg.mxu0
        %v2295 = vmul.f32 %v2244, 0.35355338
        %v2296 = vmul.f32 %v2290, 0.35355338
        %v2297 = vadd.f32 %v2295, %v1358
        %v2298 = vadd.f32 %v2296, %v1362
        %v2299 = vsel %vm1258, %v2297, -inf
        %2300 = vmax.xlane.f32.xlu0 %v2299
        %v2301 = vpop.xlane.xlu0 %2300
        %v2302 = vsel %vm1258, %v2298, -inf
        %2303 = vmax.xlane.f32.xlu0 %v2302
        %v2304 = vpop.xlane.xlu0 %2303
        %v2305 = vsub.f32 %v2297, %v2301
        %v2306 = vsub.f32 %v2298, %v2304
        %v2307 = vmul.f32 %v2305, 1.442695
        %v2308 = vpow.pop %v2307
        %v2309 = vmul.f32 %v2306, 1.442695
        %v2310 = vpow.pop %v2309
        %v2311 = vsel %vm1258, %v2308, 0.0
        %2312 = vadd.xlane.f32.xlu0 %v2311
        %v2313 = vpop.xlane.xlu0 %2312
        %v2314 = vsel %vm1258, %v2310, 0.0
        %2315 = vadd.xlane.f32.xlu0 %v2314
        %v2316 = vpop.xlane.xlu0 %2315
        %v2317 = vrcp.pop %v2313
        %v2318 = vrcp.pop %v2316
        %v2319 = vmul.f32 %v2308, %v2317
        %v2320 = vmul.f32 %v2310, %v2318
        %v2321 = vpack.c.bf16 %v2319, %v2319
        %v2322 = vpack.c.bf16 %v2320, %v2320
        %v2324 = vsel %vm1258, %v2321, 0
        %v2327 = vsel %vm1394, %v2201, 0
        %2329 = vmatprep.subr.bf16.mxu0 0
        %2330 = vmatpush1.bf16.msra.mxu0 0
        %2331 = vmatprep.subr.bf16.mxu0 0
        %2332 = vmatpush1.bf16.msra.mxu0 0
        %2333 = vmatprep.subr.bf16.mxu0 0
        %2334 = vmatpush1.bf16.msra.mxu0 0
        %2335 = vmatprep.subr.bf16.mxu0 0
        %2336 = vmatpush1.bf16.msra.mxu0 0
        %2337 = vmatprep.subr.bf16.mxu0 0
        %2338 = vmatpush1.bf16.msra.mxu0 0
        %2339 = vmatprep.subr.bf16.mxu0 0
        %2340 = vmatpush1.bf16.msra.mxu0 0
        %2341 = vmatprep.subr.bf16.mxu0 0
        %2342 = vmatpush1.bf16.msra.mxu0 0
        %2343 = vmatprep.subr.bf16.mxu0 0
        %2344 = vmatpush1.bf16.msra.mxu0 %v2327
        %2345 = vmatprep.subr.bf16.mxu0 0
        %2346 = vmatpush2.bf16.msra.mxu0 0
        %2347 = vmatprep.subr.bf16.mxu0 0
        %2348 = vmatpush2.bf16.msra.mxu0 0
        %2349 = vmatprep.subr.bf16.mxu0 0
        %2350 = vmatpush2.bf16.msra.mxu0 0
        %2351 = vmatprep.subr.bf16.mxu0 0
        %2352 = vmatpush2.bf16.msra.mxu0 0
        %2353 = vmatprep.subr.bf16.mxu0 0
        %2354 = vmatpush2.bf16.msra.mxu0 0
        %2355 = vmatprep.subr.bf16.mxu0 0
        %2356 = vmatpush2.bf16.msra.mxu0 0
        %2357 = vmatprep.subr.bf16.mxu0 0
        %2358 = vmatpush2.bf16.msra.mxu0 0
        %2359 = vmatprep.subr.bf16.mxu0 0
        %2360 = vmatpush2.bf16.msra.mxu0 0
        %2361 = vmatprep.mubr.bf16.mxu0 0
        %2362 = vmatmul.mubr.bf16.gmra.mxu0 %v2324
        %v2363 = vpop.f32.mrf.mxu0
        %v2364 = vadd.f32 0.0, %v2363
        %v2365 = vpop.f32.mrf.mxu0
        %v2366 = vpop.f32.mrf.mxu0
        %v2367 = vpop.f32.mrf.mxu0
        %2368 = vdwg.mxu0
        %v2370 = vsel %vm1258, %v2322, 0
        %v2373 = vsel %vm1394, %v2202, 0
        %2375 = vmatprep.subr.bf16.mxu0 0
        %2376 = vmatpush1.bf16.msra.mxu0 0
        %2377 = vmatprep.subr.bf16.mxu0 0
        %2378 = vmatpush1.bf16.msra.mxu0 0
        %2379 = vmatprep.subr.bf16.mxu0 0
        %2380 = vmatpush1.bf16.msra.mxu0 0
        %2381 = vmatprep.subr.bf16.mxu0 0
        %2382 = vmatpush1.bf16.msra.mxu0 0
        %2383 = vmatprep.subr.bf16.mxu0 0
        %2384 = vmatpush1.bf16.msra.mxu0 0
        %2385 = vmatprep.subr.bf16.mxu0 0
        %2386 = vmatpush1.bf16.msra.mxu0 0
        %2387 = vmatprep.subr.bf16.mxu0 0
        %2388 = vmatpush1.bf16.msra.mxu0 0
        %2389 = vmatprep.subr.bf16.mxu0 0
        %2390 = vmatpush1.bf16.msra.mxu0 %v2373
        %2391 = vmatprep.subr.bf16.mxu0 0
        %2392 = vmatpush2.bf16.msra.mxu0 0
        %2393 = vmatprep.subr.bf16.mxu0 0
        %2394 = vmatpush2.bf16.msra.mxu0 0
        %2395 = vmatprep.subr.bf16.mxu0 0
        %2396 = vmatpush2.bf16.msra.mxu0 0
        %2397 = vmatprep.subr.bf16.mxu0 0
        %2398 = vmatpush2.bf16.msra.mxu0 0
        %2399 = vmatprep.subr.bf16.mxu0 0
        %2400 = vmatpush2.bf16.msra.mxu0 0
        %2401 = vmatprep.subr.bf16.mxu0 0
        %2402 = vmatpush2.bf16.msra.mxu0 0
        %2403 = vmatprep.subr.bf16.mxu0 0
        %2404 = vmatpush2.bf16.msra.mxu0 0
        %2405 = vmatprep.subr.bf16.mxu0 0
        %2406 = vmatpush2.bf16.msra.mxu0 0
        %2407 = vmatprep.mubr.bf16.mxu0 0
        %2408 = vmatmul.mubr.bf16.gmra.mxu0 %v2370
        %v2409 = vpop.f32.mrf.mxu0
        %v2410 = vadd.f32 0.0, %v2409
        %v2411 = vpop.f32.mrf.mxu0
        %v2412 = vpop.f32.mrf.mxu0
        %v2413 = vpop.f32.mrf.mxu0
        %2414 = vdwg.mxu0
        %v2415 = vpack.c.bf16 %v2410, %v2364
        %s2416 = scalar_lea.vmem %s964, 8
        %v2417 = vld [vmem:[%s2416] sm:$0xf]
        %v2419 = vsel %vm1258, %v2415, 0
        %v2422 = vsel %vm1394, %v2417, 0
        %2424 = vmatprep.subr.bf16.mxu0 0
        %2425 = vmatpush1.bf16.msra.mxu0 0
        %2426 = vmatprep.subr.bf16.mxu0 0
        %2427 = vmatpush1.bf16.msra.mxu0 0
        %2428 = vmatprep.subr.bf16.mxu0 0
        %2429 = vmatpush1.bf16.msra.mxu0 0
        %2430 = vmatprep.subr.bf16.mxu0 0
        %2431 = vmatpush1.bf16.msra.mxu0 0
        %2432 = vmatprep.subr.bf16.mxu0 0
        %2433 = vmatpush1.bf16.msra.mxu0 0
        %2434 = vmatprep.subr.bf16.mxu0 0
        %2435 = vmatpush1.bf16.msra.mxu0 0
        %2436 = vmatprep.subr.bf16.mxu0 0
        %2437 = vmatpush1.bf16.msra.mxu0 0
        %2438 = vmatprep.subr.bf16.mxu0 0
        %2439 = vmatpush1.bf16.msra.mxu0 %v2422
        %2440 = vmatprep.subr.bf16.mxu0 0
        %2441 = vmatpush2.bf16.msra.mxu0 0
        %2442 = vmatprep.subr.bf16.mxu0 0
        %2443 = vmatpush2.bf16.msra.mxu0 0
        %2444 = vmatprep.subr.bf16.mxu0 0
        %2445 = vmatpush2.bf16.msra.mxu0 0
        %2446 = vmatprep.subr.bf16.mxu0 0
        %2447 = vmatpush2.bf16.msra.mxu0 0
        %2448 = vmatprep.subr.bf16.mxu0 0
        %2449 = vmatpush2.bf16.msra.mxu0 0
        %2450 = vmatprep.subr.bf16.mxu0 0
        %2451 = vmatpush2.bf16.msra.mxu0 0
        %2452 = vmatprep.subr.bf16.mxu0 0
        %2453 = vmatpush2.bf16.msra.mxu0 0
        %2454 = vmatprep.subr.bf16.mxu0 0
        %2455 = vmatpush2.bf16.msra.mxu0 0
        %2456 = vmatprep.mubr.bf16.mxu0 0
        %2457 = vmatmul.mubr.bf16.gmra.mxu0 %v2419
        %v2458 = vpop.f32.mrf.mxu0
        %v2459 = vadd.f32 0.0, %v2458
        %v2460 = vpop.f32.mrf.mxu0
        %v2461 = vpop.f32.mrf.mxu0
        %v2462 = vadd.f32 0.0, %v2461
        %v2463 = vpop.f32.mrf.mxu0
        %2464 = vdwg.mxu0
        %v2465 = vadd.f32 %v1993, %v2459
        %v2466 = vadd.f32 %v1996, %v2462
        %s2467 = scalar_lea.vmem %s937, 48
        %v2468 = vld [vmem:[%s2467] sm:$0xf]
        %v2469 = vld [vmem:[%s2467 + $0x4] sm:$0xf]
        %v2470 = vld [vmem:[%s2467 + $0x8] sm:$0xf]
        %v2471 = vld [vmem:[%s2467 + $0xc] sm:$0xf]
        %s2472 = scalar_lea.vmem %s941, 3
        %v2473 = vld [vmem:[%s2472] sm:$0x1]
        %v2475 = vlaneseq
        %v2476 = vshrl.u32 %v2475, 7
        %v2477 = vsub.s32 0, %v2476
        %v2478 = vrot.slane %v2473, %v2477
        %v2484 = vunpack.c.l.b16 %v2468
        %v2485 = vunpack.c.l.b16 %v2469
        %v2486 = vunpack.c.l.b16 %v2470
        %v2487 = vunpack.c.l.b16 %v2471
        %v2488 = vpack.c.b16 %v2485, %v2484
        %v2489 = vpack.c.b16 %v2487, %v2486
        %2492 = vmatprep.subr.bf16.mxu0 0
        %2493 = vmatpush1.bf16.msra.mxu0 0
        %2494 = vmatprep.subr.bf16.mxu0 0
        %2495 = vmatpush1.bf16.msra.mxu0 0
        %2496 = vmatprep.subr.bf16.mxu0 0
        %2497 = vmatpush1.bf16.msra.mxu0 0
        %2498 = vmatprep.subr.bf16.mxu0 0
        %2499 = vmatpush1.bf16.msra.mxu0 0
        %2500 = vmatprep.subr.bf16.mxu0 0
        %2501 = vmatpush1.bf16.msra.mxu0 0
        %2502 = vmatprep.subr.bf16.mxu0 0
        %2503 = vmatpush1.bf16.msra.mxu0 0
        %2504 = vmatprep.subr.bf16.mxu0 0
        %2505 = vmatpush1.bf16.msra.mxu0 %v2489
        %2506 = vmatprep.subr.bf16.mxu0 0
        %2507 = vmatpush1.bf16.msra.mxu0 %v2488
        %2508 = vmatprep.subr.bf16.mxu0 0
        %2509 = vmatpush2.bf16.msra.mxu0 0
        %2510 = vmatprep.subr.bf16.mxu0 0
        %2511 = vmatpush2.bf16.msra.mxu0 0
        %2512 = vmatprep.subr.bf16.mxu0 0
        %2513 = vmatpush2.bf16.msra.mxu0 0
        %2514 = vmatprep.subr.bf16.mxu0 0
        %2515 = vmatpush2.bf16.msra.mxu0 0
        %2516 = vmatprep.subr.bf16.mxu0 0
        %2517 = vmatpush2.bf16.msra.mxu0 0
        %2518 = vmatprep.subr.bf16.mxu0 0
        %2519 = vmatpush2.bf16.msra.mxu0 0
        %2520 = vmatprep.subr.bf16.mxu0 0
        %2521 = vmatpush2.bf16.msra.mxu0 0
        %2522 = vmatprep.subr.bf16.mxu0 0
        %2523 = vmatpush2.bf16.msra.mxu0 0
        %2524 = vmatprep.mubr.bf16.mxu0 0
        %2525 = vmatmul.mubr.bf16.gmra.mxu0 %v1081
        %v2526 = vpop.f32.mrf.mxu0
        %v2527 = vadd.f32 %v2478, %v2526
        %v2528 = vpop.f32.mrf.mxu0
        %v2529 = vpop.f32.mrf.mxu0
        %v2530 = vadd.f32 %v2478, %v2529
        %v2531 = vpop.f32.mrf.mxu0
        %2532 = vdwg.mxu0
        %s2533 = scalar_lea.vmem %s946, 48
        %v2534 = vld [vmem:[%s2533] sm:$0xf]
        %v2535 = vld [vmem:[%s2533 + $0x4] sm:$0xf]
        %v2536 = vld [vmem:[%s2533 + $0x8] sm:$0xf]
        %v2537 = vld [vmem:[%s2533 + $0xc] sm:$0xf]
        %s2538 = scalar_lea.vmem %s950, 3
        %v2539 = vld [vmem:[%s2538] sm:$0x1]
        %v2541 = vlaneseq
        %v2542 = vshrl.u32 %v2541, 7
        %v2543 = vsub.s32 0, %v2542
        %v2544 = vrot.slane %v2539, %v2543
        %v2550 = vunpack.c.l.b16 %v2534
        %v2551 = vunpack.c.l.b16 %v2535
        %v2552 = vunpack.c.l.b16 %v2536
        %v2553 = vunpack.c.l.b16 %v2537
        %v2554 = vpack.c.b16 %v2551, %v2550
        %v2555 = vpack.c.b16 %v2553, %v2552
        %2558 = vmatprep.subr.bf16.mxu0 0
        %2559 = vmatpush1.bf16.msra.mxu0 0
        %2560 = vmatprep.subr.bf16.mxu0 0
        %2561 = vmatpush1.bf16.msra.mxu0 0
        %2562 = vmatprep.subr.bf16.mxu0 0
        %2563 = vmatpush1.bf16.msra.mxu0 0
        %2564 = vmatprep.subr.bf16.mxu0 0
        %2565 = vmatpush1.bf16.msra.mxu0 0
        %2566 = vmatprep.subr.bf16.mxu0 0
        %2567 = vmatpush1.bf16.msra.mxu0 0
        %2568 = vmatprep.subr.bf16.mxu0 0
        %2569 = vmatpush1.bf16.msra.mxu0 0
        %2570 = vmatprep.subr.bf16.mxu0 0
        %2571 = vmatpush1.bf16.msra.mxu0 %v2555
        %2572 = vmatprep.subr.bf16.mxu0 0
        %2573 = vmatpush1.bf16.msra.mxu0 %v2554
        %2574 = vmatprep.subr.bf16.mxu0 0
        %2575 = vmatpush2.bf16.msra.mxu0 0
        %2576 = vmatprep.subr.bf16.mxu0 0
        %2577 = vmatpush2.bf16.msra.mxu0 0
        %2578 = vmatprep.subr.bf16.mxu0 0
        %2579 = vmatpush2.bf16.msra.mxu0 0
        %2580 = vmatprep.subr.bf16.mxu0 0
        %2581 = vmatpush2.bf16.msra.mxu0 0
        %2582 = vmatprep.subr.bf16.mxu0 0
        %2583 = vmatpush2.bf16.msra.mxu0 0
        %2584 = vmatprep.subr.bf16.mxu0 0
        %2585 = vmatpush2.bf16.msra.mxu0 0
        %2586 = vmatprep.subr.bf16.mxu0 0
        %2587 = vmatpush2.bf16.msra.mxu0 0
        %2588 = vmatprep.subr.bf16.mxu0 0
        %2589 = vmatpush2.bf16.msra.mxu0 0
        %2590 = vmatprep.mubr.bf16.mxu0 0
        %2591 = vmatmul.mubr.bf16.gmra.mxu0 %v1081
        %v2592 = vpop.f32.mrf.mxu0
        %v2593 = vadd.f32 %v2544, %v2592
        %v2594 = vpop.f32.mrf.mxu0
        %v2595 = vpop.f32.mrf.mxu0
        %v2596 = vadd.f32 %v2544, %v2595
        %v2597 = vpop.f32.mrf.mxu0
        %2598 = vdwg.mxu0
        %s2599 = scalar_lea.vmem %s955, 48
        %v2600 = vld [vmem:[%s2599] sm:$0xf]
        %v2601 = vld [vmem:[%s2599 + $0x4] sm:$0xf]
        %v2602 = vld [vmem:[%s2599 + $0x8] sm:$0xf]
        %v2603 = vld [vmem:[%s2599 + $0xc] sm:$0xf]
        %s2604 = scalar_lea.vmem %s959, 3
        %v2605 = vld [vmem:[%s2604] sm:$0x1]
        %v2607 = vlaneseq
        %v2608 = vshrl.u32 %v2607, 7
        %v2609 = vsub.s32 0, %v2608
        %v2610 = vrot.slane %v2605, %v2609
        %v2616 = vunpack.c.l.b16 %v2600
        %v2617 = vunpack.c.l.b16 %v2601
        %v2618 = vunpack.c.l.b16 %v2602
        %v2619 = vunpack.c.l.b16 %v2603
        %v2620 = vpack.c.b16 %v2617, %v2616
        %v2621 = vpack.c.b16 %v2619, %v2618
        %2624 = vmatprep.subr.bf16.mxu0 0
        %2625 = vmatpush1.bf16.msra.mxu0 0
        %2626 = vmatprep.subr.bf16.mxu0 0
        %2627 = vmatpush1.bf16.msra.mxu0 0
        %2628 = vmatprep.subr.bf16.mxu0 0
        %2629 = vmatpush1.bf16.msra.mxu0 0
        %2630 = vmatprep.subr.bf16.mxu0 0
        %2631 = vmatpush1.bf16.msra.mxu0 0
        %2632 = vmatprep.subr.bf16.mxu0 0
        %2633 = vmatpush1.bf16.msra.mxu0 0
        %2634 = vmatprep.subr.bf16.mxu0 0
        %2635 = vmatpush1.bf16.msra.mxu0 0
        %2636 = vmatprep.subr.bf16.mxu0 0
        %2637 = vmatpush1.bf16.msra.mxu0 %v2621
        %2638 = vmatprep.subr.bf16.mxu0 0
        %2639 = vmatpush1.bf16.msra.mxu0 %v2620
        %2640 = vmatprep.subr.bf16.mxu0 0
        %2641 = vmatpush2.bf16.msra.mxu0 0
        %2642 = vmatprep.subr.bf16.mxu0 0
        %2643 = vmatpush2.bf16.msra.mxu0 0
        %2644 = vmatprep.subr.bf16.mxu0 0
        %2645 = vmatpush2.bf16.msra.mxu0 0
        %2646 = vmatprep.subr.bf16.mxu0 0
        %2647 = vmatpush2.bf16.msra.mxu0 0
        %2648 = vmatprep.subr.bf16.mxu0 0
        %2649 = vmatpush2.bf16.msra.mxu0 0
        %2650 = vmatprep.subr.bf16.mxu0 0
        %2651 = vmatpush2.bf16.msra.mxu0 0
        %2652 = vmatprep.subr.bf16.mxu0 0
        %2653 = vmatpush2.bf16.msra.mxu0 0
        %2654 = vmatprep.subr.bf16.mxu0 0
        %2655 = vmatpush2.bf16.msra.mxu0 0
        %2656 = vmatprep.mubr.bf16.mxu0 0
        %2657 = vmatmul.mubr.bf16.gmra.mxu0 %v1081
        %v2658 = vpop.f32.mrf.mxu0
        %v2659 = vadd.f32 %v2610, %v2658
        %v2660 = vpop.f32.mrf.mxu0
        %v2661 = vpop.f32.mrf.mxu0
        %v2662 = vadd.f32 %v2610, %v2661
        %v2663 = vpop.f32.mrf.mxu0
        %2664 = vdwg.mxu0
        %v2665 = vpack.c.bf16 %v2527, %v2527
        %v2666 = vpack.c.bf16 %v2530, %v2530
        %v2667 = vpack.c.bf16 %v2593, %v2593
        %v2668 = vpack.c.bf16 %v2596, %v2596
        %v2669 = vpack.c.bf16 %v2659, %v2659
        %v2670 = vpack.c.bf16 %v2662, %v2662
        %v2672 = vsel %vm1258, %v2665, 0
        %v2675 = vsel %vm1258, %v2667, 0
        %2677 = vmatprep.subr.bf16.mxu0 0
        %2678 = vmatpush1.bf16.xpose.msra.mxu0 0
        %2679 = vmatprep.subr.bf16.mxu0 0
        %2680 = vmatpush1.bf16.xpose.msra.mxu0 0
        %2681 = vmatprep.subr.bf16.mxu0 0
        %2682 = vmatpush1.bf16.xpose.msra.mxu0 0
        %2683 = vmatprep.subr.bf16.mxu0 0
        %2684 = vmatpush1.bf16.xpose.msra.mxu0 0
        %2685 = vmatprep.subr.bf16.mxu0 0
        %2686 = vmatpush1.bf16.xpose.msra.mxu0 0
        %2687 = vmatprep.subr.bf16.mxu0 0
        %2688 = vmatpush1.bf16.xpose.msra.mxu0 0
        %2689 = vmatprep.subr.bf16.mxu0 0
        %2690 = vmatpush1.bf16.xpose.msra.mxu0 0
        %2691 = vmatprep.subr.bf16.mxu0 0
        %2692 = vmatpush1.bf16.xpose.msra.mxu0 %v2675
        %2693 = vmatprep.subr.bf16.mxu0 0
        %2694 = vmatpush2.bf16.xpose.msra.mxu0 0
        %2695 = vmatprep.subr.bf16.mxu0 0
        %2696 = vmatpush2.bf16.xpose.msra.mxu0 0
        %2697 = vmatprep.subr.bf16.mxu0 0
        %2698 = vmatpush2.bf16.xpose.msra.mxu0 0
        %2699 = vmatprep.subr.bf16.mxu0 0
        %2700 = vmatpush2.bf16.xpose.msra.mxu0 0
        %2701 = vmatprep.subr.bf16.mxu0 0
        %2702 = vmatpush2.bf16.xpose.msra.mxu0 0
        %2703 = vmatprep.subr.bf16.mxu0 0
        %2704 = vmatpush2.bf16.xpose.msra.mxu0 0
        %2705 = vmatprep.subr.bf16.mxu0 0
        %2706 = vmatpush2.bf16.xpose.msra.mxu0 0
        %2707 = vmatprep.subr.bf16.mxu0 0
        %2708 = vmatpush2.bf16.xpose.msra.mxu0 0
        %2709 = vmatprep.mubr.bf16.mxu0 0
        %2710 = vmatmul.mubr.bf16.gmra.mxu0 %v2672
        %v2711 = vpop.f32.mrf.mxu0
        %v2712 = vadd.f32 0.0, %v2711
        %v2713 = vpop.f32.mrf.mxu0
        %v2714 = vpop.f32.mrf.mxu0
        %v2715 = vpop.f32.mrf.mxu0
        %2716 = vdwg.mxu0
        %v2718 = vsel %vm1258, %v2666, 0
        %v2721 = vsel %vm1258, %v2668, 0
        %2723 = vmatprep.subr.bf16.mxu0 0
        %2724 = vmatpush1.bf16.xpose.msra.mxu0 0
        %2725 = vmatprep.subr.bf16.mxu0 0
        %2726 = vmatpush1.bf16.xpose.msra.mxu0 0
        %2727 = vmatprep.subr.bf16.mxu0 0
        %2728 = vmatpush1.bf16.xpose.msra.mxu0 0
        %2729 = vmatprep.subr.bf16.mxu0 0
        %2730 = vmatpush1.bf16.xpose.msra.mxu0 0
        %2731 = vmatprep.subr.bf16.mxu0 0
        %2732 = vmatpush1.bf16.xpose.msra.mxu0 0
        %2733 = vmatprep.subr.bf16.mxu0 0
        %2734 = vmatpush1.bf16.xpose.msra.mxu0 0
        %2735 = vmatprep.subr.bf16.mxu0 0
        %2736 = vmatpush1.bf16.xpose.msra.mxu0 0
        %2737 = vmatprep.subr.bf16.mxu0 0
        %2738 = vmatpush1.bf16.xpose.msra.mxu0 %v2721
        %2739 = vmatprep.subr.bf16.mxu0 0
        %2740 = vmatpush2.bf16.xpose.msra.mxu0 0
        %2741 = vmatprep.subr.bf16.mxu0 0
        %2742 = vmatpush2.bf16.xpose.msra.mxu0 0
        %2743 = vmatprep.subr.bf16.mxu0 0
        %2744 = vmatpush2.bf16.xpose.msra.mxu0 0
        %2745 = vmatprep.subr.bf16.mxu0 0
        %2746 = vmatpush2.bf16.xpose.msra.mxu0 0
        %2747 = vmatprep.subr.bf16.mxu0 0
        %2748 = vmatpush2.bf16.xpose.msra.mxu0 0
        %2749 = vmatprep.subr.bf16.mxu0 0
        %2750 = vmatpush2.bf16.xpose.msra.mxu0 0
        %2751 = vmatprep.subr.bf16.mxu0 0
        %2752 = vmatpush2.bf16.xpose.msra.mxu0 0
        %2753 = vmatprep.subr.bf16.mxu0 0
        %2754 = vmatpush2.bf16.xpose.msra.mxu0 0
        %2755 = vmatprep.mubr.bf16.mxu0 0
        %2756 = vmatmul.mubr.bf16.gmra.mxu0 %v2718
        %v2757 = vpop.f32.mrf.mxu0
        %v2758 = vadd.f32 0.0, %v2757
        %v2759 = vpop.f32.mrf.mxu0
        %v2760 = vpop.f32.mrf.mxu0
        %v2761 = vpop.f32.mrf.mxu0
        %2762 = vdwg.mxu0
        %v2763 = vmul.f32 %v2712, 0.35355338
        %v2764 = vmul.f32 %v2758, 0.35355338
        %v2765 = vadd.f32 %v2763, %v1358
        %v2766 = vadd.f32 %v2764, %v1362
        %v2767 = vsel %vm1258, %v2765, -inf
        %2768 = vmax.xlane.f32.xlu0 %v2767
        %v2769 = vpop.xlane.xlu0 %2768
        %v2770 = vsel %vm1258, %v2766, -inf
        %2771 = vmax.xlane.f32.xlu0 %v2770
        %v2772 = vpop.xlane.xlu0 %2771
        %v2773 = vsub.f32 %v2765, %v2769
        %v2774 = vsub.f32 %v2766, %v2772
        %v2775 = vmul.f32 %v2773, 1.442695
        %v2776 = vpow.pop %v2775
        %v2777 = vmul.f32 %v2774, 1.442695
        %v2778 = vpow.pop %v2777
        %v2779 = vsel %vm1258, %v2776, 0.0
        %2780 = vadd.xlane.f32.xlu0 %v2779
        %v2781 = vpop.xlane.xlu0 %2780
        %v2782 = vsel %vm1258, %v2778, 0.0
        %2783 = vadd.xlane.f32.xlu0 %v2782
        %v2784 = vpop.xlane.xlu0 %2783
        %v2785 = vrcp.pop %v2781
        %v2786 = vrcp.pop %v2784
        %v2787 = vmul.f32 %v2776, %v2785
        %v2788 = vmul.f32 %v2778, %v2786
        %v2789 = vpack.c.bf16 %v2787, %v2787
        %v2790 = vpack.c.bf16 %v2788, %v2788
        %v2792 = vsel %vm1258, %v2789, 0
        %v2795 = vsel %vm1394, %v2669, 0
        %2797 = vmatprep.subr.bf16.mxu0 0
        %2798 = vmatpush1.bf16.msra.mxu0 0
        %2799 = vmatprep.subr.bf16.mxu0 0
        %2800 = vmatpush1.bf16.msra.mxu0 0
        %2801 = vmatprep.subr.bf16.mxu0 0
        %2802 = vmatpush1.bf16.msra.mxu0 0
        %2803 = vmatprep.subr.bf16.mxu0 0
        %2804 = vmatpush1.bf16.msra.mxu0 0
        %2805 = vmatprep.subr.bf16.mxu0 0
        %2806 = vmatpush1.bf16.msra.mxu0 0
        %2807 = vmatprep.subr.bf16.mxu0 0
        %2808 = vmatpush1.bf16.msra.mxu0 0
        %2809 = vmatprep.subr.bf16.mxu0 0
        %2810 = vmatpush1.bf16.msra.mxu0 0
        %2811 = vmatprep.subr.bf16.mxu0 0
        %2812 = vmatpush1.bf16.msra.mxu0 %v2795
        %2813 = vmatprep.subr.bf16.mxu0 0
        %2814 = vmatpush2.bf16.msra.mxu0 0
        %2815 = vmatprep.subr.bf16.mxu0 0
        %2816 = vmatpush2.bf16.msra.mxu0 0
        %2817 = vmatprep.subr.bf16.mxu0 0
        %2818 = vmatpush2.bf16.msra.mxu0 0
        %2819 = vmatprep.subr.bf16.mxu0 0
        %2820 = vmatpush2.bf16.msra.mxu0 0
        %2821 = vmatprep.subr.bf16.mxu0 0
        %2822 = vmatpush2.bf16.msra.mxu0 0
        %2823 = vmatprep.subr.bf16.mxu0 0
        %2824 = vmatpush2.bf16.msra.mxu0 0
        %2825 = vmatprep.subr.bf16.mxu0 0
        %2826 = vmatpush2.bf16.msra.mxu0 0
        %2827 = vmatprep.subr.bf16.mxu0 0
        %2828 = vmatpush2.bf16.msra.mxu0 0
        %2829 = vmatprep.mubr.bf16.mxu0 0
        %2830 = vmatmul.mubr.bf16.gmra.mxu0 %v2792
        %v2831 = vpop.f32.mrf.mxu0
        %v2832 = vadd.f32 0.0, %v2831
        %v2833 = vpop.f32.mrf.mxu0
        %v2834 = vpop.f32.mrf.mxu0
        %v2835 = vpop.f32.mrf.mxu0
        %2836 = vdwg.mxu0
        %v2838 = vsel %vm1258, %v2790, 0
        %v2841 = vsel %vm1394, %v2670, 0
        %2843 = vmatprep.subr.bf16.mxu0 0
        %2844 = vmatpush1.bf16.msra.mxu0 0
        %2845 = vmatprep.subr.bf16.mxu0 0
        %2846 = vmatpush1.bf16.msra.mxu0 0
        %2847 = vmatprep.subr.bf16.mxu0 0
        %2848 = vmatpush1.bf16.msra.mxu0 0
        %2849 = vmatprep.subr.bf16.mxu0 0
        %2850 = vmatpush1.bf16.msra.mxu0 0
        %2851 = vmatprep.subr.bf16.mxu0 0
        %2852 = vmatpush1.bf16.msra.mxu0 0
        %2853 = vmatprep.subr.bf16.mxu0 0
        %2854 = vmatpush1.bf16.msra.mxu0 0
        %2855 = vmatprep.subr.bf16.mxu0 0
        %2856 = vmatpush1.bf16.msra.mxu0 0
        %2857 = vmatprep.subr.bf16.mxu0 0
        %2858 = vmatpush1.bf16.msra.mxu0 %v2841
        %2859 = vmatprep.subr.bf16.mxu0 0
        %2860 = vmatpush2.bf16.msra.mxu0 0
        %2861 = vmatprep.subr.bf16.mxu0 0
        %2862 = vmatpush2.bf16.msra.mxu0 0
        %2863 = vmatprep.subr.bf16.mxu0 0
        %2864 = vmatpush2.bf16.msra.mxu0 0
        %2865 = vmatprep.subr.bf16.mxu0 0
        %2866 = vmatpush2.bf16.msra.mxu0 0
        %2867 = vmatprep.subr.bf16.mxu0 0
        %2868 = vmatpush2.bf16.msra.mxu0 0
        %2869 = vmatprep.subr.bf16.mxu0 0
        %2870 = vmatpush2.bf16.msra.mxu0 0
        %2871 = vmatprep.subr.bf16.mxu0 0
        %2872 = vmatpush2.bf16.msra.mxu0 0
        %2873 = vmatprep.subr.bf16.mxu0 0
        %2874 = vmatpush2.bf16.msra.mxu0 0
        %2875 = vmatprep.mubr.bf16.mxu0 0
        %2876 = vmatmul.mubr.bf16.gmra.mxu0 %v2838
        %v2877 = vpop.f32.mrf.mxu0
        %v2878 = vadd.f32 0.0, %v2877
        %v2879 = vpop.f32.mrf.mxu0
        %v2880 = vpop.f32.mrf.mxu0
        %v2881 = vpop.f32.mrf.mxu0
        %2882 = vdwg.mxu0
        %v2883 = vpack.c.bf16 %v2878, %v2832
        %s2884 = scalar_lea.vmem %s964, 12
        %v2885 = vld [vmem:[%s2884] sm:$0xf]
        %v2887 = vsel %vm1258, %v2883, 0
        %v2890 = vsel %vm1394, %v2885, 0
        %2892 = vmatprep.subr.bf16.mxu0 0
        %2893 = vmatpush1.bf16.msra.mxu0 0
        %2894 = vmatprep.subr.bf16.mxu0 0
        %2895 = vmatpush1.bf16.msra.mxu0 0
        %2896 = vmatprep.subr.bf16.mxu0 0
        %2897 = vmatpush1.bf16.msra.mxu0 0
        %2898 = vmatprep.subr.bf16.mxu0 0
        %2899 = vmatpush1.bf16.msra.mxu0 0
        %2900 = vmatprep.subr.bf16.mxu0 0
        %2901 = vmatpush1.bf16.msra.mxu0 0
        %2902 = vmatprep.subr.bf16.mxu0 0
        %2903 = vmatpush1.bf16.msra.mxu0 0
        %2904 = vmatprep.subr.bf16.mxu0 0
        %2905 = vmatpush1.bf16.msra.mxu0 0
        %2906 = vmatprep.subr.bf16.mxu0 0
        %2907 = vmatpush1.bf16.msra.mxu0 %v2890
        %2908 = vmatprep.subr.bf16.mxu0 0
        %2909 = vmatpush2.bf16.msra.mxu0 0
        %2910 = vmatprep.subr.bf16.mxu0 0
        %2911 = vmatpush2.bf16.msra.mxu0 0
        %2912 = vmatprep.subr.bf16.mxu0 0
        %2913 = vmatpush2.bf16.msra.mxu0 0
        %2914 = vmatprep.subr.bf16.mxu0 0
        %2915 = vmatpush2.bf16.msra.mxu0 0
        %2916 = vmatprep.subr.bf16.mxu0 0
        %2917 = vmatpush2.bf16.msra.mxu0 0
        %2918 = vmatprep.subr.bf16.mxu0 0
        %2919 = vmatpush2.bf16.msra.mxu0 0
        %2920 = vmatprep.subr.bf16.mxu0 0
        %2921 = vmatpush2.bf16.msra.mxu0 0
        %2922 = vmatprep.subr.bf16.mxu0 0
        %2923 = vmatpush2.bf16.msra.mxu0 0
        %2924 = vmatprep.mubr.bf16.mxu0 0
        %2925 = vmatmul.mubr.bf16.gmra.mxu0 %v2887
        %v2926 = vpop.f32.mrf.mxu0
        %v2927 = vadd.f32 0.0, %v2926
        %v2928 = vpop.f32.mrf.mxu0
        %v2929 = vpop.f32.mrf.mxu0
        %v2930 = vadd.f32 0.0, %v2929
        %v2931 = vpop.f32.mrf.mxu0
        %2932 = vdwg.mxu0
        %v2933 = vadd.f32 %v2465, %v2927
        %v2934 = vadd.f32 %v2466, %v2930
        %v2935 = vld [vmem:[%s967] sm:$0x1]
        %v2937 = vlaneseq
        %v2938 = vshrl.u32 %v2937, 7
        %v2939 = vsub.s32 0, %v2938
        %v2940 = vrot.slane %v2935, %v2939
        %v2942 = vadd.f32 %v2933, %v2940
        %v2943 = vadd.f32 %v2934, %v2940
        %v2944 = vadd.f32 %v2942, %v1051
        %v2945 = vadd.f32 %v2943, %v1052
        %v2946 = vld [vmem:[%s970] sm:$0x1]
        %v2947 = vld [vmem:[%s973] sm:$0x1]
        %v2948 = vsel %vm1079, %v2944, 0.0
        %2949 = vadd.xlane.f32.xlu0 %v2948
        %v2950 = vpop.xlane.xlu0 %2949
        %v2951 = vsel %vm1079, %v2945, 0.0
        %2952 = vadd.xlane.f32.xlu0 %v2951
        %v2953 = vpop.xlane.xlu0 %2952
        %v2954 = vrcp.pop 32.0
        %v2955 = vmul.f32 %v2950, %v2954
        %v2956 = vmul.f32 %v2953, %v2954
        %v2957 = vsub.f32 %v2944, %v2955
        %v2958 = vsub.f32 %v2945, %v2956
        %v2959 = vmul.f32 %v2957, %v2957
        %v2960 = vmul.f32 %v2958, %v2958
        %v2961 = vsel %vm1079, %v2959, 0.0
        %2962 = vadd.xlane.f32.xlu0 %v2961
        %v2963 = vpop.xlane.xlu0 %2962
        %v2964 = vsel %vm1079, %v2960, 0.0
        %2965 = vadd.xlane.f32.xlu0 %v2964
        %v2966 = vpop.xlane.xlu0 %2965
        %v2967 = vmul.f32 %v2963, %v2954
        %v2968 = vmul.f32 %v2966, %v2954
        %v2969 = vadd.f32 %v2967, 1e-07
        %v2970 = vadd.f32 %v2968, 1e-07
        %v2971 = vrsqrt.pop %v2969
        %v2972 = vrsqrt.pop %v2970
        %v2973 = vmul.f32 %v2957, %v2971
        %v2974 = vmul.f32 %v2958, %v2972
        %v2976 = vlaneseq
        %v2977 = vshrl.u32 %v2976, 7
        %v2978 = vsub.s32 0, %v2977
        %v2979 = vrot.slane %v2946, %v2978
        %v2981 = vmul.f32 %v2973, %v2979
        %v2982 = vmul.f32 %v2974, %v2979
        %v2984 = vlaneseq
        %v2985 = vshrl.u32 %v2984, 7
        %v2986 = vsub.s32 0, %v2985
        %v2987 = vrot.slane %v2947, %v2986
        %v2989 = vadd.f32 %v2981, %v2987
        %v2990 = vadd.f32 %v2982, %v2987
        %v2991 = vpack.c.bf16 %v2990, %v2989
        %v2992 = vld [vmem:[%s978] sm:$0xf]
        %v2993 = vld [vmem:[%s978 + $0x4] sm:$0xf]
        %v2994 = vld [vmem:[%s978 + $0x8] sm:$0xf]
        %v2995 = vld [vmem:[%s978 + $0xc] sm:$0xf]
        %v2996 = vld [vmem:[%s981] sm:$0x1]
        %v2998 = vlaneseq
        %v2999 = vshrl.u32 %v2998, 7
        %v3000 = vsub.s32 0, %v2999
        %v3001 = vrot.slane %v2996, %v3000
        %v3007 = vunpack.c.l.b16 %v2992
        %v3008 = vunpack.c.l.b16 %v2993
        %v3009 = vunpack.c.l.b16 %v2994
        %v3010 = vunpack.c.l.b16 %v2995
        %v3011 = vpack.c.b16 %v3008, %v3007
        %v3012 = vpack.c.b16 %v3010, %v3009
        %v3016 = vsel %vm1079, %v2991, 0
        %3018 = vmatprep.subr.bf16.mxu0 0
        %3019 = vmatpush1.bf16.msra.mxu0 0
        %3020 = vmatprep.subr.bf16.mxu0 0
        %3021 = vmatpush1.bf16.msra.mxu0 0
        %3022 = vmatprep.subr.bf16.mxu0 0
        %3023 = vmatpush1.bf16.msra.mxu0 0
        %3024 = vmatprep.subr.bf16.mxu0 0
        %3025 = vmatpush1.bf16.msra.mxu0 0
        %3026 = vmatprep.subr.bf16.mxu0 0
        %3027 = vmatpush1.bf16.msra.mxu0 0
        %3028 = vmatprep.subr.bf16.mxu0 0
        %3029 = vmatpush1.bf16.msra.mxu0 0
        %3030 = vmatprep.subr.bf16.mxu0 0
        %3031 = vmatpush1.bf16.msra.mxu0 %v3012
        %3032 = vmatprep.subr.bf16.mxu0 0
        %3033 = vmatpush1.bf16.msra.mxu0 %v3011
        %3034 = vmatprep.subr.bf16.mxu0 0
        %3035 = vmatpush2.bf16.msra.mxu0 0
        %3036 = vmatprep.subr.bf16.mxu0 0
        %3037 = vmatpush2.bf16.msra.mxu0 0
        %3038 = vmatprep.subr.bf16.mxu0 0
        %3039 = vmatpush2.bf16.msra.mxu0 0
        %3040 = vmatprep.subr.bf16.mxu0 0
        %3041 = vmatpush2.bf16.msra.mxu0 0
        %3042 = vmatprep.subr.bf16.mxu0 0
        %3043 = vmatpush2.bf16.msra.mxu0 0
        %3044 = vmatprep.subr.bf16.mxu0 0
        %3045 = vmatpush2.bf16.msra.mxu0 0
        %3046 = vmatprep.subr.bf16.mxu0 0
        %3047 = vmatpush2.bf16.msra.mxu0 0
        %3048 = vmatprep.subr.bf16.mxu0 0
        %3049 = vmatpush2.bf16.msra.mxu0 0
        %3050 = vmatprep.mubr.bf16.mxu0 0
        %3051 = vmatmul.mubr.bf16.gmra.mxu0 %v3016
        %v3052 = vpop.f32.mrf.mxu0
        %v3053 = vadd.f32 %v3001, %v3052
        %v3054 = vpop.f32.mrf.mxu0
        %v3055 = vpop.f32.mrf.mxu0
        %v3056 = vadd.f32 %v3001, %v3055
        %v3057 = vpop.f32.mrf.mxu0
        %3058 = vdwg.mxu0
        %v3059 = vmul.f32 %v3053, %v3053
        %v3060 = vmul.f32 %v3056, %v3056
        %v3061 = vmul.f32 %v3053, %v3059
        %v3062 = vmul.f32 %v3056, %v3060
        %v3063 = vmul.f32 %v3061, 0.044715
        %v3064 = vmul.f32 %v3062, 0.044715
        %v3065 = vadd.f32 %v3053, %v3063
        %v3066 = vadd.f32 %v3056, %v3064
        %v3067 = vmul.f32 %v3065, 0.7978846
        %v3068 = vmul.f32 %v3066, 0.7978846
        %v3069 = vtanh.pop %v3067
        %v3070 = vtanh.pop %v3068
        %v3071 = vadd.f32 %v3069, 1.0
        %v3072 = vadd.f32 %v3070, 1.0
        %v3073 = vmul.f32 %v3071, 0.5
        %v3074 = vmul.f32 %v3072, 0.5
        %v3075 = vmul.f32 %v3053, %v3073
        %v3076 = vmul.f32 %v3056, %v3074
        %v3077 = vpack.c.bf16 %v3076, %v3075
        %v3078 = vld [vmem:[%s986] sm:$0xf]
        %v3079 = vld [vmem:[%s986 + $0x4] sm:$0xf]
        %v3080 = vld [vmem:[%s986 + $0x8] sm:$0xf]
        %v3081 = vld [vmem:[%s986 + $0xc] sm:$0xf]
        %v3082 = vld [vmem:[%s986 + $0x10] sm:$0xf]
        %v3083 = vld [vmem:[%s986 + $0x14] sm:$0xf]
        %v3084 = vld [vmem:[%s986 + $0x18] sm:$0xf]
        %v3085 = vld [vmem:[%s986 + $0x1c] sm:$0xf]
        %v3086 = vld [vmem:[%s989] sm:$0x1]
        %v3088 = vlaneseq
        %v3089 = vshrl.u32 %v3088, 7
        %v3090 = vsub.s32 0, %v3089
        %v3091 = vrot.slane %v3086, %v3090
        %v3101 = vunpack.c.l.b16 %v3078
        %v3102 = vunpack.c.l.b16 %v3079
        %v3103 = vunpack.c.l.b16 %v3080
        %v3104 = vunpack.c.l.b16 %v3081
        %v3105 = vunpack.c.l.b16 %v3082
        %v3106 = vunpack.c.l.b16 %v3083
        %v3107 = vunpack.c.l.b16 %v3084
        %v3108 = vunpack.c.l.b16 %v3085
        %v3109 = vpack.c.b16 %v3102, %v3101
        %v3110 = vpack.c.b16 %v3104, %v3103
        %v3111 = vpack.c.b16 %v3106, %v3105
        %v3112 = vpack.c.b16 %v3108, %v3107
        %vm3117 = vcmask 523264
        %v3119 = vsel %vm3117, %v3077, 0
        %3121 = vmatprep.subr.bf16.mxu0 0
        %3122 = vmatpush1.bf16.msra.mxu0 0
        %3123 = vmatprep.subr.bf16.mxu0 0
        %3124 = vmatpush1.bf16.msra.mxu0 0
        %3125 = vmatprep.subr.bf16.mxu0 0
        %3126 = vmatpush1.bf16.msra.mxu0 0
        %3127 = vmatprep.subr.bf16.mxu0 0
        %3128 = vmatpush1.bf16.msra.mxu0 0
        %3129 = vmatprep.subr.bf16.mxu0 0
        %3130 = vmatpush1.bf16.msra.mxu0 %v3112
        %3131 = vmatprep.subr.bf16.mxu0 0
        %3132 = vmatpush1.bf16.msra.mxu0 %v3111
        %3133 = vmatprep.subr.bf16.mxu0 0
        %3134 = vmatpush1.bf16.msra.mxu0 %v3110
        %3135 = vmatprep.subr.bf16.mxu0 0
        %3136 = vmatpush1.bf16.msra.mxu0 %v3109
        %3137 = vmatprep.subr.bf16.mxu0 0
        %3138 = vmatpush2.bf16.msra.mxu0 0
        %3139 = vmatprep.subr.bf16.mxu0 0
        %3140 = vmatpush2.bf16.msra.mxu0 0
        %3141 = vmatprep.subr.bf16.mxu0 0
        %3142 = vmatpush2.bf16.msra.mxu0 0
        %3143 = vmatprep.subr.bf16.mxu0 0
        %3144 = vmatpush2.bf16.msra.mxu0 0
        %3145 = vmatprep.subr.bf16.mxu0 0
        %3146 = vmatpush2.bf16.msra.mxu0 0
        %3147 = vmatprep.subr.bf16.mxu0 0
        %3148 = vmatpush2.bf16.msra.mxu0 0
        %3149 = vmatprep.subr.bf16.mxu0 0
        %3150 = vmatpush2.bf16.msra.mxu0 0
        %3151 = vmatprep.subr.bf16.mxu0 0
        %3152 = vmatpush2.bf16.msra.mxu0 0
        %3153 = vmatprep.mubr.bf16.mxu0 0
        %3154 = vmatmul.mubr.bf16.gmra.mxu0 %v3119
        %v3155 = vpop.f32.mrf.mxu0
        %v3156 = vadd.f32 %v3091, %v3155
        %v3157 = vpop.f32.mrf.mxu0
        %v3158 = vpop.f32.mrf.mxu0
        %v3159 = vadd.f32 %v3091, %v3158
        %v3160 = vpop.f32.mrf.mxu0
        %3161 = vdwg.mxu0
        %v3162 = vadd.f32 %v3156, %v2989
        %v3163 = vadd.f32 %v3159, %v2990
        %v3164 = vld [vmem:[%s992] sm:$0x1]
        %v3165 = vld [vmem:[%s995] sm:$0x1]
        %v3166 = vsel %vm1079, %v3162, 0.0
        %3167 = vadd.xlane.f32.xlu0 %v3166
        %v3168 = vpop.xlane.xlu0 %3167
        %v3169 = vsel %vm1079, %v3163, 0.0
        %3170 = vadd.xlane.f32.xlu0 %v3169
        %v3171 = vpop.xlane.xlu0 %3170
        %v3172 = vmul.f32 %v3168, %v2954
        %v3173 = vmul.f32 %v3171, %v2954
        %v3174 = vsub.f32 %v3162, %v3172
        %v3175 = vsub.f32 %v3163, %v3173
        %v3176 = vmul.f32 %v3174, %v3174
        %v3177 = vmul.f32 %v3175, %v3175
        %v3178 = vsel %vm1079, %v3176, 0.0
        %3179 = vadd.xlane.f32.xlu0 %v3178
        %v3180 = vpop.xlane.xlu0 %3179
        %v3181 = vsel %vm1079, %v3177, 0.0
        %3182 = vadd.xlane.f32.xlu0 %v3181
        %v3183 = vpop.xlane.xlu0 %3182
        %v3184 = vmul.f32 %v3180, %v2954
        %v3185 = vmul.f32 %v3183, %v2954
        %v3186 = vadd.f32 %v3184, 1e-07
        %v3187 = vadd.f32 %v3185, 1e-07
        %v3188 = vrsqrt.pop %v3186
        %v3189 = vrsqrt.pop %v3187
        %v3190 = vmul.f32 %v3174, %v3188
        %v3191 = vmul.f32 %v3175, %v3189
        %v3193 = vlaneseq
        %v3194 = vshrl.u32 %v3193, 7
        %v3195 = vsub.s32 0, %v3194
        %v3196 = vrot.slane %v3164, %v3195
        %v3198 = vmul.f32 %v3190, %v3196
        %v3199 = vmul.f32 %v3191, %v3196
        %v3201 = vlaneseq
        %v3202 = vshrl.u32 %v3201, 7
        %v3203 = vsub.s32 0, %v3202
        %v3204 = vrot.slane %v3165, %v3203
        %v3206 = vadd.f32 %v3198, %v3204
        %v3207 = vadd.f32 %v3199, %v3204
        %3208 = vst.msk [vmem:[#allocation2] sm:$0xff] %vm1079, %v3206
        %3209 = vst.msk [vmem:[#allocation2 + $0x8] sm:$0xff] %vm1079, %v3207
        %p3210 = scmp.eq.s32.totalorder %s39, 1
        // Predicated region
        $region117: #{deberta_forward.1} parent=111 // pred_check
          %p3211 = pneg %p3210
        $region118: #{deberta_forward.1} parent=111 // pred_check_branch
          %3213 = sbr.rel (%p3211) target = $region120
        $region119: #{deberta_forward.1} parent=111 // pred_region
          %3214 = vst.msk [vmem:[#allocation3] sm:$0xff] %vm1079, %v3206
          %3215 = vst.msk [vmem:[#allocation3 + $0x8] sm:$0xff] %vm1079, %v3207
          %v3216 = vld [vmem:[%s20] sm:$0xff]
          %v3217 = vld [vmem:[%s20 + $0x8] sm:$0xff]
          %v3218 = vld [vmem:[%s20 + $0x10] sm:$0xff]
          %v3219 = vld [vmem:[%s20 + $0x18] sm:$0xff]
          %v3220 = vld [vmem:[%s21] sm:$0x1]
          %v3222 = vlaneseq
          %v3223 = vshrl.u32 %v3222, 7
          %v3224 = vsub.s32 0, %v3223
          %v3225 = vrot.slane %v3220, %v3224
          %v3229 = vrot.slane %v3207, 7
          %vm3230 = vcmask 1041409
          %v3231 = vsel %vm3230, %v3229, %v3206
          %v3232 = vsel %vm1079, %v3231, 0
          %3234 = vmatprep.subr.mxu0 0.0
          %3235 = vmatpush1.msra.mxu0 0.0
          %3236 = vmatprep.subr.mxu0 0.0
          %3237 = vmatpush1.msra.mxu0 0.0
          %3238 = vmatprep.subr.mxu0 0.0
          %3239 = vmatpush1.msra.mxu0 0.0
          %3240 = vmatprep.subr.mxu0 0.0
          %3241 = vmatpush1.msra.mxu0 0.0
          %3242 = vmatprep.subr.mxu0 0.0
          %3243 = vmatpush1.msra.mxu0 0.0
          %3244 = vmatprep.subr.mxu0 0.0
          %3245 = vmatpush1.msra.mxu0 0.0
          %3246 = vmatprep.subr.mxu0 0.0
          %3247 = vmatpush1.msra.mxu0 0.0
          %3248 = vmatprep.subr.mxu0 0.0
          %3249 = vmatpush1.msra.mxu0 0.0
          %3250 = vmatprep.subr.mxu0 0.0
          %3251 = vmatpush1.msra.mxu0 0.0
          %3252 = vmatprep.subr.mxu0 0.0
          %3253 = vmatpush1.msra.mxu0 0.0
          %3254 = vmatprep.subr.mxu0 0.0
          %3255 = vmatpush1.msra.mxu0 0.0
          %3256 = vmatprep.subr.mxu0 0.0
          %3257 = vmatpush1.msra.mxu0 0.0
          %3258 = vmatprep.subr.mxu0 0.0
          %3259 = vmatpush1.msra.mxu0 %v3219
          %3260 = vmatprep.subr.mxu0 0.0
          %3261 = vmatpush1.msra.mxu0 %v3218
          %3262 = vmatprep.subr.mxu0 0.0
          %3263 = vmatpush1.msra.mxu0 %v3217
          %3264 = vmatprep.subr.mxu0 0.0
          %3265 = vmatpush1.msra.mxu0 %v3216
          %3266 = vmatprep.subr.mxu0 0.0
          %3267 = vmatpush2.msra.mxu0 0.0
          %3268 = vmatprep.subr.mxu0 0.0
          %3269 = vmatpush2.msra.mxu0 0.0
          %3270 = vmatprep.subr.mxu0 0.0
          %3271 = vmatpush2.msra.mxu0 0.0
          %3272 = vmatprep.subr.mxu0 0.0
          %3273 = vmatpush2.msra.mxu0 0.0
          %3274 = vmatprep.subr.mxu0 0.0
          %3275 = vmatpush2.msra.mxu0 0.0
          %3276 = vmatprep.subr.mxu0 0.0
          %3277 = vmatpush2.msra.mxu0 0.0
          %3278 = vmatprep.subr.mxu0 0.0
          %3279 = vmatpush2.msra.mxu0 0.0
          %3280 = vmatprep.subr.mxu0 0.0
          %3281 = vmatpush2.msra.mxu0 0.0
          %3282 = vmatprep.subr.mxu0 0.0
          %3283 = vmatpush2.msra.mxu0 0.0
          %3284 = vmatprep.subr.mxu0 0.0
          %3285 = vmatpush2.msra.mxu0 0.0
          %3286 = vmatprep.subr.mxu0 0.0
          %3287 = vmatpush2.msra.mxu0 0.0
          %3288 = vmatprep.subr.mxu0 0.0
          %3289 = vmatpush2.msra.mxu0 0.0
          %3290 = vmatprep.subr.mxu0 0.0
          %3291 = vmatpush2.msra.mxu0 0.0
          %3292 = vmatprep.subr.mxu0 0.0
          %3293 = vmatpush2.msra.mxu0 0.0
          %3294 = vmatprep.subr.mxu0 0.0
          %3295 = vmatpush2.msra.mxu0 0.0
          %3296 = vmatprep.subr.mxu0 0.0
          %3297 = vmatpush2.msra.mxu0 0.0
          %3298 = vmatprep.mubr.f32.mxu0 0.0
          %3299 = vmatmul.mubr.f32.gmra.mxu0 %v3232
          %v3300 = vpop.f32.mrf.mxu0
          %v3301 = vadd.f32 %v3225, %v3300
          %v3302 = vpop.f32.mrf.mxu0
          %3303 = vdwg.mxu0
          %vm3304 = vcmask 17408
          %3305 = vst.msk [vmem:[#allocation5] sm:$0x3] %vm3304, %v3301
          %v3306 = vsel %vm3304, %v3301, -inf
          %3307 = vmax.xlane.f32.xlu0 %v3306
          %v3308 = vpop.xlane.xlu0 %3307
          %v3309 = vsub.f32 %v3301, %v3308
          %v3310 = vmul.f32 %v3309, 1.442695
          %v3311 = vpow.pop %v3310
          %v3312 = vsel %vm3304, %v3311, 0.0
          %3313 = vadd.xlane.f32.xlu0 %v3312
          %v3314 = vpop.xlane.xlu0 %3313
          %v3315 = vlog2.pop %v3314
          %v3316 = vmul.f32 %v3315, 0.6931472
          %v3317 = vadd.f32 %v3316, %v3308
          %v3318 = vsub.f32 %v3301, %v3317
          %v3319 = vld [vmem:[%s22] sm:$0x3]
          %v3320 = vmul.f32 %v3319, %v3318
          %v3321 = vsel %vm3304, %v3320, 0.0
          %3322 = vadd.xlane.f32.xlu0 %v3321
          %v3323 = vpop.xlane.xlu0 %3322
          %v3324 = vsub.f32 0.0, %v3323
          %vm3325 = vcmask 1024
          %v3326 = vsel %vm3325, %v3324, 0.0
          %3327 = vadd.xlane.f32.xlu0 %v3326
          %v3328 = vpop.xlane.xlu0 %3327
          %v3329 = vrot.slane %v3328, 4
          %v3330 = vadd.f32 %v3328, %v3329
          %v3331 = vrot.slane %v3330, 2
          %v3332 = vadd.f32 %v3330, %v3331
          %v3333 = vrot.slane %v3332, 1
          %v3334 = vadd.f32 %v3332, %v3333
          %s3335 = vtos %v3334
          %v3336 = vstv %s3335
          %v3337 = vrcp.pop 2.0
          %v3338 = vmul.f32 %v3336, %v3337
          %vm3339 = vcmask 0
          %3340 = vst.msk [vmem:[#allocation7] sm:$0x1] %vm3339, %v3338
        $region120: #{deberta_forward.1} parent=111 // pred_fallthru
          _
        // Predicated region
        $region121: #{deberta_forward.1} parent=111 // pred_check
          %p3341 = pneg %p615
        $region122: #{deberta_forward.1} parent=111 // pred_check_branch
          %3343 = sbr.rel (%p3341) target = $region124
        $region123: #{deberta_forward.1} parent=111 // pred_region
          %s3345 = ssub.s32 256, 256
          %3346 = vsyncadd [#allocation4], %s3345
          %s3347 = sshll.u32 [#allocation3], 4
          %s3348 = int_to_ptr.vmem [resolvable:$true] %s3347
          %3353 = dma.vmem_to_hbm [thread:$0]  %s3348, 256, %s23, [#allocation4], 128, 128, 8
        $region124: #{deberta_forward.1} parent=111 // pred_fallthru
          _
        // Predicated region
        $region125: #{deberta_forward.1} parent=111 // pred_check
          %p3354 = pneg %p636
        $region126: #{deberta_forward.1} parent=111 // pred_check_branch
          %3356 = sbr.rel (%p3354) target = $region128
        $region127: #{deberta_forward.1} parent=111 // pred_region
          %s3358 = ssub.s32 32, 32
          %3359 = vsyncadd [#allocation6], %s3358
          %s3361 = sshll.u32 [#allocation5], 4
          %s3362 = int_to_ptr.vmem [resolvable:$true] %s3361
          %3364 = dma.vmem_to_hbm [thread:$0]  %s3362, 32, %s24, [#allocation6]
        $region128: #{deberta_forward.1} parent=111 // pred_fallthru
          _
        // Predicated region
        $region129: #{deberta_forward.1} parent=111 // pred_check
          %p3365 = pneg %p657
        $region130: #{deberta_forward.1} parent=111 // pred_check_branch
          %3367 = sbr.rel (%p3365) target = $region132
        $region131: #{deberta_forward.1} parent=111 // pred_region
          %s3369 = ssub.s32 16, 16
          %3370 = vsyncadd [#allocation6], %s3369
          %s3372 = sshll.u32 [#allocation7], 4
          %s3373 = int_to_ptr.vmem [resolvable:$true] %s3372
          %3375 = dma.vmem_to_hbm [thread:$0]  %s3373, 16, %s25, [#allocation6]
        $region132: #{deberta_forward.1} parent=111 // pred_fallthru
          _
        // Predicated region
        $region133: #{deberta_forward.1} parent=111 // pred_check
          %p3376 = pneg %p615
        $region134: #{deberta_forward.1} parent=111 // pred_check_branch
          %3378 = sbr.rel (%p3376) target = $region136
        $region135: #{deberta_forward.1} parent=111 // pred_region
          %3379 = dma.done [#allocation4], 256
        $region136: #{deberta_forward.1} parent=111 // pred_fallthru
          _
        // Predicated region
        $region137: #{deberta_forward.1} parent=111 // pred_check
          %p3380 = pneg %p636
        $region138: #{deberta_forward.1} parent=111 // pred_check_branch
          %3382 = sbr.rel (%p3380) target = $region140
        $region139: #{deberta_forward.1} parent=111 // pred_region
          %3383 = dma.done [#allocation6], 32
        $region140: #{deberta_forward.1} parent=111 // pred_fallthru
          _
        // Predicated region
        $region141: #{deberta_forward.1} parent=111 // pred_check
          %p3384 = pneg %p657
        $region142: #{deberta_forward.1} parent=111 // pred_check_branch
          %3386 = sbr.rel (%p3384) target = $region144
        $region143: #{deberta_forward.1} parent=111 // pred_region
          %3387 = dma.done [#allocation6], 16
        $region144: #{deberta_forward.1} parent=111 // pred_fallthru
          _
      $region112: #{deberta_forward.1} parent=5 // pred_fallthru
        _
      %p3388 = scmp.le.s32.totalorder 2, %s34
      // Predicated region
      $region145: #{deberta_forward.1} parent=5 // pred_check
        %p3389 = pneg %p3388
      $region146: #{deberta_forward.1} parent=5 // pred_check_branch
        %3391 = sbr.rel (%p3389) target = $region148
      $region147: #{deberta_forward.1} parent=5 // pred_region
        %s3392 = ssub.s32 %s34, 2
      $region148: #{deberta_forward.1} parent=5 // pred_fallthru
        _
    $region6: #{deberta_forward.1} parent=1 // loop_footer
      %s38 = sadd.s32 1, %s34
    $region7: #{deberta_forward.1} parent=1 // loop_footer_branch
      %33 = sbr.rel target = $region3
    $region8: #{deberta_forward.1} parent=1 // loop_exit
      _
    %3393 = vsyncpa [#allocation4], 1
    %s3394 = scalar_lea.sflag [#allocation4], 1
    %3395 = vsyncpa %s3394, 1
    %3396 = vsyncpa [#allocation6], 1

</llo_original>
